<compile_context>
chip_gen: v6e
topology: v6e:2x2x1
jax: 0.10.0
libtpu: 0.0.40
codegen_flags: <defaults>
</compile_context>

<pallas_src>
import functools

import jax
import jax.numpy as jnp
from jax.experimental import pallas as pl
from jax.experimental.pallas import tpu as pltpu

_HIGHEST = jax.lax.Precision.HIGHEST   # true-f32 MXU passes (tight tolerance vs reference)


# ------------------------------ in-kernel helpers ------------------------------
def _build_col(pad_ref, col_ref, src_parts, N, C, H, W):
    """Build the transposed im2col matrix, lane-dense.

    col[(kh*3+kw)*C + ci, n*H*W + y*W + x] = x[n, ci, y+kh-1, x+kw-1]  (SAME, 3x3)

    Layout: each image is flat (C, H*W) with one zero pad-row above and below
    (no W padding).  Every tap is a contiguous (C, H*W) lane-dense slice of the
    padded flat buffer; the kw=0 / kw=2 taps mask the out-of-row lanes with an
    iota mask.  No strided indexing, no lane-sparse strip stores."""
    HW = H * W
    blk = HW + 2 * W                    # per-image block: top pad row + image + bottom pad row
    G = W                               # front/back guard (slack for the kw-1 slice starts)
    zeros2w = jnp.zeros((C, 2 * W), pad_ref.dtype)
    # Halo-only zeroing; the interior is fully overwritten right below.
    pad_ref[:, 0:2 * W] = zeros2w       # front guard + image-0 top pad row
    for n in range(N):
        base = G + n * blk
        pad_ref[:, base + W:base + W + HW] = src_parts[n]
        e = base + W + HW               # bottom pad row of n (+ top pad row of n+1 / back guard)
        pad_ref[:, e:e + 2 * W] = zeros2w
    # Within-row x coordinate for masking the horizontal halo taps (W is a power of two).
    j = jax.lax.broadcasted_iota(jnp.int32, (1, HW), 1)
    xx = j & (W - 1)
    not_left = xx > 0
    not_right = xx < (W - 1)
    for kh in range(3):                 # static 3x3 unroll
        for kw in range(3):
            t = kh * 3 + kw
            for n in range(N):
                s = G + n * blk + kh * W + (kw - 1)
                tap = pad_ref[:, s:s + HW]          # contiguous lane-dense slice
                if kw == 0:
                    tap = jnp.where(not_left, tap, 0.0)
                elif kw == 2:
                    tap = jnp.where(not_right, tap, 0.0)
                col_ref[t * C:(t + 1) * C, n * HW:(n + 1) * HW] = tap


def _pool_max(r_ref, relu_vals, W, L):
    """2x2 window max anchored at every flat position via 4 shifted slices of a
    VMEM scratch (no strided indexing / rolls).  Only the even-(y,x) anchors are
    meaningful; the one-hot selection matmul afterwards compacts them."""
    C = relu_vals.shape[0]
    r_ref[:, 0:L] = relu_vals
    r_ref[:, L:] = jnp.zeros((C, r_ref.shape[1] - L), r_ref.dtype)  # zero the shift tail
    return jnp.maximum(
        jnp.maximum(r_ref[:, 0:L], r_ref[:, 1:1 + L]),
        jnp.maximum(r_ref[:, W:W + L], r_ref[:, W + 1:W + 1 + L]))


# ------------------ fused conv1->relu1->pool1->conv2->relu2->pool2 -------------
def _fused_backbone_kernel(x_ref, w1_ref, b1_ref, w2_ref, b2_ref, s1_ref, s2_ref,
                           conv1_ref, pool1_ref, conv2_ref, pool2_ref,
                           pad1_ref, col1_ref, r1_ref, pad2_ref, col2_ref, r2_ref,
                           *, N, Cin, C1, H1, W1, H2, W2):
    HW1, HW2 = H1 * W1, H2 * W2

    # ---------------- stage 1: conv1 -> relu1 -> pool1 ----------------
    x_parts = [x_ref[:, n * HW1:(n + 1) * HW1] for n in range(N)]
    _build_col(pad1_ref, col1_ref, x_parts, N, Cin, H1, W1)
    conv1 = jnp.dot(w1_ref[...], col1_ref[...],
                    preferred_element_type=jnp.float32, precision=_HIGHEST) + b1_ref[...]
    conv1_ref[...] = conv1                           # pre-ReLU conv1 (extracted feature)
    m1 = _pool_max(r1_ref, jnp.maximum(conv1, 0.0), W1, N * HW1)
    pool1 = jnp.dot(m1, s1_ref[...],                 # exact one-hot compaction on the MXU
                    preferred_element_type=jnp.float32, precision=_HIGHEST)
    pool1_ref[...] = pool1

    # ---------------- stage 2: conv2 -> relu2 -> pool2 ----------------
    p_parts = [pool1[:, n * HW2:(n + 1) * HW2] for n in range(N)]
    _build_col(pad2_ref, col2_ref, p_parts, N, C1, H2, W2)
    conv2 = jnp.dot(w2_ref[...], col2_ref[...],
                    preferred_element_type=jnp.float32, precision=_HIGHEST) + b2_ref[...]
    conv2_ref[...] = conv2                           # pre-ReLU conv2
    m2 = _pool_max(r2_ref, jnp.maximum(conv2, 0.0), W2, N * HW2)
    pool2_ref[...] = jnp.dot(m2, s2_ref[...],
                             preferred_element_type=jnp.float32, precision=_HIGHEST)


# ----------------------------------- wrapper -----------------------------------
def _pool_select_onehot(N, H, W):
    """(N*H*W, N*(H//2)*(W//2)) one-hot matrix selecting the even-(y,x) pool anchors."""
    Ho, Wo, HW = H // 2, W // 2, H * W
    HWo = Ho * Wo
    q = jnp.arange(N * HWo)
    n, r = q // HWo, q % HWo
    yo, xo = r // Wo, r % Wo
    p = n * HW + (2 * yo) * W + 2 * xo
    return (jnp.arange(N * HW)[:, None] == p[None, :]).astype(jnp.float32)


def _full_spec(shape):
    nd = len(shape)
    return pl.BlockSpec(shape, lambda i: (0,) * nd)


def fused_backbone(x_nchw, w1_oihw, b1, w2_oihw, b2):
    """Runs conv1->relu1->pool1->conv2->relu2->pool2 as ONE pallas_call.
    Returns pre-ReLU conv outputs and pooled outputs, all NCHW."""
    N, Cin, H1, W1 = x_nchw.shape
    C1, C2 = w1_oihw.shape[0], w2_oihw.shape[0]
    assert w1_oihw.shape == (C1, Cin, 3, 3) and w2_oihw.shape == (C2, C1, 3, 3)
    assert H1 % 4 == 0 and W1 % 4 == 0
    assert (W1 & (W1 - 1)) == 0                      # power-of-two row width (mask trick)
    H2, W2 = H1 // 2, W1 // 2
    H3, W3 = H2 // 2, W2 // 2
    HW1, HW2, HW3 = H1 * W1, H2 * W2, H3 * W3
    f32 = jnp.float32

    # Kernel layout: channels on sublanes, flat (n, y, x) on lanes (lane-dense).
    x_flat = jnp.transpose(x_nchw, (1, 0, 2, 3)).reshape(Cin, N * HW1).astype(f32)
    w1m = jnp.transpose(w1_oihw, (0, 2, 3, 1)).reshape(C1, 9 * Cin).astype(f32)  # (Cout, K)
    w2m = jnp.transpose(w2_oihw, (0, 2, 3, 1)).reshape(C2, 9 * C1).astype(f32)
    b1m = b1.reshape(C1, 1).astype(f32)
    b2m = b2.reshape(C2, 1).astype(f32)
    s1 = _pool_select_onehot(N, H1, W1)
    s2 = _pool_select_onehot(N, H2, W2)

    out_shape = (
        jax.ShapeDtypeStruct((C1, N * HW1), f32),    # conv1 (pre-ReLU), lane-dense
        jax.ShapeDtypeStruct((C1, N * HW2), f32),    # pool1
        jax.ShapeDtypeStruct((C2, N * HW2), f32),    # conv2 (pre-ReLU)
        jax.ShapeDtypeStruct((C2, N * HW3), f32),    # pool2
    )
    inputs = (x_flat, w1m, b1m, w2m, b2m, s1, s2)
    kernel = functools.partial(_fused_backbone_kernel, N=N, Cin=Cin, C1=C1,
                               H1=H1, W1=W1, H2=H2, W2=W2)
    conv1f, pool1f, conv2f, pool2f = pl.pallas_call(
        kernel,
        out_shape=out_shape,
        grid=(1,),   # whole batch in one step; TODO(synk): CORE_PARALLEL over N on v7x for large N
        in_specs=[_full_spec(a.shape) for a in inputs],
        out_specs=tuple(_full_spec(s.shape) for s in out_shape),
        scratch_shapes=[
            pltpu.VMEM((Cin, 2 * W1 + N * (HW1 + 2 * W1)), f32),  # H-padded flat images  (stage 1)
            pltpu.VMEM((9 * Cin, N * HW1), f32),                  # transposed im2col     (stage 1)
            pltpu.VMEM((C1, N * HW1 + 2 * W1), f32),              # pool-1 shift buffer
            pltpu.VMEM((C1, 2 * W2 + N * (HW2 + 2 * W2)), f32),   # H-padded pooled maps  (stage 2)
            pltpu.VMEM((9 * C1, N * HW2), f32),                   # transposed im2col     (stage 2)
            pltpu.VMEM((C2, N * HW2 + 2 * W2), f32),              # pool-2 shift buffer
        ],
        compiler_params=pltpu.CompilerParams(dimension_semantics=("arbitrary",)),
    )(*inputs)

    def to_nchw(a, C, H, W):
        return jnp.transpose(a.reshape(C, N, H, W), (1, 0, 2, 3))

    return {
        "conv1": to_nchw(conv1f, C1, H1, W1),
        "pool1": to_nchw(pool1f, C1, H2, W2),
        "conv2": to_nchw(conv2f, C2, H2, W2),
        "pool2": to_nchw(pool2f, C2, H3, W3),
    }


# --------------------------- FeatureExtractor forward ---------------------------
def feature_extractor_forward(x_nchw, layers, extracted_layers):
    """Mirrors FeatureExtractor.forward: iterate named children in order, skip
    'fc'/'classifier', collect outputs of extracted layers (in iteration order).
    The whole conv/relu/pool backbone runs as ONE fused Pallas call; relu
    features are recovered from the raw conv outputs outside the kernel."""
    active = [(n, s) for n, s in layers if n not in ("fc", "classifier")]
    kinds = [s[0] for _, s in active]
    if kinds != ["conv", "relu", "pool", "conv", "relu", "pool"]:
        # TODO(synk): generic submodule children beyond conv3x3/ReLU/maxpool2/fc.
        raise NotImplementedError(f"unsupported backbone structure: {kinds}")
    c1_spec, c2_spec = active[0][1], active[3][1]
    feats = fused_backbone(x_nchw, c1_spec[1], c1_spec[2], c2_spec[1], c2_spec[2])
    by_name = {
        active[0][0]: feats["conv1"],
        active[1][0]: jnp.maximum(feats["conv1"], 0.0),
        active[2][0]: feats["pool1"],
        active[3][0]: feats["conv2"],
        active[4][0]: jnp.maximum(feats["conv2"], 0.0),
        active[5][0]: feats["pool2"],
    }
    return [by_name[name] for name, _ in active if name in extracted_layers]


# ----------------------------------- reference ----------------------------------
def _ref_forward(x, layers, extracted_layers):
    outs = []
    for name, spec in layers:
        if name in ("fc", "classifier"):
            continue
        kind = spec[0]
        if kind == "conv":
            w, b = spec[1], spec[2]
            x = jax.lax.conv_general_dilated(
                x, w, window_strides=(1, 1), padding="SAME",
                dimension_numbers=("NCHW", "OIHW", "NCHW"),
                precision=_HIGHEST) + b.reshape(1, -1, 1, 1)
        elif kind == "relu":
            x = jnp.maximum(x, 0.0)
        elif kind == "pool":
            n_, c_, h_, w_ = x.shape
            x = x.reshape(n_, c_, h_ // 2, 2, w_ // 2, 2).max(axis=(3, 5))
        if name in extracted_layers:
            outs.append(x)
    return outs


if __name__ == "__main__":
    key = jax.random.PRNGKey(0)
    k_x, k_w1, k_b1, k_w2, k_b2 = jax.random.split(key, 5)

    N, Cin, H, W = 2, 4, 16, 16
    C1, C2 = 8, 16

    # PyTorch conventions: input NCHW, conv weights OIHW.
    x = jax.random.normal(k_x, (N, Cin, H, W), jnp.float32)
    w1 = jax.random.normal(k_w1, (C1, Cin, 3, 3), jnp.float32) * 0.1
    b1 = jax.random.normal(k_b1, (C1,), jnp.float32) * 0.1
    w2 = jax.random.normal(k_w2, (C2, C1, 3, 3), jnp.float32) * 0.1
    b2 = jax.random.normal(k_b2, (C2,), jnp.float32) * 0.1

    # Synthetic submodule (ordered named children); 'fc' is present but skipped,
    # exactly like the PyTorch FeatureExtractor.
    layers = [
        ("conv1", ("conv", w1, b1)),
        ("relu1", ("relu",)),
        ("pool1", ("pool",)),
        ("conv2", ("conv", w2, b2)),
        ("relu2", ("relu",)),
        ("pool2", ("pool",)),
        ("fc", ("linear",)),          # skipped (name in ['fc', 'classifier'])
    ]
    extracted_layers = ["conv1", "pool2"]

    run = jax.jit(lambda xx: feature_extractor_forward(xx, layers, extracted_layers))
    outs = run(x)
    outs = [jax.block_until_ready(o) for o in outs]

    refs = _ref_forward(x, layers, extracted_layers)
    assert len(outs) == len(refs) == 2
    for got, ref in zip(outs, refs):
        assert got.shape == ref.shape, (got.shape, ref.shape)
        err = float(jnp.max(jnp.abs(got - ref)))
        assert jnp.allclose(got, ref, atol=1e-4, rtol=1e-4), ("mismatch vs reference", err)

    print("KERNEL_OK")
</pallas_src>

<mosaic_0001>
module attributes {stable_mosaic.version = 11 : i64} {
  func.func @_fused_backbone_kernel(%arg0: i32, %arg1: memref<4x512xf32, #tpu.memory_space<vmem>>, %arg2: memref<8x36xf32, #tpu.memory_space<vmem>>, %arg3: memref<8x1xf32, #tpu.memory_space<vmem>>, %arg4: memref<16x72xf32, #tpu.memory_space<vmem>>, %arg5: memref<16x1xf32, #tpu.memory_space<vmem>>, %arg6: memref<512x128xf32, #tpu.memory_space<vmem>>, %arg7: memref<128x32xf32, #tpu.memory_space<vmem>>, %arg8: memref<8x512xf32, #tpu.memory_space<vmem>>, %arg9: memref<8x128xf32, #tpu.memory_space<vmem>>, %arg10: memref<16x128xf32, #tpu.memory_space<vmem>>, %arg11: memref<16x32xf32, #tpu.memory_space<vmem>>, %arg12: memref<4x608xf32, #tpu.memory_space<vmem>>, %arg13: memref<36x512xf32, #tpu.memory_space<vmem>>, %arg14: memref<8x544xf32, #tpu.memory_space<vmem>>, %arg15: memref<8x176xf32, #tpu.memory_space<vmem>>, %arg16: memref<72x128xf32, #tpu.memory_space<vmem>>, %arg17: memref<16x144xf32, #tpu.memory_space<vmem>>) attributes {dimension_semantics = [#tpu.dimension_semantics<arbitrary>], iteration_bounds = array<i64: 1>, scalar_prefetch = 0 : i64, scratch_operands = 6 : i64, tpu.core_type = #tpu.core_type<tc>, window_params = [{pipeline_mode = #tpu.pipeline_mode<synchronous>, transform_indices = @transform_0, window_bounds = array<i64: 4, 512>}, {pipeline_mode = #tpu.pipeline_mode<synchronous>, transform_indices = @transform_1, window_bounds = array<i64: 8, 36>}, {pipeline_mode = #tpu.pipeline_mode<synchronous>, transform_indices = @transform_2, window_bounds = array<i64: 8, 1>}, {pipeline_mode = #tpu.pipeline_mode<synchronous>, transform_indices = @transform_3, window_bounds = array<i64: 16, 72>}, {pipeline_mode = #tpu.pipeline_mode<synchronous>, transform_indices = @transform_4, window_bounds = array<i64: 16, 1>}, {pipeline_mode = #tpu.pipeline_mode<synchronous>, transform_indices = @transform_5, window_bounds = array<i64: 512, 128>}, {pipeline_mode = #tpu.pipeline_mode<synchronous>, transform_indices = @transform_6, window_bounds = array<i64: 128, 32>}, {pipeline_mode = #tpu.pipeline_mode<synchronous>, transform_indices = @transform_7, window_bounds = array<i64: 8, 512>}, {pipeline_mode = #tpu.pipeline_mode<synchronous>, transform_indices = @transform_8, window_bounds = array<i64: 8, 128>}, {pipeline_mode = #tpu.pipeline_mode<synchronous>, transform_indices = @transform_9, window_bounds = array<i64: 16, 128>}, {pipeline_mode = #tpu.pipeline_mode<synchronous>, transform_indices = @transform_10, window_bounds = array<i64: 16, 32>}]} {
    %c0 = arith.constant 0 : index
    %c0_0 = arith.constant 0 : index
    %0 = vector.load %arg1[%c0, %c0_0] : memref<4x512xf32, #tpu.memory_space<vmem>>, vector<4x256xf32>
    %c0_1 = arith.constant 0 : index
    %c256 = arith.constant 256 : index
    %1 = vector.load %arg1[%c0_1, %c256] : memref<4x512xf32, #tpu.memory_space<vmem>>, vector<4x256xf32>
    %cst = arith.constant 0.000000e+00 : f32
    %2 = vector.broadcast %cst : f32 to vector<4x32xf32>
    %c0_2 = arith.constant 0 : index
    %c0_3 = arith.constant 0 : index
    %3 = vector.load %arg12[%c0_2, %c0_3] : memref<4x608xf32, #tpu.memory_space<vmem>>, vector<4x32xf32>
    tpu.vector_store %arg12[%c0_2, %c0_3], %2 {strides = array<i32>} : memref<4x608xf32, #tpu.memory_space<vmem>>, vector<4x32xf32>,
    %c0_4 = arith.constant 0 : index
    %c32 = arith.constant 32 : index
    %4 = vector.load %arg12[%c0_4, %c32] : memref<4x608xf32, #tpu.memory_space<vmem>>, vector<4x256xf32>
    tpu.vector_store %arg12[%c0_4, %c32], %0 {strides = array<i32>} : memref<4x608xf32, #tpu.memory_space<vmem>>, vector<4x256xf32>,
    %c0_5 = arith.constant 0 : index
    %c288 = arith.constant 288 : index
    %5 = vector.load %arg12[%c0_5, %c288] : memref<4x608xf32, #tpu.memory_space<vmem>>, vector<4x32xf32>
    tpu.vector_store %arg12[%c0_5, %c288], %2 {strides = array<i32>} : memref<4x608xf32, #tpu.memory_space<vmem>>, vector<4x32xf32>,
    %c0_6 = arith.constant 0 : index
    %c320 = arith.constant 320 : index
    %6 = vector.load %arg12[%c0_6, %c320] : memref<4x608xf32, #tpu.memory_space<vmem>>, vector<4x256xf32>
    tpu.vector_store %arg12[%c0_6, %c320], %1 {strides = array<i32>} : memref<4x608xf32, #tpu.memory_space<vmem>>, vector<4x256xf32>,
    %c0_7 = arith.constant 0 : index
    %c576 = arith.constant 576 : index
    %7 = vector.load %arg12[%c0_7, %c576] : memref<4x608xf32, #tpu.memory_space<vmem>>, vector<4x32xf32>
    tpu.vector_store %arg12[%c0_7, %c576], %2 {strides = array<i32>} : memref<4x608xf32, #tpu.memory_space<vmem>>, vector<4x32xf32>,
    %8 = tpu.iota {dimensions = array<i32: 1>} : vector<1x256xi32>
    %c15_i32 = arith.constant 15 : i32
    %9 = vector.broadcast %c15_i32 : i32 to vector<1x256xi32>
    %10 = arith.andi %8, %9 : vector<1x256xi32>
    %c0_i32 = arith.constant 0 : i32
    %11 = vector.broadcast %c0_i32 : i32 to vector<1x256xi32>
    %12 = arith.cmpi sgt, %10, %11 : vector<1x256xi32>
    %c15_i32_8 = arith.constant 15 : i32
    %13 = vector.broadcast %c15_i32_8 : i32 to vector<1x256xi32>
    %14 = arith.cmpi slt, %10, %13 : vector<1x256xi32>
    %c0_9 = arith.constant 0 : index
    %c15 = arith.constant 15 : index
    %15 = vector.load %arg12[%c0_9, %c15] : memref<4x608xf32, #tpu.memory_space<vmem>>, vector<4x256xf32>
    %cst_10 = arith.constant 0.000000e+00 : f32
    %16 = vector.shape_cast %12 : vector<1x256xi1> to vector<1x256xi1>
    %17 = vector.broadcast %16 : vector<1x256xi1> to vector<4x256xi1>
    %18 = vector.broadcast %cst_10 : f32 to vector<4x256xf32>
    %19 = arith.select %17, %15, %18 : vector<4x256xi1>, vector<4x256xf32>
    %c0_11 = arith.constant 0 : index
    %c0_12 = arith.constant 0 : index
    %20 = vector.load %arg13[%c0_11, %c0_12] : memref<36x512xf32, #tpu.memory_space<vmem>>, vector<4x256xf32>
    tpu.vector_store %arg13[%c0_11, %c0_12], %19 {strides = array<i32>} : memref<36x512xf32, #tpu.memory_space<vmem>>, vector<4x256xf32>,
    %c0_13 = arith.constant 0 : index
    %c303 = arith.constant 303 : index
    %21 = vector.load %arg12[%c0_13, %c303] : memref<4x608xf32, #tpu.memory_space<vmem>>, vector<4x256xf32>
    %cst_14 = arith.constant 0.000000e+00 : f32
    %22 = vector.shape_cast %12 : vector<1x256xi1> to vector<1x256xi1>
    %23 = vector.broadcast %22 : vector<1x256xi1> to vector<4x256xi1>
    %24 = vector.broadcast %cst_14 : f32 to vector<4x256xf32>
    %25 = arith.select %23, %21, %24 : vector<4x256xi1>, vector<4x256xf32>
    %c0_15 = arith.constant 0 : index
    %c256_16 = arith.constant 256 : index
    %26 = vector.load %arg13[%c0_15, %c256_16] : memref<36x512xf32, #tpu.memory_space<vmem>>, vector<4x256xf32>
    tpu.vector_store %arg13[%c0_15, %c256_16], %25 {strides = array<i32>} : memref<36x512xf32, #tpu.memory_space<vmem>>, vector<4x256xf32>,
    %c0_17 = arith.constant 0 : index
    %c16 = arith.constant 16 : index
    %27 = vector.load %arg12[%c0_17, %c16] : memref<4x608xf32, #tpu.memory_space<vmem>>, vector<4x256xf32>
    %c4 = arith.constant 4 : index
    %c0_18 = arith.constant 0 : index
    %28 = vector.load %arg13[%c4, %c0_18] : memref<36x512xf32, #tpu.memory_space<vmem>>, vector<4x256xf32>
    tpu.vector_store %arg13[%c4, %c0_18], %27 {strides = array<i32>} : memref<36x512xf32, #tpu.memory_space<vmem>>, vector<4x256xf32>,
    %c0_19 = arith.constant 0 : index
    %c304 = arith.constant 304 : index
    %29 = vector.load %arg12[%c0_19, %c304] : memref<4x608xf32, #tpu.memory_space<vmem>>, vector<4x256xf32>
    %c4_20 = arith.constant 4 : index
    %c256_21 = arith.constant 256 : index
    %30 = vector.load %arg13[%c4_20, %c256_21] : memref<36x512xf32, #tpu.memory_space<vmem>>, vector<4x256xf32>
    tpu.vector_store %arg13[%c4_20, %c256_21], %29 {strides = array<i32>} : memref<36x512xf32, #tpu.memory_space<vmem>>, vector<4x256xf32>,
    %c0_22 = arith.constant 0 : index
    %c17 = arith.constant 17 : index
    %31 = vector.load %arg12[%c0_22, %c17] : memref<4x608xf32, #tpu.memory_space<vmem>>, vector<4x256xf32>
    %cst_23 = arith.constant 0.000000e+00 : f32
    %32 = vector.shape_cast %14 : vector<1x256xi1> to vector<1x256xi1>
    %33 = vector.broadcast %32 : vector<1x256xi1> to vector<4x256xi1>
    %34 = vector.broadcast %cst_23 : f32 to vector<4x256xf32>
    %35 = arith.select %33, %31, %34 : vector<4x256xi1>, vector<4x256xf32>
    %c8 = arith.constant 8 : index
    %c0_24 = arith.constant 0 : index
    %36 = vector.load %arg13[%c8, %c0_24] : memref<36x512xf32, #tpu.memory_space<vmem>>, vector<4x256xf32>
    tpu.vector_store %arg13[%c8, %c0_24], %35 {strides = array<i32>} : memref<36x512xf32, #tpu.memory_space<vmem>>, vector<4x256xf32>,
    %c0_25 = arith.constant 0 : index
    %c305 = arith.constant 305 : index
    %37 = vector.load %arg12[%c0_25, %c305] : memref<4x608xf32, #tpu.memory_space<vmem>>, vector<4x256xf32>
    %cst_26 = arith.constant 0.000000e+00 : f32
    %38 = vector.shape_cast %14 : vector<1x256xi1> to vector<1x256xi1>
    %39 = vector.broadcast %38 : vector<1x256xi1> to vector<4x256xi1>
    %40 = vector.broadcast %cst_26 : f32 to vector<4x256xf32>
    %41 = arith.select %39, %37, %40 : vector<4x256xi1>, vector<4x256xf32>
    %c8_27 = arith.constant 8 : index
    %c256_28 = arith.constant 256 : index
    %42 = vector.load %arg13[%c8_27, %c256_28] : memref<36x512xf32, #tpu.memory_space<vmem>>, vector<4x256xf32>
    tpu.vector_store %arg13[%c8_27, %c256_28], %41 {strides = array<i32>} : memref<36x512xf32, #tpu.memory_space<vmem>>, vector<4x256xf32>,
    %c0_29 = arith.constant 0 : index
    %c31 = arith.constant 31 : index
    %43 = vector.load %arg12[%c0_29, %c31] : memref<4x608xf32, #tpu.memory_space<vmem>>, vector<4x256xf32>
    %cst_30 = arith.constant 0.000000e+00 : f32
    %44 = vector.shape_cast %12 : vector<1x256xi1> to vector<1x256xi1>
    %45 = vector.broadcast %44 : vector<1x256xi1> to vector<4x256xi1>
    %46 = vector.broadcast %cst_30 : f32 to vector<4x256xf32>
    %47 = arith.select %45, %43, %46 : vector<4x256xi1>, vector<4x256xf32>
    %c12 = arith.constant 12 : index
    %c0_31 = arith.constant 0 : index
    %48 = vector.load %arg13[%c12, %c0_31] : memref<36x512xf32, #tpu.memory_space<vmem>>, vector<4x256xf32>
    tpu.vector_store %arg13[%c12, %c0_31], %47 {strides = array<i32>} : memref<36x512xf32, #tpu.memory_space<vmem>>, vector<4x256xf32>,
    %c0_32 = arith.constant 0 : index
    %c319 = arith.constant 319 : index
    %49 = vector.load %arg12[%c0_32, %c319] : memref<4x608xf32, #tpu.memory_space<vmem>>, vector<4x256xf32>
    %cst_33 = arith.constant 0.000000e+00 : f32
    %50 = vector.shape_cast %12 : vector<1x256xi1> to vector<1x256xi1>
    %51 = vector.broadcast %50 : vector<1x256xi1> to vector<4x256xi1>
    %52 = vector.broadcast %cst_33 : f32 to vector<4x256xf32>
    %53 = arith.select %51, %49, %52 : vector<4x256xi1>, vector<4x256xf32>
    %c12_34 = arith.constant 12 : index
    %c256_35 = arith.constant 256 : index
    %54 = vector.load %arg13[%c12_34, %c256_35] : memref<36x512xf32, #tpu.memory_space<vmem>>, vector<4x256xf32>
    tpu.vector_store %arg13[%c12_34, %c256_35], %53 {strides = array<i32>} : memref<36x512xf32, #tpu.memory_space<vmem>>, vector<4x256xf32>,
    %c0_36 = arith.constant 0 : index
    %c32_37 = arith.constant 32 : index
    %55 = vector.load %arg12[%c0_36, %c32_37] : memref<4x608xf32, #tpu.memory_space<vmem>>, vector<4x256xf32>
    %c16_38 = arith.constant 16 : index
    %c0_39 = arith.constant 0 : index
    %56 = vector.load %arg13[%c16_38, %c0_39] : memref<36x512xf32, #tpu.memory_space<vmem>>, vector<4x256xf32>
    tpu.vector_store %arg13[%c16_38, %c0_39], %55 {strides = array<i32>} : memref<36x512xf32, #tpu.memory_space<vmem>>, vector<4x256xf32>,
    %c0_40 = arith.constant 0 : index
    %c320_41 = arith.constant 320 : index
    %57 = vector.load %arg12[%c0_40, %c320_41] : memref<4x608xf32, #tpu.memory_space<vmem>>, vector<4x256xf32>
    %c16_42 = arith.constant 16 : index
    %c256_43 = arith.constant 256 : index
    %58 = vector.load %arg13[%c16_42, %c256_43] : memref<36x512xf32, #tpu.memory_space<vmem>>, vector<4x256xf32>
    tpu.vector_store %arg13[%c16_42, %c256_43], %57 {strides = array<i32>} : memref<36x512xf32, #tpu.memory_space<vmem>>, vector<4x256xf32>,
    %c0_44 = arith.constant 0 : index
    %c33 = arith.constant 33 : index
    %59 = vector.load %arg12[%c0_44, %c33] : memref<4x608xf32, #tpu.memory_space<vmem>>, vector<4x256xf32>
    %cst_45 = arith.constant 0.000000e+00 : f32
    %60 = vector.shape_cast %14 : vector<1x256xi1> to vector<1x256xi1>
    %61 = vector.broadcast %60 : vector<1x256xi1> to vector<4x256xi1>
    %62 = vector.broadcast %cst_45 : f32 to vector<4x256xf32>
    %63 = arith.select %61, %59, %62 : vector<4x256xi1>, vector<4x256xf32>
    %c20 = arith.constant 20 : index
    %c0_46 = arith.constant 0 : index
    %64 = vector.load %arg13[%c20, %c0_46] : memref<36x512xf32, #tpu.memory_space<vmem>>, vector<4x256xf32>
    tpu.vector_store %arg13[%c20, %c0_46], %63 {strides = array<i32>} : memref<36x512xf32, #tpu.memory_space<vmem>>, vector<4x256xf32>,
    %c0_47 = arith.constant 0 : index
    %c321 = arith.constant 321 : index
    %65 = vector.load %arg12[%c0_47, %c321] : memref<4x608xf32, #tpu.memory_space<vmem>>, vector<4x256xf32>
    %cst_48 = arith.constant 0.000000e+00 : f32
    %66 = vector.shape_cast %14 : vector<1x256xi1> to vector<1x256xi1>
    %67 = vector.broadcast %66 : vector<1x256xi1> to vector<4x256xi1>
    %68 = vector.broadcast %cst_48 : f32 to vector<4x256xf32>
    %69 = arith.select %67, %65, %68 : vector<4x256xi1>, vector<4x256xf32>
    %c20_49 = arith.constant 20 : index
    %c256_50 = arith.constant 256 : index
    %70 = vector.load %arg13[%c20_49, %c256_50] : memref<36x512xf32, #tpu.memory_space<vmem>>, vector<4x256xf32>
    tpu.vector_store %arg13[%c20_49, %c256_50], %69 {strides = array<i32>} : memref<36x512xf32, #tpu.memory_space<vmem>>, vector<4x256xf32>,
    %c0_51 = arith.constant 0 : index
    %c47 = arith.constant 47 : index
    %71 = vector.load %arg12[%c0_51, %c47] : memref<4x608xf32, #tpu.memory_space<vmem>>, vector<4x256xf32>
    %cst_52 = arith.constant 0.000000e+00 : f32
    %72 = vector.shape_cast %12 : vector<1x256xi1> to vector<1x256xi1>
    %73 = vector.broadcast %72 : vector<1x256xi1> to vector<4x256xi1>
    %74 = vector.broadcast %cst_52 : f32 to vector<4x256xf32>
    %75 = arith.select %73, %71, %74 : vector<4x256xi1>, vector<4x256xf32>
    %c24 = arith.constant 24 : index
    %c0_53 = arith.constant 0 : index
    %76 = vector.load %arg13[%c24, %c0_53] : memref<36x512xf32, #tpu.memory_space<vmem>>, vector<4x256xf32>
    tpu.vector_store %arg13[%c24, %c0_53], %75 {strides = array<i32>} : memref<36x512xf32, #tpu.memory_space<vmem>>, vector<4x256xf32>,
    %c0_54 = arith.constant 0 : index
    %c335 = arith.constant 335 : index
    %77 = vector.load %arg12[%c0_54, %c335] : memref<4x608xf32, #tpu.memory_space<vmem>>, vector<4x256xf32>
    %cst_55 = arith.constant 0.000000e+00 : f32
    %78 = vector.shape_cast %12 : vector<1x256xi1> to vector<1x256xi1>
    %79 = vector.broadcast %78 : vector<1x256xi1> to vector<4x256xi1>
    %80 = vector.broadcast %cst_55 : f32 to vector<4x256xf32>
    %81 = arith.select %79, %77, %80 : vector<4x256xi1>, vector<4x256xf32>
    %c24_56 = arith.constant 24 : index
    %c256_57 = arith.constant 256 : index
    %82 = vector.load %arg13[%c24_56, %c256_57] : memref<36x512xf32, #tpu.memory_space<vmem>>, vector<4x256xf32>
    tpu.vector_store %arg13[%c24_56, %c256_57], %81 {strides = array<i32>} : memref<36x512xf32, #tpu.memory_space<vmem>>, vector<4x256xf32>,
    %c0_58 = arith.constant 0 : index
    %c48 = arith.constant 48 : index
    %83 = vector.load %arg12[%c0_58, %c48] : memref<4x608xf32, #tpu.memory_space<vmem>>, vector<4x256xf32>
    %c28 = arith.constant 28 : index
    %c0_59 = arith.constant 0 : index
    %84 = vector.load %arg13[%c28, %c0_59] : memref<36x512xf32, #tpu.memory_space<vmem>>, vector<4x256xf32>
    tpu.vector_store %arg13[%c28, %c0_59], %83 {strides = array<i32>} : memref<36x512xf32, #tpu.memory_space<vmem>>, vector<4x256xf32>,
    %c0_60 = arith.constant 0 : index
    %c336 = arith.constant 336 : index
    %85 = vector.load %arg12[%c0_60, %c336] : memref<4x608xf32, #tpu.memory_space<vmem>>, vector<4x256xf32>
    %c28_61 = arith.constant 28 : index
    %c256_62 = arith.constant 256 : index
    %86 = vector.load %arg13[%c28_61, %c256_62] : memref<36x512xf32, #tpu.memory_space<vmem>>, vector<4x256xf32>
    tpu.vector_store %arg13[%c28_61, %c256_62], %85 {strides = array<i32>} : memref<36x512xf32, #tpu.memory_space<vmem>>, vector<4x256xf32>,
    %c0_63 = arith.constant 0 : index
    %c49 = arith.constant 49 : index
    %87 = vector.load %arg12[%c0_63, %c49] : memref<4x608xf32, #tpu.memory_space<vmem>>, vector<4x256xf32>
    %cst_64 = arith.constant 0.000000e+00 : f32
    %88 = vector.shape_cast %14 : vector<1x256xi1> to vector<1x256xi1>
    %89 = vector.broadcast %88 : vector<1x256xi1> to vector<4x256xi1>
    %90 = vector.broadcast %cst_64 : f32 to vector<4x256xf32>
    %91 = arith.select %89, %87, %90 : vector<4x256xi1>, vector<4x256xf32>
    %c32_65 = arith.constant 32 : index
    %c0_66 = arith.constant 0 : index
    %92 = vector.load %arg13[%c32_65, %c0_66] : memref<36x512xf32, #tpu.memory_space<vmem>>, vector<4x256xf32>
    tpu.vector_store %arg13[%c32_65, %c0_66], %91 {strides = array<i32>} : memref<36x512xf32, #tpu.memory_space<vmem>>, vector<4x256xf32>,
    %c0_67 = arith.constant 0 : index
    %c337 = arith.constant 337 : index
    %93 = vector.load %arg12[%c0_67, %c337] : memref<4x608xf32, #tpu.memory_space<vmem>>, vector<4x256xf32>
    %cst_68 = arith.constant 0.000000e+00 : f32
    %94 = vector.shape_cast %14 : vector<1x256xi1> to vector<1x256xi1>
    %95 = vector.broadcast %94 : vector<1x256xi1> to vector<4x256xi1>
    %96 = vector.broadcast %cst_68 : f32 to vector<4x256xf32>
    %97 = arith.select %95, %93, %96 : vector<4x256xi1>, vector<4x256xf32>
    %c32_69 = arith.constant 32 : index
    %c256_70 = arith.constant 256 : index
    %98 = vector.load %arg13[%c32_69, %c256_70] : memref<36x512xf32, #tpu.memory_space<vmem>>, vector<4x256xf32>
    tpu.vector_store %arg13[%c32_69, %c256_70], %97 {strides = array<i32>} : memref<36x512xf32, #tpu.memory_space<vmem>>, vector<4x256xf32>,
    %c0_71 = arith.constant 0 : index
    %c0_72 = arith.constant 0 : index
    %99 = vector.load %arg2[%c0_71, %c0_72] : memref<8x36xf32, #tpu.memory_space<vmem>>, vector<8x36xf32>
    %c0_73 = arith.constant 0 : index
    %c0_74 = arith.constant 0 : index
    %100 = vector.load %arg13[%c0_73, %c0_74] : memref<36x512xf32, #tpu.memory_space<vmem>>, vector<36x512xf32>
    %cst_75 = arith.constant dense<0.000000e+00> : vector<8x512xf32>
    %101 = tpu.matmul %99, %100, %cst_75 {dimension_numbers = #tpu.dot_dimension_numbers<[1], [0], [0], [1], [0, 0, 1, 1], [], []>, precision = #tpu.contract_precision<fp32>} : vector<8x36xf32>, vector<36x512xf32>, vector<8x512xf32> -> vector<8x512xf32>
    %c0_76 = arith.constant 0 : index
    %c0_77 = arith.constant 0 : index
    %102 = vector.load %arg3[%c0_76, %c0_77] : memref<8x1xf32, #tpu.memory_space<vmem>>, vector<8x1xf32>
    %103 = vector.broadcast %102 : vector<8x1xf32> to vector<8x512xf32>
    %104 = arith.addf %101, %103 : vector<8x512xf32>
    %c0_78 = arith.constant 0 : index
    %c0_79 = arith.constant 0 : index
    %105 = vector.load %arg8[%c0_78, %c0_79] : memref<8x512xf32, #tpu.memory_space<vmem>>, vector<8x512xf32>
    tpu.vector_store %arg8[%c0_78, %c0_79], %104 {strides = array<i32>} : memref<8x512xf32, #tpu.memory_space<vmem>>, vector<8x512xf32>,
    %cst_80 = arith.constant 0.000000e+00 : f32
    %106 = vector.broadcast %cst_80 : f32 to vector<8x512xf32>
    %107 = arith.maximumf %104, %106 : vector<8x512xf32>
    %c0_81 = arith.constant 0 : index
    %c0_82 = arith.constant 0 : index
    %108 = vector.load %arg14[%c0_81, %c0_82] : memref<8x544xf32, #tpu.memory_space<vmem>>, vector<8x512xf32>
    tpu.vector_store %arg14[%c0_81, %c0_82], %107 {strides = array<i32>} : memref<8x544xf32, #tpu.memory_space<vmem>>, vector<8x512xf32>,
    %cst_83 = arith.constant 0.000000e+00 : f32
    %109 = vector.broadcast %cst_83 : f32 to vector<8x32xf32>
    %c0_84 = arith.constant 0 : index
    %c512 = arith.constant 512 : index
    %110 = vector.load %arg14[%c0_84, %c512] : memref<8x544xf32, #tpu.memory_space<vmem>>, vector<8x32xf32>
    tpu.vector_store %arg14[%c0_84, %c512], %109 {strides = array<i32>} : memref<8x544xf32, #tpu.memory_space<vmem>>, vector<8x32xf32>,
    %c0_85 = arith.constant 0 : index
    %c0_86 = arith.constant 0 : index
    %111 = vector.load %arg14[%c0_85, %c0_86] : memref<8x544xf32, #tpu.memory_space<vmem>>, vector<8x512xf32>
    %c0_87 = arith.constant 0 : index
    %c1 = arith.constant 1 : index
    %112 = vector.load %arg14[%c0_87, %c1] : memref<8x544xf32, #tpu.memory_space<vmem>>, vector<8x512xf32>
    %113 = arith.maximumf %111, %112 : vector<8x512xf32>
    %c0_88 = arith.constant 0 : index
    %c16_89 = arith.constant 16 : index
    %114 = vector.load %arg14[%c0_88, %c16_89] : memref<8x544xf32, #tpu.memory_space<vmem>>, vector<8x512xf32>
    %c0_90 = arith.constant 0 : index
    %c17_91 = arith.constant 17 : index
    %115 = vector.load %arg14[%c0_90, %c17_91] : memref<8x544xf32, #tpu.memory_space<vmem>>, vector<8x512xf32>
    %116 = arith.maximumf %114, %115 : vector<8x512xf32>
    %117 = arith.maximumf %113, %116 : vector<8x512xf32>
    %c0_92 = arith.constant 0 : index
    %c0_93 = arith.constant 0 : index
    %118 = vector.load %arg6[%c0_92, %c0_93] : memref<512x128xf32, #tpu.memory_space<vmem>>, vector<512x128xf32>
    %cst_94 = arith.constant dense<0.000000e+00> : vector<8x128xf32>
    %119 = tpu.matmul %117, %118, %cst_94 {dimension_numbers = #tpu.dot_dimension_numbers<[1], [0], [0], [1], [0, 0, 1, 1], [], []>, precision = #tpu.contract_precision<fp32>} : vector<8x512xf32>, vector<512x128xf32>, vector<8x128xf32> -> vector<8x128xf32>
    %c0_95 = arith.constant 0 : index
    %c0_96 = arith.constant 0 : index
    %120 = vector.load %arg9[%c0_95, %c0_96] : memref<8x128xf32, #tpu.memory_space<vmem>>, vector<8x128xf32>
    tpu.vector_store %arg9[%c0_95, %c0_96], %119 {strides = array<i32>} : memref<8x128xf32, #tpu.memory_space<vmem>>, vector<8x128xf32>,
    %121 = vector.extract_strided_slice %119 {offsets = [0, 0], sizes = [8, 64], strides = [1, 1]} : vector<8x128xf32> to vector<8x64xf32>
    %122 = vector.extract_strided_slice %119 {offsets = [0, 64], sizes = [8, 64], strides = [1, 1]} : vector<8x128xf32> to vector<8x64xf32>
    %cst_97 = arith.constant 0.000000e+00 : f32
    %123 = vector.broadcast %cst_97 : f32 to vector<8x16xf32>
    %c0_98 = arith.constant 0 : index
    %c0_99 = arith.constant 0 : index
    %124 = vector.load %arg15[%c0_98, %c0_99] : memref<8x176xf32, #tpu.memory_space<vmem>>, vector<8x16xf32>
    tpu.vector_store %arg15[%c0_98, %c0_99], %123 {strides = array<i32>} : memref<8x176xf32, #tpu.memory_space<vmem>>, vector<8x16xf32>,
    %c0_100 = arith.constant 0 : index
    %c16_101 = arith.constant 16 : index
    %125 = vector.load %arg15[%c0_100, %c16_101] : memref<8x176xf32, #tpu.memory_space<vmem>>, vector<8x64xf32>
    tpu.vector_store %arg15[%c0_100, %c16_101], %121 {strides = array<i32>} : memref<8x176xf32, #tpu.memory_space<vmem>>, vector<8x64xf32>,
    %c0_102 = arith.constant 0 : index
    %c80 = arith.constant 80 : index
    %126 = vector.load %arg15[%c0_102, %c80] : memref<8x176xf32, #tpu.memory_space<vmem>>, vector<8x16xf32>
    tpu.vector_store %arg15[%c0_102, %c80], %123 {strides = array<i32>} : memref<8x176xf32, #tpu.memory_space<vmem>>, vector<8x16xf32>,
    %c0_103 = arith.constant 0 : index
    %c96 = arith.constant 96 : index
    %127 = vector.load %arg15[%c0_103, %c96] : memref<8x176xf32, #tpu.memory_space<vmem>>, vector<8x64xf32>
    tpu.vector_store %arg15[%c0_103, %c96], %122 {strides = array<i32>} : memref<8x176xf32, #tpu.memory_space<vmem>>, vector<8x64xf32>,
    %c0_104 = arith.constant 0 : index
    %c160 = arith.constant 160 : index
    %128 = vector.load %arg15[%c0_104, %c160] : memref<8x176xf32, #tpu.memory_space<vmem>>, vector<8x16xf32>
    tpu.vector_store %arg15[%c0_104, %c160], %123 {strides = array<i32>} : memref<8x176xf32, #tpu.memory_space<vmem>>, vector<8x16xf32>,
    %129 = tpu.iota {dimensions = array<i32: 1>} : vector<1x64xi32>
    %c7_i32 = arith.constant 7 : i32
    %130 = vector.broadcast %c7_i32 : i32 to vector<1x64xi32>
    %131 = arith.andi %129, %130 : vector<1x64xi32>
    %c0_i32_105 = arith.constant 0 : i32
    %132 = vector.broadcast %c0_i32_105 : i32 to vector<1x64xi32>
    %133 = arith.cmpi sgt, %131, %132 : vector<1x64xi32>
    %c7_i32_106 = arith.constant 7 : i32
    %134 = vector.broadcast %c7_i32_106 : i32 to vector<1x64xi32>
    %135 = arith.cmpi slt, %131, %134 : vector<1x64xi32>
    %c0_107 = arith.constant 0 : index
    %c7 = arith.constant 7 : index
    %136 = vector.load %arg15[%c0_107, %c7] : memref<8x176xf32, #tpu.memory_space<vmem>>, vector<8x64xf32>
    %cst_108 = arith.constant 0.000000e+00 : f32
    %137 = vector.shape_cast %133 : vector<1x64xi1> to vector<1x64xi1>
    %138 = vector.broadcast %137 : vector<1x64xi1> to vector<8x64xi1>
    %139 = vector.broadcast %cst_108 : f32 to vector<8x64xf32>
    %140 = arith.select %138, %136, %139 : vector<8x64xi1>, vector<8x64xf32>
    %c0_109 = arith.constant 0 : index
    %c0_110 = arith.constant 0 : index
    %141 = vector.load %arg16[%c0_109, %c0_110] : memref<72x128xf32, #tpu.memory_space<vmem>>, vector<8x64xf32>
    tpu.vector_store %arg16[%c0_109, %c0_110], %140 {strides = array<i32>} : memref<72x128xf32, #tpu.memory_space<vmem>>, vector<8x64xf32>,
    %c0_111 = arith.constant 0 : index
    %c87 = arith.constant 87 : index
    %142 = vector.load %arg15[%c0_111, %c87] : memref<8x176xf32, #tpu.memory_space<vmem>>, vector<8x64xf32>
    %cst_112 = arith.constant 0.000000e+00 : f32
    %143 = vector.shape_cast %133 : vector<1x64xi1> to vector<1x64xi1>
    %144 = vector.broadcast %143 : vector<1x64xi1> to vector<8x64xi1>
    %145 = vector.broadcast %cst_112 : f32 to vector<8x64xf32>
    %146 = arith.select %144, %142, %145 : vector<8x64xi1>, vector<8x64xf32>
    %c0_113 = arith.constant 0 : index
    %c64 = arith.constant 64 : index
    %147 = vector.load %arg16[%c0_113, %c64] : memref<72x128xf32, #tpu.memory_space<vmem>>, vector<8x64xf32>
    tpu.vector_store %arg16[%c0_113, %c64], %146 {strides = array<i32>} : memref<72x128xf32, #tpu.memory_space<vmem>>, vector<8x64xf32>,
    %c0_114 = arith.constant 0 : index
    %c8_115 = arith.constant 8 : index
    %148 = vector.load %arg15[%c0_114, %c8_115] : memref<8x176xf32, #tpu.memory_space<vmem>>, vector<8x64xf32>
    %c8_116 = arith.constant 8 : index
    %c0_117 = arith.constant 0 : index
    %149 = vector.load %arg16[%c8_116, %c0_117] : memref<72x128xf32, #tpu.memory_space<vmem>>, vector<8x64xf32>
    tpu.vector_store %arg16[%c8_116, %c0_117], %148 {strides = array<i32>} : memref<72x128xf32, #tpu.memory_space<vmem>>, vector<8x64xf32>,
    %c0_118 = arith.constant 0 : index
    %c88 = arith.constant 88 : index
    %150 = vector.load %arg15[%c0_118, %c88] : memref<8x176xf32, #tpu.memory_space<vmem>>, vector<8x64xf32>
    %c8_119 = arith.constant 8 : index
    %c64_120 = arith.constant 64 : index
    %151 = vector.load %arg16[%c8_119, %c64_120] : memref<72x128xf32, #tpu.memory_space<vmem>>, vector<8x64xf32>
    tpu.vector_store %arg16[%c8_119, %c64_120], %150 {strides = array<i32>} : memref<72x128xf32, #tpu.memory_space<vmem>>, vector<8x64xf32>,
    %c0_121 = arith.constant 0 : index
    %c9 = arith.constant 9 : index
    %152 = vector.load %arg15[%c0_121, %c9] : memref<8x176xf32, #tpu.memory_space<vmem>>, vector<8x64xf32>
    %cst_122 = arith.constant 0.000000e+00 : f32
    %153 = vector.shape_cast %135 : vector<1x64xi1> to vector<1x64xi1>
    %154 = vector.broadcast %153 : vector<1x64xi1> to vector<8x64xi1>
    %155 = vector.broadcast %cst_122 : f32 to vector<8x64xf32>
    %156 = arith.select %154, %152, %155 : vector<8x64xi1>, vector<8x64xf32>
    %c16_123 = arith.constant 16 : index
    %c0_124 = arith.constant 0 : index
    %157 = vector.load %arg16[%c16_123, %c0_124] : memref<72x128xf32, #tpu.memory_space<vmem>>, vector<8x64xf32>
    tpu.vector_store %arg16[%c16_123, %c0_124], %156 {strides = array<i32>} : memref<72x128xf32, #tpu.memory_space<vmem>>, vector<8x64xf32>,
    %c0_125 = arith.constant 0 : index
    %c89 = arith.constant 89 : index
    %158 = vector.load %arg15[%c0_125, %c89] : memref<8x176xf32, #tpu.memory_space<vmem>>, vector<8x64xf32>
    %cst_126 = arith.constant 0.000000e+00 : f32
    %159 = vector.shape_cast %135 : vector<1x64xi1> to vector<1x64xi1>
    %160 = vector.broadcast %159 : vector<1x64xi1> to vector<8x64xi1>
    %161 = vector.broadcast %cst_126 : f32 to vector<8x64xf32>
    %162 = arith.select %160, %158, %161 : vector<8x64xi1>, vector<8x64xf32>
    %c16_127 = arith.constant 16 : index
    %c64_128 = arith.constant 64 : index
    %163 = vector.load %arg16[%c16_127, %c64_128] : memref<72x128xf32, #tpu.memory_space<vmem>>, vector<8x64xf32>
    tpu.vector_store %arg16[%c16_127, %c64_128], %162 {strides = array<i32>} : memref<72x128xf32, #tpu.memory_space<vmem>>, vector<8x64xf32>,
    %c0_129 = arith.constant 0 : index
    %c15_130 = arith.constant 15 : index
    %164 = vector.load %arg15[%c0_129, %c15_130] : memref<8x176xf32, #tpu.memory_space<vmem>>, vector<8x64xf32>
    %cst_131 = arith.constant 0.000000e+00 : f32
    %165 = vector.shape_cast %133 : vector<1x64xi1> to vector<1x64xi1>
    %166 = vector.broadcast %165 : vector<1x64xi1> to vector<8x64xi1>
    %167 = vector.broadcast %cst_131 : f32 to vector<8x64xf32>
    %168 = arith.select %166, %164, %167 : vector<8x64xi1>, vector<8x64xf32>
    %c24_132 = arith.constant 24 : index
    %c0_133 = arith.constant 0 : index
    %169 = vector.load %arg16[%c24_132, %c0_133] : memref<72x128xf32, #tpu.memory_space<vmem>>, vector<8x64xf32>
    tpu.vector_store %arg16[%c24_132, %c0_133], %168 {strides = array<i32>} : memref<72x128xf32, #tpu.memory_space<vmem>>, vector<8x64xf32>,
    %c0_134 = arith.constant 0 : index
    %c95 = arith.constant 95 : index
    %170 = vector.load %arg15[%c0_134, %c95] : memref<8x176xf32, #tpu.memory_space<vmem>>, vector<8x64xf32>
    %cst_135 = arith.constant 0.000000e+00 : f32
    %171 = vector.shape_cast %133 : vector<1x64xi1> to vector<1x64xi1>
    %172 = vector.broadcast %171 : vector<1x64xi1> to vector<8x64xi1>
    %173 = vector.broadcast %cst_135 : f32 to vector<8x64xf32>
    %174 = arith.select %172, %170, %173 : vector<8x64xi1>, vector<8x64xf32>
    %c24_136 = arith.constant 24 : index
    %c64_137 = arith.constant 64 : index
    %175 = vector.load %arg16[%c24_136, %c64_137] : memref<72x128xf32, #tpu.memory_space<vmem>>, vector<8x64xf32>
    tpu.vector_store %arg16[%c24_136, %c64_137], %174 {strides = array<i32>} : memref<72x128xf32, #tpu.memory_space<vmem>>, vector<8x64xf32>,
    %c0_138 = arith.constant 0 : index
    %c16_139 = arith.constant 16 : index
    %176 = vector.load %arg15[%c0_138, %c16_139] : memref<8x176xf32, #tpu.memory_space<vmem>>, vector<8x64xf32>
    %c32_140 = arith.constant 32 : index
    %c0_141 = arith.constant 0 : index
    %177 = vector.load %arg16[%c32_140, %c0_141] : memref<72x128xf32, #tpu.memory_space<vmem>>, vector<8x64xf32>
    tpu.vector_store %arg16[%c32_140, %c0_141], %176 {strides = array<i32>} : memref<72x128xf32, #tpu.memory_space<vmem>>, vector<8x64xf32>,
    %c0_142 = arith.constant 0 : index
    %c96_143 = arith.constant 96 : index
    %178 = vector.load %arg15[%c0_142, %c96_143] : memref<8x176xf32, #tpu.memory_space<vmem>>, vector<8x64xf32>
    %c32_144 = arith.constant 32 : index
    %c64_145 = arith.constant 64 : index
    %179 = vector.load %arg16[%c32_144, %c64_145] : memref<72x128xf32, #tpu.memory_space<vmem>>, vector<8x64xf32>
    tpu.vector_store %arg16[%c32_144, %c64_145], %178 {strides = array<i32>} : memref<72x128xf32, #tpu.memory_space<vmem>>, vector<8x64xf32>,
    %c0_146 = arith.constant 0 : index
    %c17_147 = arith.constant 17 : index
    %180 = vector.load %arg15[%c0_146, %c17_147] : memref<8x176xf32, #tpu.memory_space<vmem>>, vector<8x64xf32>
    %cst_148 = arith.constant 0.000000e+00 : f32
    %181 = vector.shape_cast %135 : vector<1x64xi1> to vector<1x64xi1>
    %182 = vector.broadcast %181 : vector<1x64xi1> to vector<8x64xi1>
    %183 = vector.broadcast %cst_148 : f32 to vector<8x64xf32>
    %184 = arith.select %182, %180, %183 : vector<8x64xi1>, vector<8x64xf32>
    %c40 = arith.constant 40 : index
    %c0_149 = arith.constant 0 : index
    %185 = vector.load %arg16[%c40, %c0_149] : memref<72x128xf32, #tpu.memory_space<vmem>>, vector<8x64xf32>
    tpu.vector_store %arg16[%c40, %c0_149], %184 {strides = array<i32>} : memref<72x128xf32, #tpu.memory_space<vmem>>, vector<8x64xf32>,
    %c0_150 = arith.constant 0 : index
    %c97 = arith.constant 97 : index
    %186 = vector.load %arg15[%c0_150, %c97] : memref<8x176xf32, #tpu.memory_space<vmem>>, vector<8x64xf32>
    %cst_151 = arith.constant 0.000000e+00 : f32
    %187 = vector.shape_cast %135 : vector<1x64xi1> to vector<1x64xi1>
    %188 = vector.broadcast %187 : vector<1x64xi1> to vector<8x64xi1>
    %189 = vector.broadcast %cst_151 : f32 to vector<8x64xf32>
    %190 = arith.select %188, %186, %189 : vector<8x64xi1>, vector<8x64xf32>
    %c40_152 = arith.constant 40 : index
    %c64_153 = arith.constant 64 : index
    %191 = vector.load %arg16[%c40_152, %c64_153] : memref<72x128xf32, #tpu.memory_space<vmem>>, vector<8x64xf32>
    tpu.vector_store %arg16[%c40_152, %c64_153], %190 {strides = array<i32>} : memref<72x128xf32, #tpu.memory_space<vmem>>, vector<8x64xf32>,
    %c0_154 = arith.constant 0 : index
    %c23 = arith.constant 23 : index
    %192 = vector.load %arg15[%c0_154, %c23] : memref<8x176xf32, #tpu.memory_space<vmem>>, vector<8x64xf32>
    %cst_155 = arith.constant 0.000000e+00 : f32
    %193 = vector.shape_cast %133 : vector<1x64xi1> to vector<1x64xi1>
    %194 = vector.broadcast %193 : vector<1x64xi1> to vector<8x64xi1>
    %195 = vector.broadcast %cst_155 : f32 to vector<8x64xf32>
    %196 = arith.select %194, %192, %195 : vector<8x64xi1>, vector<8x64xf32>
    %c48_156 = arith.constant 48 : index
    %c0_157 = arith.constant 0 : index
    %197 = vector.load %arg16[%c48_156, %c0_157] : memref<72x128xf32, #tpu.memory_space<vmem>>, vector<8x64xf32>
    tpu.vector_store %arg16[%c48_156, %c0_157], %196 {strides = array<i32>} : memref<72x128xf32, #tpu.memory_space<vmem>>, vector<8x64xf32>,
    %c0_158 = arith.constant 0 : index
    %c103 = arith.constant 103 : index
    %198 = vector.load %arg15[%c0_158, %c103] : memref<8x176xf32, #tpu.memory_space<vmem>>, vector<8x64xf32>
    %cst_159 = arith.constant 0.000000e+00 : f32
    %199 = vector.shape_cast %133 : vector<1x64xi1> to vector<1x64xi1>
    %200 = vector.broadcast %199 : vector<1x64xi1> to vector<8x64xi1>
    %201 = vector.broadcast %cst_159 : f32 to vector<8x64xf32>
    %202 = arith.select %200, %198, %201 : vector<8x64xi1>, vector<8x64xf32>
    %c48_160 = arith.constant 48 : index
    %c64_161 = arith.constant 64 : index
    %203 = vector.load %arg16[%c48_160, %c64_161] : memref<72x128xf32, #tpu.memory_space<vmem>>, vector<8x64xf32>
    tpu.vector_store %arg16[%c48_160, %c64_161], %202 {strides = array<i32>} : memref<72x128xf32, #tpu.memory_space<vmem>>, vector<8x64xf32>,
    %c0_162 = arith.constant 0 : index
    %c24_163 = arith.constant 24 : index
    %204 = vector.load %arg15[%c0_162, %c24_163] : memref<8x176xf32, #tpu.memory_space<vmem>>, vector<8x64xf32>
    %c56 = arith.constant 56 : index
    %c0_164 = arith.constant 0 : index
    %205 = vector.load %arg16[%c56, %c0_164] : memref<72x128xf32, #tpu.memory_space<vmem>>, vector<8x64xf32>
    tpu.vector_store %arg16[%c56, %c0_164], %204 {strides = array<i32>} : memref<72x128xf32, #tpu.memory_space<vmem>>, vector<8x64xf32>,
    %c0_165 = arith.constant 0 : index
    %c104 = arith.constant 104 : index
    %206 = vector.load %arg15[%c0_165, %c104] : memref<8x176xf32, #tpu.memory_space<vmem>>, vector<8x64xf32>
    %c56_166 = arith.constant 56 : index
    %c64_167 = arith.constant 64 : index
    %207 = vector.load %arg16[%c56_166, %c64_167] : memref<72x128xf32, #tpu.memory_space<vmem>>, vector<8x64xf32>
    tpu.vector_store %arg16[%c56_166, %c64_167], %206 {strides = array<i32>} : memref<72x128xf32, #tpu.memory_space<vmem>>, vector<8x64xf32>,
    %c0_168 = arith.constant 0 : index
    %c25 = arith.constant 25 : index
    %208 = vector.load %arg15[%c0_168, %c25] : memref<8x176xf32, #tpu.memory_space<vmem>>, vector<8x64xf32>
    %cst_169 = arith.constant 0.000000e+00 : f32
    %209 = vector.shape_cast %135 : vector<1x64xi1> to vector<1x64xi1>
    %210 = vector.broadcast %209 : vector<1x64xi1> to vector<8x64xi1>
    %211 = vector.broadcast %cst_169 : f32 to vector<8x64xf32>
    %212 = arith.select %210, %208, %211 : vector<8x64xi1>, vector<8x64xf32>
    %c64_170 = arith.constant 64 : index
    %c0_171 = arith.constant 0 : index
    %213 = vector.load %arg16[%c64_170, %c0_171] : memref<72x128xf32, #tpu.memory_space<vmem>>, vector<8x64xf32>
    tpu.vector_store %arg16[%c64_170, %c0_171], %212 {strides = array<i32>} : memref<72x128xf32, #tpu.memory_space<vmem>>, vector<8x64xf32>,
    %c0_172 = arith.constant 0 : index
    %c105 = arith.constant 105 : index
    %214 = vector.load %arg15[%c0_172, %c105] : memref<8x176xf32, #tpu.memory_space<vmem>>, vector<8x64xf32>
    %cst_173 = arith.constant 0.000000e+00 : f32
    %215 = vector.shape_cast %135 : vector<1x64xi1> to vector<1x64xi1>
    %216 = vector.broadcast %215 : vector<1x64xi1> to vector<8x64xi1>
    %217 = vector.broadcast %cst_173 : f32 to vector<8x64xf32>
    %218 = arith.select %216, %214, %217 : vector<8x64xi1>, vector<8x64xf32>
    %c64_174 = arith.constant 64 : index
    %c64_175 = arith.constant 64 : index
    %219 = vector.load %arg16[%c64_174, %c64_175] : memref<72x128xf32, #tpu.memory_space<vmem>>, vector<8x64xf32>
    tpu.vector_store %arg16[%c64_174, %c64_175], %218 {strides = array<i32>} : memref<72x128xf32, #tpu.memory_space<vmem>>, vector<8x64xf32>,
    %c0_176 = arith.constant 0 : index
    %c0_177 = arith.constant 0 : index
    %220 = vector.load %arg4[%c0_176, %c0_177] : memref<16x72xf32, #tpu.memory_space<vmem>>, vector<16x72xf32>
    %c0_178 = arith.constant 0 : index
    %c0_179 = arith.constant 0 : index
    %221 = vector.load %arg16[%c0_178, %c0_179] : memref<72x128xf32, #tpu.memory_space<vmem>>, vector<72x128xf32>
    %cst_180 = arith.constant dense<0.000000e+00> : vector<16x128xf32>
    %222 = tpu.matmul %220, %221, %cst_180 {dimension_numbers = #tpu.dot_dimension_numbers<[1], [0], [0], [1], [0, 0, 1, 1], [], []>, precision = #tpu.contract_precision<fp32>} : vector<16x72xf32>, vector<72x128xf32>, vector<16x128xf32> -> vector<16x128xf32>
    %c0_181 = arith.constant 0 : index
    %c0_182 = arith.constant 0 : index
    %223 = vector.load %arg5[%c0_181, %c0_182] : memref<16x1xf32, #tpu.memory_space<vmem>>, vector<16x1xf32>
    %224 = vector.broadcast %223 : vector<16x1xf32> to vector<16x128xf32>
    %225 = arith.addf %222, %224 : vector<16x128xf32>
    %c0_183 = arith.constant 0 : index
    %c0_184 = arith.constant 0 : index
    %226 = vector.load %arg10[%c0_183, %c0_184] : memref<16x128xf32, #tpu.memory_space<vmem>>, vector<16x128xf32>
    tpu.vector_store %arg10[%c0_183, %c0_184], %225 {strides = array<i32>} : memref<16x128xf32, #tpu.memory_space<vmem>>, vector<16x128xf32>,
    %cst_185 = arith.constant 0.000000e+00 : f32
    %227 = vector.broadcast %cst_185 : f32 to vector<16x128xf32>
    %228 = arith.maximumf %225, %227 : vector<16x128xf32>
    %c0_186 = arith.constant 0 : index
    %c0_187 = arith.constant 0 : index
    %229 = vector.load %arg17[%c0_186, %c0_187] : memref<16x144xf32, #tpu.memory_space<vmem>>, vector<16x128xf32>
    tpu.vector_store %arg17[%c0_186, %c0_187], %228 {strides = array<i32>} : memref<16x144xf32, #tpu.memory_space<vmem>>, vector<16x128xf32>,
    %cst_188 = arith.constant 0.000000e+00 : f32
    %230 = vector.broadcast %cst_188 : f32 to vector<16x16xf32>
    %c0_189 = arith.constant 0 : index
    %c128 = arith.constant 128 : index
    %231 = vector.load %arg17[%c0_189, %c128] : memref<16x144xf32, #tpu.memory_space<vmem>>, vector<16x16xf32>
    tpu.vector_store %arg17[%c0_189, %c128], %230 {strides = array<i32>} : memref<16x144xf32, #tpu.memory_space<vmem>>, vector<16x16xf32>,
    %c0_190 = arith.constant 0 : index
    %c0_191 = arith.constant 0 : index
    %232 = vector.load %arg17[%c0_190, %c0_191] : memref<16x144xf32, #tpu.memory_space<vmem>>, vector<16x128xf32>
    %c0_192 = arith.constant 0 : index
    %c1_193 = arith.constant 1 : index
    %233 = vector.load %arg17[%c0_192, %c1_193] : memref<16x144xf32, #tpu.memory_space<vmem>>, vector<16x128xf32>
    %234 = arith.maximumf %232, %233 : vector<16x128xf32>
    %c0_194 = arith.constant 0 : index
    %c8_195 = arith.constant 8 : index
    %235 = vector.load %arg17[%c0_194, %c8_195] : memref<16x144xf32, #tpu.memory_space<vmem>>, vector<16x128xf32>
    %c0_196 = arith.constant 0 : index
    %c9_197 = arith.constant 9 : index
    %236 = vector.load %arg17[%c0_196, %c9_197] : memref<16x144xf32, #tpu.memory_space<vmem>>, vector<16x128xf32>
    %237 = arith.maximumf %235, %236 : vector<16x128xf32>
    %238 = arith.maximumf %234, %237 : vector<16x128xf32>
    %c0_198 = arith.constant 0 : index
    %c0_199 = arith.constant 0 : index
    %239 = vector.load %arg7[%c0_198, %c0_199] : memref<128x32xf32, #tpu.memory_space<vmem>>, vector<128x32xf32>
    %cst_200 = arith.constant dense<0.000000e+00> : vector<16x32xf32>
    %240 = tpu.matmul %238, %239, %cst_200 {dimension_numbers = #tpu.dot_dimension_numbers<[1], [0], [0], [1], [0, 0, 1, 1], [], []>, precision = #tpu.contract_precision<fp32>} : vector<16x128xf32>, vector<128x32xf32>, vector<16x32xf32> -> vector<16x32xf32>
    %c0_201 = arith.constant 0 : index
    %c0_202 = arith.constant 0 : index
    %241 = vector.load %arg11[%c0_201, %c0_202] : memref<16x32xf32, #tpu.memory_space<vmem>>, vector<16x32xf32>
    tpu.vector_store %arg11[%c0_201, %c0_202], %240 {strides = array<i32>} : memref<16x32xf32, #tpu.memory_space<vmem>>, vector<16x32xf32>,
    return
  }
  func.func @transform_0(%arg0: i32) -> (i32, i32) {
    %c0_i32 = arith.constant 0 : i32
    %c0_i32_0 = arith.constant 0 : i32
    %c0_i32_1 = arith.constant 0 : i32
    return %c0_i32, %c0_i32_0 : i32, i32
  }
  func.func @transform_1(%arg0: i32) -> (i32, i32) {
    %c0_i32 = arith.constant 0 : i32
    %c0_i32_0 = arith.constant 0 : i32
    %c0_i32_1 = arith.constant 0 : i32
    return %c0_i32, %c0_i32_0 : i32, i32
  }
  func.func @transform_2(%arg0: i32) -> (i32, i32) {
    %c0_i32 = arith.constant 0 : i32
    %c0_i32_0 = arith.constant 0 : i32
    %c0_i32_1 = arith.constant 0 : i32
    return %c0_i32, %c0_i32_0 : i32, i32
  }
  func.func @transform_3(%arg0: i32) -> (i32, i32) {
    %c0_i32 = arith.constant 0 : i32
    %c0_i32_0 = arith.constant 0 : i32
    %c0_i32_1 = arith.constant 0 : i32
    return %c0_i32, %c0_i32_0 : i32, i32
  }
  func.func @transform_4(%arg0: i32) -> (i32, i32) {
    %c0_i32 = arith.constant 0 : i32
    %c0_i32_0 = arith.constant 0 : i32
    %c0_i32_1 = arith.constant 0 : i32
    return %c0_i32, %c0_i32_0 : i32, i32
  }
  func.func @transform_5(%arg0: i32) -> (i32, i32) {
    %c0_i32 = arith.constant 0 : i32
    %c0_i32_0 = arith.constant 0 : i32
    %c0_i32_1 = arith.constant 0 : i32
    return %c0_i32, %c0_i32_0 : i32, i32
  }
  func.func @transform_6(%arg0: i32) -> (i32, i32) {
    %c0_i32 = arith.constant 0 : i32
    %c0_i32_0 = arith.constant 0 : i32
    %c0_i32_1 = arith.constant 0 : i32
    return %c0_i32, %c0_i32_0 : i32, i32
  }
  func.func @transform_7(%arg0: i32) -> (i32, i32) {
    %c0_i32 = arith.constant 0 : i32
    %c0_i32_0 = arith.constant 0 : i32
    %c0_i32_1 = arith.constant 0 : i32
    return %c0_i32, %c0_i32_0 : i32, i32
  }
  func.func @transform_8(%arg0: i32) -> (i32, i32) {
    %c0_i32 = arith.constant 0 : i32
    %c0_i32_0 = arith.constant 0 : i32
    %c0_i32_1 = arith.constant 0 : i32
    return %c0_i32, %c0_i32_0 : i32, i32
  }
  func.func @transform_9(%arg0: i32) -> (i32, i32) {
    %c0_i32 = arith.constant 0 : i32
    %c0_i32_0 = arith.constant 0 : i32
    %c0_i32_1 = arith.constant 0 : i32
    return %c0_i32, %c0_i32_0 : i32, i32
  }
  func.func @transform_10(%arg0: i32) -> (i32, i32) {
    %c0_i32 = arith.constant 0 : i32
    %c0_i32_0 = arith.constant 0 : i32
    %c0_i32_1 = arith.constant 0 : i32
    return %c0_i32, %c0_i32_0 : i32, i32
  }
}

</mosaic_0001>

<llo_original>
// kernel: _lambda_.1
$region0: #{_lambda_.1}
  #allocation0 [shape = 'u32[]', space=smem, size = 0x4, offset = 0x4, fixed_abs, tag = 'smem constant byte address 0x4 - core index']
  #allocation1 [shape = 'u32[144,128]{1,0:T(1,128)}', space=vmem, size = 0x12000, scoped, tag = 'internal scratch']
  #allocation2 [shape = 'f32[4,608]{1,0:T(4,128)}', space=vmem, size = 0x2800, scoped, tag = 'scratch operand']
  #allocation3 [shape = 'f32[36,512]{1,0:T(8,128)}', space=vmem, size = 0x14000, scoped, tag = 'scratch operand']
  #allocation4 [shape = 'f32[8,544]{1,0:T(8,128)}', space=vmem, size = 0x5000, scoped, tag = 'scratch operand']
  #allocation5 [shape = 'f32[8,176]{1,0:T(8,128)}', space=vmem, size = 0x2000, scoped, tag = 'scratch operand']
  #allocation6 [shape = 'f32[72,128]{1,0:T(8,128)}', space=vmem, size = 0x9000, scoped, tag = 'scratch operand']
  #allocation7 [shape = 'f32[16,144]{1,0:T(8,128)}', space=vmem, size = 0x4000, scoped, tag = 'scratch operand']
  %s0 = inlined_call_operand.vmem [shape: f32[4,512], index: 0, kind: input, shape index: {}]
  %s1 = inlined_call_operand.vmem [shape: f32[8,36], index: 1, kind: input, shape index: {}]
  %s2 = inlined_call_operand.vmem [shape: f32[8,1], index: 2, kind: input, shape index: {}]
  %s3 = inlined_call_operand.vmem [shape: f32[16,72], index: 3, kind: input, shape index: {}]
  %s4 = inlined_call_operand.vmem [shape: f32[16,1], index: 4, kind: input, shape index: {}]
  %s5 = inlined_call_operand.vmem [shape: f32[512,128], index: 5, kind: input, shape index: {}]
  %s6 = inlined_call_operand.vmem [shape: f32[128,32], index: 6, kind: input, shape index: {}]
  %s7 = inlined_call_operand.vmem [shape: f32[8,512], index: 7, kind: output, shape index: {0}]
  %s8 = inlined_call_operand.hbm [shape: f32[8,128], index: 8, kind: output, shape index: {1}]
  %s9 = inlined_call_operand.hbm [shape: f32[16,128], index: 9, kind: output, shape index: {2}]
  %s10 = inlined_call_operand.vmem [shape: f32[16,32], index: 10, kind: output, shape index: {3}]
  %11 = xla_tuple %s7, %s8, %s9, %s10
  %s12 = sld [smem:[#allocation0]]
  $region62: #{_lambda_.1} parent=0
    _
  %s14 = ssub.s32 1, %s12
  %s15 = scalar_select 0, %s14, %s12
  $region1: #{_lambda_.1} parent=0
    #allocation8 [shape = 'u8[4096]{0}', space=vmem, size = 0x1000, scoped, tag = 'output window, operand 1, single buffered']
    #allocation9 [shape = 's32[1]{0}', space=sflag, size = 0x4, scoped, tag = 'scoped memory for _lambda_.1']
    #allocation10 [shape = 'u8[8192]{0}', space=vmem, size = 0x2000, scoped, tag = 'output window, operand 2, single buffered']
    #allocation11 [shape = 's32[1]{0}', space=sflag, size = 0x4, scoped, tag = 'scoped memory for _lambda_.1']
    %16 = vsyncpa [#allocation9], 0
    %17 = vsyncpa [#allocation11], 0
    // Predicated region
    $region2: #{_lambda_.1} parent=1 // pred_check
      _
    $region3: #{_lambda_.1} parent=1 // pred_check_branch
      %19 = sbr.rel (0) target = $region5
    $region4: #{_lambda_.1} parent=1 // pred_region
      _
    $region5: #{_lambda_.1} parent=1 // pred_fallthru
      _
    // Predicated region
    $region6: #{_lambda_.1} parent=1 // pred_check
      _
    $region7: #{_lambda_.1} parent=1 // pred_check_branch
      %21 = sbr.rel (0) target = $region9
    $region8: #{_lambda_.1} parent=1 // pred_region
      _
    $region9: #{_lambda_.1} parent=1 // pred_fallthru
      _
    // Predicated region
    $region10: #{_lambda_.1} parent=1 // pred_check
      _
    $region11: #{_lambda_.1} parent=1 // pred_check_branch
      %23 = sbr.rel (0) target = $region13
    $region12: #{_lambda_.1} parent=1 // pred_region
      _
    $region13: #{_lambda_.1} parent=1 // pred_fallthru
      _
    // Predicated region
    $region14: #{_lambda_.1} parent=1 // pred_check
      _
    $region15: #{_lambda_.1} parent=1 // pred_check_branch
      %25 = sbr.rel (0) target = $region17
    $region16: #{_lambda_.1} parent=1 // pred_region
      _
    $region17: #{_lambda_.1} parent=1 // pred_fallthru
      _
    // Predicated region
    $region18: #{_lambda_.1} parent=1 // pred_check
      _
    $region19: #{_lambda_.1} parent=1 // pred_check_branch
      %27 = sbr.rel (0) target = $region21
    $region20: #{_lambda_.1} parent=1 // pred_region
      _
    $region21: #{_lambda_.1} parent=1 // pred_fallthru
      _
    // Predicated region
    $region22: #{_lambda_.1} parent=1 // pred_check
      _
    $region23: #{_lambda_.1} parent=1 // pred_check_branch
      %29 = sbr.rel (0) target = $region25
    $region24: #{_lambda_.1} parent=1 // pred_region
      _
    $region25: #{_lambda_.1} parent=1 // pred_fallthru
      _
    // Predicated region
    $region26: #{_lambda_.1} parent=1 // pred_check
      _
    $region27: #{_lambda_.1} parent=1 // pred_check_branch
      %31 = sbr.rel (0) target = $region29
    $region28: #{_lambda_.1} parent=1 // pred_region
      _
    $region29: #{_lambda_.1} parent=1 // pred_fallthru
      _
    %v32 = vld [vmem:[%s0] sm:$0xff]
    %v33 = vld [vmem:[%s0 + $0x8] sm:$0xff]
    %vm34 = vcmask 257024
    %35 = vst.msk [vmem:[#allocation2] sm:$0xf] %vm34, 0.0
    %37 = vrot.lane.b32.xlu0 %v32, 32
    %v38 = vpop.permute.xlu0 %37
    %v39 = vrot.slane %v38, 4
    %vm40 = vcmask 261120
    %v41 = vsel %vm40, %v39, %v38
    %vm44 = vcmask 1043712
    %vm45 = vcmask 1047556
    %vm46 = vmor %vm45, %vm44
    %47 = vst.msk [vmem:[#allocation2] sm:$0xff] %vm46, %v41
    %48 = vst.msk [vmem:[#allocation2 + $0x8] sm:$0xf] %vm34, %v39
    %vm49 = vcmask 519424
    %50 = vst.msk [vmem:[#allocation2 + $0x8] sm:$0xf] %vm49, 0.0
    %52 = vrot.lane.b32.xlu0 %v33, 64
    %v53 = vpop.permute.xlu0 %52
    %v54 = vrot.slane %v53, 4
    %vm55 = vcmask 523264
    %v56 = vsel %vm55, %v54, %v53
    %vm59 = vcmask 1043968
    %vm60 = vmor %vm45, %vm59
    %61 = vst.msk [vmem:[#allocation2 + $0x8] sm:$0xff] %vm60, %v56
    %vm62 = vcmask 519168
    %63 = vst.msk [vmem:[#allocation2 + $0x10] sm:$0xf] %vm62, %v54
    %vm64 = vcmask 781824
    %65 = vst.msk [vmem:[#allocation2 + $0x10] sm:$0xf] %vm64, 0.0
    %v66 = vlaneseq
    %v67 = vand.u32 %v66, 127
    %v68 = vadd.s32 %v67, 128
    %v69 = vand.u32 %v67, 15
    %v70 = vand.u32 %v68, 15
    %vm71 = vcmp.gt.s32.totalorder %v69, 0
    %vm72 = vcmp.gt.s32.totalorder %v70, 0
    %vm73 = vcmp.lt.s32.totalorder %v69, 15
    %vm74 = vcmp.lt.s32.totalorder %v70, 15
    %v75 = vld [vmem:[#allocation2] sm:$0xff]
    %v76 = vld [vmem:[#allocation2 + $0x8] sm:$0xf]
    %v77 = vsel %vm71, 1, 0
    %v78 = vsel %vm72, 1, 0
    %vm79 = vcmp.eq.s32.totalorder %v77, 1
    %vm80 = vcmp.eq.s32.totalorder %v78, 1
    %v83 = vcombine.high %v75, %v75
    %84 = vrot.lane.b32.xlu0 %v75, 113
    %v85 = vpop.permute.xlu0 %84
    %86 = vrot.lane.b32.xlu0 %v83, 113
    %v87 = vpop.permute.xlu0 %86
    %88 = vrot.lane.b32.xlu0 %v76, 113
    %v89 = vpop.permute.xlu0 %88
    %vm90 = vcmask 924672
    %v91 = vsel %vm90, %v85, %v87
    %v92 = vsel %vm90, %v87, %v89
    %v95 = vsel %vm79, %v91, 0.0
    %v96 = vsel %vm80, %v92, 0.0
    %97 = vst [vmem:[#allocation3] sm:$0xf] %v95
    %98 = vst [vmem:[#allocation3 + $0x8] sm:$0xf] %v96
    %v99 = vld [vmem:[#allocation2 + $0x8] sm:$0xff]
    %v100 = vld [vmem:[#allocation2 + $0x10] sm:$0xf]
    %v103 = vcombine.high %v99, %v99
    %104 = vrot.lane.b32.xlu0 %v99, 81
    %v105 = vpop.permute.xlu0 %104
    %106 = vrot.lane.b32.xlu0 %v103, 81
    %v107 = vpop.permute.xlu0 %106
    %108 = vrot.lane.b32.xlu0 %v100, 81
    %v109 = vpop.permute.xlu0 %108
    %vm110 = vcmask 662528
    %v111 = vsel %vm110, %v105, %v107
    %v112 = vsel %vm110, %v107, %v109
    %v115 = vsel %vm79, %v111, 0.0
    %v116 = vsel %vm80, %v112, 0.0
    %117 = vst [vmem:[#allocation3 + $0x10] sm:$0xf] %v115
    %118 = vst [vmem:[#allocation3 + $0x18] sm:$0xf] %v116
    %v119 = vld [vmem:[#allocation2] sm:$0xff]
    %v120 = vld [vmem:[#allocation2 + $0x8] sm:$0xf]
    %v123 = vcombine.low %v119, %v119
    %v124 = vcombine.low %v120, %v120
    %125 = vrot.lane.b32.xlu0 %v123, 112
    %v126 = vpop.permute.xlu0 %125
    %127 = vrot.lane.b32.xlu0 %v119, 112
    %v128 = vpop.permute.xlu0 %127
    %129 = vrot.lane.b32.xlu0 %v124, 112
    %v130 = vpop.permute.xlu0 %129
    %vm131 = vcmask 916480
    %v132 = vsel %vm131, %v126, %v128
    %v133 = vsel %vm131, %v128, %v130
    %136 = vst [vmem:[#allocation3] sm:$0xf0] %v132
    %137 = vst [vmem:[#allocation3 + $0x8] sm:$0xf0] %v133
    %v138 = vld [vmem:[#allocation2 + $0x8] sm:$0xff]
    %v139 = vld [vmem:[#allocation2 + $0x10] sm:$0xf]
    %v142 = vcombine.low %v138, %v138
    %v143 = vcombine.low %v139, %v139
    %144 = vrot.lane.b32.xlu0 %v142, 80
    %v145 = vpop.permute.xlu0 %144
    %146 = vrot.lane.b32.xlu0 %v138, 80
    %v147 = vpop.permute.xlu0 %146
    %148 = vrot.lane.b32.xlu0 %v143, 80
    %v149 = vpop.permute.xlu0 %148
    %vm150 = vcmask 654336
    %v151 = vsel %vm150, %v145, %v147
    %v152 = vsel %vm150, %v147, %v149
    %155 = vst [vmem:[#allocation3 + $0x10] sm:$0xf0] %v151
    %156 = vst [vmem:[#allocation3 + $0x18] sm:$0xf0] %v152
    %v157 = vld [vmem:[#allocation2] sm:$0xff]
    %v158 = vld [vmem:[#allocation2 + $0x8] sm:$0xf]
    %v159 = vsel %vm73, 1, 0
    %v160 = vsel %vm74, 1, 0
    %vm161 = vcmp.eq.s32.totalorder %v159, 1
    %vm162 = vcmp.eq.s32.totalorder %v160, 1
    %v165 = vcombine.high %v157, %v157
    %166 = vrot.lane.b32.xlu0 %v157, 111
    %v167 = vpop.permute.xlu0 %166
    %168 = vrot.lane.b32.xlu0 %v165, 111
    %v169 = vpop.permute.xlu0 %168
    %170 = vrot.lane.b32.xlu0 %v158, 111
    %v171 = vpop.permute.xlu0 %170
    %vm172 = vcmask 908288
    %v173 = vsel %vm172, %v167, %v169
    %v174 = vsel %vm172, %v169, %v171
    %v177 = vsel %vm161, %v173, 0.0
    %v178 = vsel %vm162, %v174, 0.0
    %179 = vst [vmem:[#allocation3 + $0x20] sm:$0xf] %v177
    %180 = vst [vmem:[#allocation3 + $0x28] sm:$0xf] %v178
    %v181 = vld [vmem:[#allocation2 + $0x8] sm:$0xff]
    %v182 = vld [vmem:[#allocation2 + $0x10] sm:$0xf]
    %v185 = vcombine.high %v181, %v181
    %186 = vrot.lane.b32.xlu0 %v181, 79
    %v187 = vpop.permute.xlu0 %186
    %188 = vrot.lane.b32.xlu0 %v185, 79
    %v189 = vpop.permute.xlu0 %188
    %190 = vrot.lane.b32.xlu0 %v182, 79
    %v191 = vpop.permute.xlu0 %190
    %vm192 = vcmask 646144
    %v193 = vsel %vm192, %v187, %v189
    %v194 = vsel %vm192, %v189, %v191
    %v197 = vsel %vm161, %v193, 0.0
    %v198 = vsel %vm162, %v194, 0.0
    %199 = vst [vmem:[#allocation3 + $0x30] sm:$0xf] %v197
    %200 = vst [vmem:[#allocation3 + $0x38] sm:$0xf] %v198
    %v201 = vld [vmem:[#allocation2] sm:$0xff]
    %v202 = vld [vmem:[#allocation2 + $0x8] sm:$0xf]
    %v205 = vcombine.high %v201, %v201
    %206 = vrot.lane.b32.xlu0 %v201, 97
    %v207 = vpop.permute.xlu0 %206
    %208 = vrot.lane.b32.xlu0 %v205, 97
    %v209 = vpop.permute.xlu0 %208
    %210 = vrot.lane.b32.xlu0 %v202, 97
    %v211 = vpop.permute.xlu0 %210
    %vm212 = vcmask 793600
    %v213 = vsel %vm212, %v207, %v209
    %v214 = vsel %vm212, %v209, %v211
    %v217 = vsel %vm79, %v213, 0.0
    %v218 = vsel %vm80, %v214, 0.0
    %v221 = vrot.slane %v217, 4
    %v222 = vrot.slane %v218, 4
    %225 = vst [vmem:[#allocation3 + $0x20] sm:$0xf0] %v221
    %226 = vst [vmem:[#allocation3 + $0x28] sm:$0xf0] %v222
    %v227 = vld [vmem:[#allocation2 + $0x8] sm:$0xff]
    %v228 = vld [vmem:[#allocation2 + $0x10] sm:$0xf]
    %v231 = vcombine.high %v227, %v227
    %232 = vrot.lane.b32.xlu0 %v227, 65
    %v233 = vpop.permute.xlu0 %232
    %234 = vrot.lane.b32.xlu0 %v231, 65
    %v235 = vpop.permute.xlu0 %234
    %236 = vrot.lane.b32.xlu0 %v228, 65
    %v237 = vpop.permute.xlu0 %236
    %vm238 = vcmask 531456
    %v239 = vsel %vm238, %v233, %v235
    %v240 = vsel %vm238, %v235, %v237
    %v243 = vsel %vm79, %v239, 0.0
    %v244 = vsel %vm80, %v240, 0.0
    %v247 = vrot.slane %v243, 4
    %v248 = vrot.slane %v244, 4
    %251 = vst [vmem:[#allocation3 + $0x30] sm:$0xf0] %v247
    %252 = vst [vmem:[#allocation3 + $0x38] sm:$0xf0] %v248
    %v253 = vld [vmem:[#allocation2] sm:$0xff]
    %v254 = vld [vmem:[#allocation2 + $0x8] sm:$0xf]
    %v257 = vcombine.high %v253, %v253
    %258 = vrot.lane.b32.xlu0 %v253, 96
    %v259 = vpop.permute.xlu0 %258
    %260 = vrot.lane.b32.xlu0 %v257, 96
    %v261 = vpop.permute.xlu0 %260
    %262 = vrot.lane.b32.xlu0 %v254, 96
    %v263 = vpop.permute.xlu0 %262
    %vm264 = vcmask 785408
    %v265 = vsel %vm264, %v259, %v261
    %v266 = vsel %vm264, %v261, %v263
    %269 = vst [vmem:[#allocation3 + $0x40] sm:$0xf] %v265
    %270 = vst [vmem:[#allocation3 + $0x48] sm:$0xf] %v266
    %v271 = vld [vmem:[#allocation2 + $0x8] sm:$0xff]
    %v272 = vld [vmem:[#allocation2 + $0x10] sm:$0xf]
    %v275 = vcombine.high %v271, %v271
    %276 = vrot.lane.b32.xlu0 %v271, 64
    %v277 = vpop.permute.xlu0 %276
    %278 = vrot.lane.b32.xlu0 %v275, 64
    %v279 = vpop.permute.xlu0 %278
    %280 = vrot.lane.b32.xlu0 %v272, 64
    %v281 = vpop.permute.xlu0 %280
    %v282 = vsel %vm55, %v277, %v279
    %v283 = vsel %vm55, %v279, %v281
    %286 = vst [vmem:[#allocation3 + $0x50] sm:$0xf] %v282
    %287 = vst [vmem:[#allocation3 + $0x58] sm:$0xf] %v283
    %v288 = vld [vmem:[#allocation2] sm:$0xff]
    %v289 = vld [vmem:[#allocation2 + $0x8] sm:$0xf]
    %v292 = vcombine.high %v288, %v288
    %293 = vrot.lane.b32.xlu0 %v288, 95
    %v294 = vpop.permute.xlu0 %293
    %295 = vrot.lane.b32.xlu0 %v292, 95
    %v296 = vpop.permute.xlu0 %295
    %297 = vrot.lane.b32.xlu0 %v289, 95
    %v298 = vpop.permute.xlu0 %297
    %vm299 = vcmask 777216
    %v300 = vsel %vm299, %v294, %v296
    %v301 = vsel %vm299, %v296, %v298
    %v304 = vsel %vm161, %v300, 0.0
    %v305 = vsel %vm162, %v301, 0.0
    %v308 = vrot.slane %v304, 4
    %v309 = vrot.slane %v305, 4
    %312 = vst [vmem:[#allocation3 + $0x40] sm:$0xf0] %v308
    %313 = vst [vmem:[#allocation3 + $0x48] sm:$0xf0] %v309
    %v314 = vld [vmem:[#allocation2 + $0x8] sm:$0xff]
    %v315 = vld [vmem:[#allocation2 + $0x10] sm:$0xf]
    %v318 = vcombine.high %v314, %v314
    %319 = vrot.lane.b32.xlu0 %v314, 63
    %v320 = vpop.permute.xlu0 %319
    %321 = vrot.lane.b32.xlu0 %v318, 63
    %v322 = vpop.permute.xlu0 %321
    %323 = vrot.lane.b32.xlu0 %v315, 63
    %v324 = vpop.permute.xlu0 %323
    %vm325 = vcmask 515072
    %v326 = vsel %vm325, %v320, %v322
    %v327 = vsel %vm325, %v322, %v324
    %v330 = vsel %vm161, %v326, 0.0
    %v331 = vsel %vm162, %v327, 0.0
    %v334 = vrot.slane %v330, 4
    %v335 = vrot.slane %v331, 4
    %338 = vst [vmem:[#allocation3 + $0x50] sm:$0xf0] %v334
    %339 = vst [vmem:[#allocation3 + $0x58] sm:$0xf0] %v335
    %v340 = vld [vmem:[#allocation2] sm:$0xff]
    %v341 = vld [vmem:[#allocation2 + $0x8] sm:$0xf]
    %v344 = vcombine.high %v340, %v340
    %345 = vrot.lane.b32.xlu0 %v340, 81
    %v346 = vpop.permute.xlu0 %345
    %347 = vrot.lane.b32.xlu0 %v344, 81
    %v348 = vpop.permute.xlu0 %347
    %349 = vrot.lane.b32.xlu0 %v341, 81
    %v350 = vpop.permute.xlu0 %349
    %v351 = vsel %vm110, %v346, %v348
    %v352 = vsel %vm110, %v348, %v350
    %v355 = vsel %vm79, %v351, 0.0
    %v356 = vsel %vm80, %v352, 0.0
    %357 = vst [vmem:[#allocation3 + $0x60] sm:$0xf] %v355
    %358 = vst [vmem:[#allocation3 + $0x68] sm:$0xf] %v356
    %v359 = vld [vmem:[#allocation2 + $0x8] sm:$0xff]
    %v360 = vld [vmem:[#allocation2 + $0x10] sm:$0xf]
    %v363 = vcombine.high %v359, %v359
    %364 = vrot.lane.b32.xlu0 %v359, 49
    %v365 = vpop.permute.xlu0 %364
    %366 = vrot.lane.b32.xlu0 %v363, 49
    %v367 = vpop.permute.xlu0 %366
    %368 = vrot.lane.b32.xlu0 %v360, 49
    %v369 = vpop.permute.xlu0 %368
    %vm370 = vcmask 400384
    %v371 = vsel %vm370, %v365, %v367
    %v372 = vsel %vm370, %v367, %v369
    %v375 = vsel %vm79, %v371, 0.0
    %v376 = vsel %vm80, %v372, 0.0
    %377 = vst [vmem:[#allocation3 + $0x70] sm:$0xf] %v375
    %378 = vst [vmem:[#allocation3 + $0x78] sm:$0xf] %v376
    %v379 = vld [vmem:[#allocation2] sm:$0xff]
    %v380 = vld [vmem:[#allocation2 + $0x8] sm:$0xf]
    %v383 = vcombine.low %v379, %v379
    %v384 = vcombine.low %v380, %v380
    %385 = vrot.lane.b32.xlu0 %v383, 80
    %v386 = vpop.permute.xlu0 %385
    %387 = vrot.lane.b32.xlu0 %v379, 80
    %v388 = vpop.permute.xlu0 %387
    %389 = vrot.lane.b32.xlu0 %v384, 80
    %v390 = vpop.permute.xlu0 %389
    %v391 = vsel %vm150, %v386, %v388
    %v392 = vsel %vm150, %v388, %v390
    %395 = vst [vmem:[#allocation3 + $0x60] sm:$0xf0] %v391
    %396 = vst [vmem:[#allocation3 + $0x68] sm:$0xf0] %v392
    %v397 = vld [vmem:[#allocation2 + $0x8] sm:$0xff]
    %v398 = vld [vmem:[#allocation2 + $0x10] sm:$0xf]
    %v401 = vcombine.low %v397, %v397
    %v402 = vcombine.low %v398, %v398
    %403 = vrot.lane.b32.xlu0 %v401, 48
    %v404 = vpop.permute.xlu0 %403
    %405 = vrot.lane.b32.xlu0 %v397, 48
    %v406 = vpop.permute.xlu0 %405
    %407 = vrot.lane.b32.xlu0 %v402, 48
    %v408 = vpop.permute.xlu0 %407
    %vm409 = vcmask 392192
    %v410 = vsel %vm409, %v404, %v406
    %v411 = vsel %vm409, %v406, %v408
    %414 = vst [vmem:[#allocation3 + $0x70] sm:$0xf0] %v410
    %415 = vst [vmem:[#allocation3 + $0x78] sm:$0xf0] %v411
    %v416 = vld [vmem:[#allocation2] sm:$0xff]
    %v417 = vld [vmem:[#allocation2 + $0x8] sm:$0xf]
    %v420 = vcombine.high %v416, %v416
    %421 = vrot.lane.b32.xlu0 %v416, 79
    %v422 = vpop.permute.xlu0 %421
    %423 = vrot.lane.b32.xlu0 %v420, 79
    %v424 = vpop.permute.xlu0 %423
    %425 = vrot.lane.b32.xlu0 %v417, 79
    %v426 = vpop.permute.xlu0 %425
    %v427 = vsel %vm192, %v422, %v424
    %v428 = vsel %vm192, %v424, %v426
    %v431 = vsel %vm161, %v427, 0.0
    %v432 = vsel %vm162, %v428, 0.0
    %433 = vst [vmem:[#allocation3 + $0x80] sm:$0xf] %v431
    %434 = vst [vmem:[#allocation3 + $0x88] sm:$0xf] %v432
    %v435 = vld [vmem:[#allocation2 + $0x8] sm:$0xff]
    %v436 = vld [vmem:[#allocation2 + $0x10] sm:$0xf]
    %v439 = vcombine.high %v435, %v435
    %440 = vrot.lane.b32.xlu0 %v435, 47
    %v441 = vpop.permute.xlu0 %440
    %442 = vrot.lane.b32.xlu0 %v439, 47
    %v443 = vpop.permute.xlu0 %442
    %444 = vrot.lane.b32.xlu0 %v436, 47
    %v445 = vpop.permute.xlu0 %444
    %vm446 = vcmask 384000
    %v447 = vsel %vm446, %v441, %v443
    %v448 = vsel %vm446, %v443, %v445
    %v451 = vsel %vm161, %v447, 0.0
    %v452 = vsel %vm162, %v448, 0.0
    %453 = vst [vmem:[#allocation3 + $0x90] sm:$0xf] %v451
    %454 = vst [vmem:[#allocation3 + $0x98] sm:$0xf] %v452
    %v455 = vld [vmem:[%s1] sm:$0xff]
    %v456 = vld [vmem:[#allocation3] sm:$0xff]
    %v457 = vld [vmem:[#allocation3 + $0x8] sm:$0xff]
    %v458 = vld [vmem:[#allocation3 + $0x10] sm:$0xff]
    %v459 = vld [vmem:[#allocation3 + $0x18] sm:$0xff]
    %v460 = vld [vmem:[#allocation3 + $0x20] sm:$0xff]
    %v461 = vld [vmem:[#allocation3 + $0x28] sm:$0xff]
    %v462 = vld [vmem:[#allocation3 + $0x30] sm:$0xff]
    %v463 = vld [vmem:[#allocation3 + $0x38] sm:$0xff]
    %v464 = vld [vmem:[#allocation3 + $0x40] sm:$0xff]
    %v465 = vld [vmem:[#allocation3 + $0x48] sm:$0xff]
    %v466 = vld [vmem:[#allocation3 + $0x50] sm:$0xff]
    %v467 = vld [vmem:[#allocation3 + $0x58] sm:$0xff]
    %v468 = vld [vmem:[#allocation3 + $0x60] sm:$0xff]
    %v469 = vld [vmem:[#allocation3 + $0x68] sm:$0xff]
    %v470 = vld [vmem:[#allocation3 + $0x70] sm:$0xff]
    %v471 = vld [vmem:[#allocation3 + $0x78] sm:$0xff]
    %v472 = vld [vmem:[#allocation3 + $0x80] sm:$0xf]
    %v473 = vld [vmem:[#allocation3 + $0x88] sm:$0xf]
    %v474 = vld [vmem:[#allocation3 + $0x90] sm:$0xf]
    %v475 = vld [vmem:[#allocation3 + $0x98] sm:$0xf]
    %v476 = vld [vmem:[%s2] sm:$0xff]
    %478 = vset.pattern.permute.xlu0 0
    %479 = vperm.xlu0 %478, %v476
    %v480 = vpop.permute.xlu0 %479
    %vm482 = vcmask 293888
    %v484 = vsel %vm482, %v455, 0
    %vm486 = vcmask 1043456
    %v488 = vsel %vm486, %v472, 0
    %v491 = vsel %vm486, %v473, 0
    %v494 = vsel %vm486, %v474, 0
    %v497 = vsel %vm486, %v475, 0
    %499 = vmatprep.subr.mxu0 0.0
    %500 = vmatpush1.msra.mxu0 0.0
    %501 = vmatprep.subr.mxu0 0.0
    %502 = vmatpush1.msra.mxu0 0.0
    %503 = vmatprep.subr.mxu0 0.0
    %504 = vmatpush1.msra.mxu0 0.0
    %505 = vmatprep.subr.mxu0 0.0
    %506 = vmatpush1.msra.mxu0 0.0
    %507 = vmatprep.subr.mxu0 0.0
    %508 = vmatpush1.msra.mxu0 0.0
    %509 = vmatprep.subr.mxu0 0.0
    %510 = vmatpush1.msra.mxu0 0.0
    %511 = vmatprep.subr.mxu0 0.0
    %512 = vmatpush1.msra.mxu0 0.0
    %513 = vmatprep.subr.mxu0 0.0
    %514 = vmatpush1.msra.mxu0 0.0
    %515 = vmatprep.subr.mxu0 0.0
    %516 = vmatpush1.msra.mxu0 0.0
    %517 = vmatprep.subr.mxu0 0.0
    %518 = vmatpush1.msra.mxu0 0.0
    %519 = vmatprep.subr.mxu0 0.0
    %520 = vmatpush1.msra.mxu0 0.0
    %v521 = vand.u32 %v491, 4294901760
    %522 = vmatprep.subr.mxu0 %v521
    %v523 = vand.u32 %v488, 4294901760
    %524 = vmatpush1.msra.mxu0 %v523
    %v525 = vand.u32 %v469, 4294901760
    %526 = vmatprep.subr.mxu0 %v525
    %v527 = vand.u32 %v468, 4294901760
    %528 = vmatpush1.msra.mxu0 %v527
    %v529 = vand.u32 %v465, 4294901760
    %530 = vmatprep.subr.mxu0 %v529
    %v531 = vand.u32 %v464, 4294901760
    %532 = vmatpush1.msra.mxu0 %v531
    %v533 = vand.u32 %v461, 4294901760
    %534 = vmatprep.subr.mxu0 %v533
    %v535 = vand.u32 %v460, 4294901760
    %536 = vmatpush1.msra.mxu0 %v535
    %v537 = vand.u32 %v457, 4294901760
    %538 = vmatprep.subr.mxu0 %v537
    %v539 = vand.u32 %v456, 4294901760
    %540 = vmatpush1.msra.mxu0 %v539
    %541 = vmatprep.subr.mxu0 0.0
    %542 = vmatpush2.msra.mxu0 0.0
    %543 = vmatprep.subr.mxu0 0.0
    %544 = vmatpush2.msra.mxu0 0.0
    %545 = vmatprep.subr.mxu0 0.0
    %546 = vmatpush2.msra.mxu0 0.0
    %547 = vmatprep.subr.mxu0 0.0
    %548 = vmatpush2.msra.mxu0 0.0
    %549 = vmatprep.subr.mxu0 0.0
    %550 = vmatpush2.msra.mxu0 0.0
    %551 = vmatprep.subr.mxu0 0.0
    %552 = vmatpush2.msra.mxu0 0.0
    %553 = vmatprep.subr.mxu0 0.0
    %554 = vmatpush2.msra.mxu0 0.0
    %555 = vmatprep.subr.mxu0 0.0
    %556 = vmatpush2.msra.mxu0 0.0
    %557 = vmatprep.subr.mxu0 0.0
    %558 = vmatpush2.msra.mxu0 0.0
    %559 = vmatprep.subr.mxu0 0.0
    %560 = vmatpush2.msra.mxu0 0.0
    %561 = vmatprep.subr.mxu0 0.0
    %562 = vmatpush2.msra.mxu0 0.0
    %563 = vmatprep.subr.mxu0 0.0
    %564 = vmatpush2.msra.mxu0 0.0
    %565 = vmatprep.subr.mxu0 0.0
    %566 = vmatpush2.msra.mxu0 0.0
    %567 = vmatprep.subr.mxu0 0.0
    %568 = vmatpush2.msra.mxu0 0.0
    %569 = vmatprep.subr.mxu0 0.0
    %570 = vmatpush2.msra.mxu0 0.0
    %571 = vmatprep.subr.mxu0 0.0
    %572 = vmatpush2.msra.mxu0 0.0
    %573 = vmatprep.mubr.f32.mxu0 0.0
    %v574 = vand.u32 %v484, 4294901760
    %v575 = vsub.f32 %v484, %v574
    %v576 = vand.u32 %v575, 4294901760
    %v577 = vsub.f32 %v575, %v576
    %v578 = vand.u32 %v577, 4294901760
    %579 = vmatmul.mubr.f32.gmra.mxu0 %v578
    %v580 = vpop.f32.mrf.mxu0
    %v581 = vadd.f32 %v480, %v580
    %v582 = vpop.f32.mrf.mxu0
    %v583 = vadd.f32 %v480, %v582
    %584 = vdwg.mxu0
    %585 = vmatprep.subr.mxu0 0.0
    %586 = vmatpush1.msra.mxu0 0.0
    %587 = vmatprep.subr.mxu0 0.0
    %588 = vmatpush1.msra.mxu0 0.0
    %589 = vmatprep.subr.mxu0 0.0
    %590 = vmatpush1.msra.mxu0 0.0
    %591 = vmatprep.subr.mxu0 0.0
    %592 = vmatpush1.msra.mxu0 0.0
    %593 = vmatprep.subr.mxu0 0.0
    %594 = vmatpush1.msra.mxu0 0.0
    %595 = vmatprep.subr.mxu0 0.0
    %596 = vmatpush1.msra.mxu0 0.0
    %597 = vmatprep.subr.mxu0 0.0
    %598 = vmatpush1.msra.mxu0 0.0
    %599 = vmatprep.subr.mxu0 0.0
    %600 = vmatpush1.msra.mxu0 0.0
    %601 = vmatprep.subr.mxu0 0.0
    %602 = vmatpush1.msra.mxu0 0.0
    %603 = vmatprep.subr.mxu0 0.0
    %604 = vmatpush1.msra.mxu0 0.0
    %605 = vmatprep.subr.mxu0 0.0
    %606 = vmatpush1.msra.mxu0 0.0
    %v607 = vand.u32 %v491, 4294901760
    %v608 = vsub.f32 %v491, %v607
    %v609 = vand.u32 %v608, 4294901760
    %v610 = vsub.f32 %v608, %v609
    %v611 = vand.u32 %v610, 4294901760
    %612 = vmatprep.subr.mxu0 %v611
    %v613 = vand.u32 %v488, 4294901760
    %v614 = vsub.f32 %v488, %v613
    %v615 = vand.u32 %v614, 4294901760
    %v616 = vsub.f32 %v614, %v615
    %v617 = vand.u32 %v616, 4294901760
    %618 = vmatpush1.msra.mxu0 %v617
    %v619 = vand.u32 %v469, 4294901760
    %v620 = vsub.f32 %v469, %v619
    %v621 = vand.u32 %v620, 4294901760
    %v622 = vsub.f32 %v620, %v621
    %v623 = vand.u32 %v622, 4294901760
    %624 = vmatprep.subr.mxu0 %v623
    %v625 = vand.u32 %v468, 4294901760
    %v626 = vsub.f32 %v468, %v625
    %v627 = vand.u32 %v626, 4294901760
    %v628 = vsub.f32 %v626, %v627
    %v629 = vand.u32 %v628, 4294901760
    %630 = vmatpush1.msra.mxu0 %v629
    %v631 = vand.u32 %v465, 4294901760
    %v632 = vsub.f32 %v465, %v631
    %v633 = vand.u32 %v632, 4294901760
    %v634 = vsub.f32 %v632, %v633
    %v635 = vand.u32 %v634, 4294901760
    %636 = vmatprep.subr.mxu0 %v635
    %v637 = vand.u32 %v464, 4294901760
    %v638 = vsub.f32 %v464, %v637
    %v639 = vand.u32 %v638, 4294901760
    %v640 = vsub.f32 %v638, %v639
    %v641 = vand.u32 %v640, 4294901760
    %642 = vmatpush1.msra.mxu0 %v641
    %v643 = vand.u32 %v461, 4294901760
    %v644 = vsub.f32 %v461, %v643
    %v645 = vand.u32 %v644, 4294901760
    %v646 = vsub.f32 %v644, %v645
    %v647 = vand.u32 %v646, 4294901760
    %648 = vmatprep.subr.mxu0 %v647
    %v649 = vand.u32 %v460, 4294901760
    %v650 = vsub.f32 %v460, %v649
    %v651 = vand.u32 %v650, 4294901760
    %v652 = vsub.f32 %v650, %v651
    %v653 = vand.u32 %v652, 4294901760
    %654 = vmatpush1.msra.mxu0 %v653
    %v655 = vand.u32 %v457, 4294901760
    %v656 = vsub.f32 %v457, %v655
    %v657 = vand.u32 %v656, 4294901760
    %v658 = vsub.f32 %v656, %v657
    %v659 = vand.u32 %v658, 4294901760
    %660 = vmatprep.subr.mxu0 %v659
    %v661 = vand.u32 %v456, 4294901760
    %v662 = vsub.f32 %v456, %v661
    %v663 = vand.u32 %v662, 4294901760
    %v664 = vsub.f32 %v662, %v663
    %v665 = vand.u32 %v664, 4294901760
    %666 = vmatpush1.msra.mxu0 %v665
    %667 = vmatprep.subr.mxu0 0.0
    %668 = vmatpush2.msra.mxu0 0.0
    %669 = vmatprep.subr.mxu0 0.0
    %670 = vmatpush2.msra.mxu0 0.0
    %671 = vmatprep.subr.mxu0 0.0
    %672 = vmatpush2.msra.mxu0 0.0
    %673 = vmatprep.subr.mxu0 0.0
    %674 = vmatpush2.msra.mxu0 0.0
    %675 = vmatprep.subr.mxu0 0.0
    %676 = vmatpush2.msra.mxu0 0.0
    %677 = vmatprep.subr.mxu0 0.0
    %678 = vmatpush2.msra.mxu0 0.0
    %679 = vmatprep.subr.mxu0 0.0
    %680 = vmatpush2.msra.mxu0 0.0
    %681 = vmatprep.subr.mxu0 0.0
    %682 = vmatpush2.msra.mxu0 0.0
    %683 = vmatprep.subr.mxu0 0.0
    %684 = vmatpush2.msra.mxu0 0.0
    %685 = vmatprep.subr.mxu0 0.0
    %686 = vmatpush2.msra.mxu0 0.0
    %687 = vmatprep.subr.mxu0 0.0
    %688 = vmatpush2.msra.mxu0 0.0
    %689 = vmatprep.subr.mxu0 0.0
    %690 = vmatpush2.msra.mxu0 0.0
    %691 = vmatprep.subr.mxu0 0.0
    %692 = vmatpush2.msra.mxu0 0.0
    %693 = vmatprep.subr.mxu0 0.0
    %694 = vmatpush2.msra.mxu0 0.0
    %695 = vmatprep.subr.mxu0 0.0
    %696 = vmatpush2.msra.mxu0 0.0
    %697 = vmatprep.subr.mxu0 0.0
    %698 = vmatpush2.msra.mxu0 0.0
    %699 = vmatprep.mubr.f32.mxu0 0.0
    %v700 = vand.u32 %v484, 4294901760
    %701 = vmatmul.mubr.f32.gmra.mxu0 %v700
    %v702 = vpop.f32.mrf.mxu0
    %v703 = vadd.f32 %v581, %v702
    %v704 = vpop.f32.mrf.mxu0
    %v705 = vadd.f32 %v583, %v704
    %706 = vdwg.mxu0
    %707 = vmatprep.subr.mxu0 0.0
    %708 = vmatpush1.msra.mxu0 0.0
    %709 = vmatprep.subr.mxu0 0.0
    %710 = vmatpush1.msra.mxu0 0.0
    %711 = vmatprep.subr.mxu0 0.0
    %712 = vmatpush1.msra.mxu0 0.0
    %713 = vmatprep.subr.mxu0 0.0
    %714 = vmatpush1.msra.mxu0 0.0
    %715 = vmatprep.subr.mxu0 0.0
    %716 = vmatpush1.msra.mxu0 0.0
    %717 = vmatprep.subr.mxu0 0.0
    %718 = vmatpush1.msra.mxu0 0.0
    %719 = vmatprep.subr.mxu0 0.0
    %720 = vmatpush1.msra.mxu0 0.0
    %721 = vmatprep.subr.mxu0 0.0
    %722 = vmatpush1.msra.mxu0 0.0
    %723 = vmatprep.subr.mxu0 0.0
    %724 = vmatpush1.msra.mxu0 0.0
    %725 = vmatprep.subr.mxu0 0.0
    %726 = vmatpush1.msra.mxu0 0.0
    %727 = vmatprep.subr.mxu0 0.0
    %728 = vmatpush1.msra.mxu0 0.0
    %v729 = vand.u32 %v491, 4294901760
    %v730 = vsub.f32 %v491, %v729
    %731 = vmatprep.subr.mxu0 %v730
    %v732 = vand.u32 %v488, 4294901760
    %v733 = vsub.f32 %v488, %v732
    %734 = vmatpush1.msra.mxu0 %v733
    %v735 = vand.u32 %v469, 4294901760
    %v736 = vsub.f32 %v469, %v735
    %737 = vmatprep.subr.mxu0 %v736
    %v738 = vand.u32 %v468, 4294901760
    %v739 = vsub.f32 %v468, %v738
    %740 = vmatpush1.msra.mxu0 %v739
    %v741 = vand.u32 %v465, 4294901760
    %v742 = vsub.f32 %v465, %v741
    %743 = vmatprep.subr.mxu0 %v742
    %v744 = vand.u32 %v464, 4294901760
    %v745 = vsub.f32 %v464, %v744
    %746 = vmatpush1.msra.mxu0 %v745
    %v747 = vand.u32 %v461, 4294901760
    %v748 = vsub.f32 %v461, %v747
    %749 = vmatprep.subr.mxu0 %v748
    %v750 = vand.u32 %v460, 4294901760
    %v751 = vsub.f32 %v460, %v750
    %752 = vmatpush1.msra.mxu0 %v751
    %v753 = vand.u32 %v457, 4294901760
    %v754 = vsub.f32 %v457, %v753
    %755 = vmatprep.subr.mxu0 %v754
    %v756 = vand.u32 %v456, 4294901760
    %v757 = vsub.f32 %v456, %v756
    %758 = vmatpush1.msra.mxu0 %v757
    %759 = vmatprep.subr.mxu0 0.0
    %760 = vmatpush2.msra.mxu0 0.0
    %761 = vmatprep.subr.mxu0 0.0
    %762 = vmatpush2.msra.mxu0 0.0
    %763 = vmatprep.subr.mxu0 0.0
    %764 = vmatpush2.msra.mxu0 0.0
    %765 = vmatprep.subr.mxu0 0.0
    %766 = vmatpush2.msra.mxu0 0.0
    %767 = vmatprep.subr.mxu0 0.0
    %768 = vmatpush2.msra.mxu0 0.0
    %769 = vmatprep.subr.mxu0 0.0
    %770 = vmatpush2.msra.mxu0 0.0
    %771 = vmatprep.subr.mxu0 0.0
    %772 = vmatpush2.msra.mxu0 0.0
    %773 = vmatprep.subr.mxu0 0.0
    %774 = vmatpush2.msra.mxu0 0.0
    %775 = vmatprep.subr.mxu0 0.0
    %776 = vmatpush2.msra.mxu0 0.0
    %777 = vmatprep.subr.mxu0 0.0
    %778 = vmatpush2.msra.mxu0 0.0
    %779 = vmatprep.subr.mxu0 0.0
    %780 = vmatpush2.msra.mxu0 0.0
    %781 = vmatprep.subr.mxu0 0.0
    %782 = vmatpush2.msra.mxu0 0.0
    %783 = vmatprep.subr.mxu0 0.0
    %784 = vmatpush2.msra.mxu0 0.0
    %785 = vmatprep.subr.mxu0 0.0
    %786 = vmatpush2.msra.mxu0 0.0
    %787 = vmatprep.subr.mxu0 0.0
    %788 = vmatpush2.msra.mxu0 0.0
    %789 = vmatprep.subr.mxu0 0.0
    %790 = vmatpush2.msra.mxu0 0.0
    %791 = vmatprep.mubr.f32.mxu0 0.0
    %v792 = vand.u32 %v484, 4294901760
    %v793 = vsub.f32 %v484, %v792
    %794 = vmatmul.mubr.f32.gmra.mxu0 %v793
    %v795 = vpop.f32.mrf.mxu0
    %v796 = vadd.f32 %v703, %v795
    %v797 = vpop.f32.mrf.mxu0
    %v798 = vadd.f32 %v705, %v797
    %799 = vdwg.mxu0
    %800 = vmatprep.subr.mxu0 0.0
    %801 = vmatpush1.msra.mxu0 0.0
    %802 = vmatprep.subr.mxu0 0.0
    %803 = vmatpush1.msra.mxu0 0.0
    %804 = vmatprep.subr.mxu0 0.0
    %805 = vmatpush1.msra.mxu0 0.0
    %806 = vmatprep.subr.mxu0 0.0
    %807 = vmatpush1.msra.mxu0 0.0
    %808 = vmatprep.subr.mxu0 0.0
    %809 = vmatpush1.msra.mxu0 0.0
    %810 = vmatprep.subr.mxu0 0.0
    %811 = vmatpush1.msra.mxu0 0.0
    %812 = vmatprep.subr.mxu0 0.0
    %813 = vmatpush1.msra.mxu0 0.0
    %814 = vmatprep.subr.mxu0 0.0
    %815 = vmatpush1.msra.mxu0 0.0
    %816 = vmatprep.subr.mxu0 0.0
    %817 = vmatpush1.msra.mxu0 0.0
    %818 = vmatprep.subr.mxu0 0.0
    %819 = vmatpush1.msra.mxu0 0.0
    %820 = vmatprep.subr.mxu0 0.0
    %821 = vmatpush1.msra.mxu0 0.0
    %v822 = vand.u32 %v491, 4294901760
    %823 = vmatprep.subr.mxu0 %v822
    %v824 = vand.u32 %v488, 4294901760
    %825 = vmatpush1.msra.mxu0 %v824
    %v826 = vand.u32 %v469, 4294901760
    %827 = vmatprep.subr.mxu0 %v826
    %v828 = vand.u32 %v468, 4294901760
    %829 = vmatpush1.msra.mxu0 %v828
    %v830 = vand.u32 %v465, 4294901760
    %831 = vmatprep.subr.mxu0 %v830
    %v832 = vand.u32 %v464, 4294901760
    %833 = vmatpush1.msra.mxu0 %v832
    %v834 = vand.u32 %v461, 4294901760
    %835 = vmatprep.subr.mxu0 %v834
    %v836 = vand.u32 %v460, 4294901760
    %837 = vmatpush1.msra.mxu0 %v836
    %v838 = vand.u32 %v457, 4294901760
    %839 = vmatprep.subr.mxu0 %v838
    %v840 = vand.u32 %v456, 4294901760
    %841 = vmatpush1.msra.mxu0 %v840
    %842 = vmatprep.subr.mxu0 0.0
    %843 = vmatpush2.msra.mxu0 0.0
    %844 = vmatprep.subr.mxu0 0.0
    %845 = vmatpush2.msra.mxu0 0.0
    %846 = vmatprep.subr.mxu0 0.0
    %847 = vmatpush2.msra.mxu0 0.0
    %848 = vmatprep.subr.mxu0 0.0
    %849 = vmatpush2.msra.mxu0 0.0
    %850 = vmatprep.subr.mxu0 0.0
    %851 = vmatpush2.msra.mxu0 0.0
    %852 = vmatprep.subr.mxu0 0.0
    %853 = vmatpush2.msra.mxu0 0.0
    %854 = vmatprep.subr.mxu0 0.0
    %855 = vmatpush2.msra.mxu0 0.0
    %856 = vmatprep.subr.mxu0 0.0
    %857 = vmatpush2.msra.mxu0 0.0
    %858 = vmatprep.subr.mxu0 0.0
    %859 = vmatpush2.msra.mxu0 0.0
    %860 = vmatprep.subr.mxu0 0.0
    %861 = vmatpush2.msra.mxu0 0.0
    %862 = vmatprep.subr.mxu0 0.0
    %863 = vmatpush2.msra.mxu0 0.0
    %864 = vmatprep.subr.mxu0 0.0
    %865 = vmatpush2.msra.mxu0 0.0
    %866 = vmatprep.subr.mxu0 0.0
    %867 = vmatpush2.msra.mxu0 0.0
    %868 = vmatprep.subr.mxu0 0.0
    %869 = vmatpush2.msra.mxu0 0.0
    %870 = vmatprep.subr.mxu0 0.0
    %871 = vmatpush2.msra.mxu0 0.0
    %872 = vmatprep.subr.mxu0 0.0
    %873 = vmatpush2.msra.mxu0 0.0
    %874 = vmatprep.mubr.f32.mxu0 0.0
    %v875 = vand.u32 %v484, 4294901760
    %v876 = vsub.f32 %v484, %v875
    %v877 = vand.u32 %v876, 4294901760
    %878 = vmatmul.mubr.f32.gmra.mxu0 %v877
    %v879 = vpop.f32.mrf.mxu0
    %v880 = vadd.f32 %v796, %v879
    %v881 = vpop.f32.mrf.mxu0
    %v882 = vadd.f32 %v798, %v881
    %883 = vdwg.mxu0
    %884 = vmatprep.subr.mxu0 0.0
    %885 = vmatpush1.msra.mxu0 0.0
    %886 = vmatprep.subr.mxu0 0.0
    %887 = vmatpush1.msra.mxu0 0.0
    %888 = vmatprep.subr.mxu0 0.0
    %889 = vmatpush1.msra.mxu0 0.0
    %890 = vmatprep.subr.mxu0 0.0
    %891 = vmatpush1.msra.mxu0 0.0
    %892 = vmatprep.subr.mxu0 0.0
    %893 = vmatpush1.msra.mxu0 0.0
    %894 = vmatprep.subr.mxu0 0.0
    %895 = vmatpush1.msra.mxu0 0.0
    %896 = vmatprep.subr.mxu0 0.0
    %897 = vmatpush1.msra.mxu0 0.0
    %898 = vmatprep.subr.mxu0 0.0
    %899 = vmatpush1.msra.mxu0 0.0
    %900 = vmatprep.subr.mxu0 0.0
    %901 = vmatpush1.msra.mxu0 0.0
    %902 = vmatprep.subr.mxu0 0.0
    %903 = vmatpush1.msra.mxu0 0.0
    %904 = vmatprep.subr.mxu0 0.0
    %905 = vmatpush1.msra.mxu0 0.0
    %v906 = vand.u32 %v491, 4294901760
    %v907 = vsub.f32 %v491, %v906
    %v908 = vand.u32 %v907, 4294901760
    %909 = vmatprep.subr.mxu0 %v908
    %v910 = vand.u32 %v488, 4294901760
    %v911 = vsub.f32 %v488, %v910
    %v912 = vand.u32 %v911, 4294901760
    %913 = vmatpush1.msra.mxu0 %v912
    %v914 = vand.u32 %v469, 4294901760
    %v915 = vsub.f32 %v469, %v914
    %v916 = vand.u32 %v915, 4294901760
    %917 = vmatprep.subr.mxu0 %v916
    %v918 = vand.u32 %v468, 4294901760
    %v919 = vsub.f32 %v468, %v918
    %v920 = vand.u32 %v919, 4294901760
    %921 = vmatpush1.msra.mxu0 %v920
    %v922 = vand.u32 %v465, 4294901760
    %v923 = vsub.f32 %v465, %v922
    %v924 = vand.u32 %v923, 4294901760
    %925 = vmatprep.subr.mxu0 %v924
    %v926 = vand.u32 %v464, 4294901760
    %v927 = vsub.f32 %v464, %v926
    %v928 = vand.u32 %v927, 4294901760
    %929 = vmatpush1.msra.mxu0 %v928
    %v930 = vand.u32 %v461, 4294901760
    %v931 = vsub.f32 %v461, %v930
    %v932 = vand.u32 %v931, 4294901760
    %933 = vmatprep.subr.mxu0 %v932
    %v934 = vand.u32 %v460, 4294901760
    %v935 = vsub.f32 %v460, %v934
    %v936 = vand.u32 %v935, 4294901760
    %937 = vmatpush1.msra.mxu0 %v936
    %v938 = vand.u32 %v457, 4294901760
    %v939 = vsub.f32 %v457, %v938
    %v940 = vand.u32 %v939, 4294901760
    %941 = vmatprep.subr.mxu0 %v940
    %v942 = vand.u32 %v456, 4294901760
    %v943 = vsub.f32 %v456, %v942
    %v944 = vand.u32 %v943, 4294901760
    %945 = vmatpush1.msra.mxu0 %v944
    %946 = vmatprep.subr.mxu0 0.0
    %947 = vmatpush2.msra.mxu0 0.0
    %948 = vmatprep.subr.mxu0 0.0
    %949 = vmatpush2.msra.mxu0 0.0
    %950 = vmatprep.subr.mxu0 0.0
    %951 = vmatpush2.msra.mxu0 0.0
    %952 = vmatprep.subr.mxu0 0.0
    %953 = vmatpush2.msra.mxu0 0.0
    %954 = vmatprep.subr.mxu0 0.0
    %955 = vmatpush2.msra.mxu0 0.0
    %956 = vmatprep.subr.mxu0 0.0
    %957 = vmatpush2.msra.mxu0 0.0
    %958 = vmatprep.subr.mxu0 0.0
    %959 = vmatpush2.msra.mxu0 0.0
    %960 = vmatprep.subr.mxu0 0.0
    %961 = vmatpush2.msra.mxu0 0.0
    %962 = vmatprep.subr.mxu0 0.0
    %963 = vmatpush2.msra.mxu0 0.0
    %964 = vmatprep.subr.mxu0 0.0
    %965 = vmatpush2.msra.mxu0 0.0
    %966 = vmatprep.subr.mxu0 0.0
    %967 = vmatpush2.msra.mxu0 0.0
    %968 = vmatprep.subr.mxu0 0.0
    %969 = vmatpush2.msra.mxu0 0.0
    %970 = vmatprep.subr.mxu0 0.0
    %971 = vmatpush2.msra.mxu0 0.0
    %972 = vmatprep.subr.mxu0 0.0
    %973 = vmatpush2.msra.mxu0 0.0
    %974 = vmatprep.subr.mxu0 0.0
    %975 = vmatpush2.msra.mxu0 0.0
    %976 = vmatprep.subr.mxu0 0.0
    %977 = vmatpush2.msra.mxu0 0.0
    %978 = vmatprep.mubr.f32.mxu0 0.0
    %v979 = vand.u32 %v484, 4294901760
    %980 = vmatmul.mubr.f32.gmra.mxu0 %v979
    %v981 = vpop.f32.mrf.mxu0
    %v982 = vadd.f32 %v880, %v981
    %v983 = vpop.f32.mrf.mxu0
    %v984 = vadd.f32 %v882, %v983
    %985 = vdwg.mxu0
    %986 = vmatprep.subr.mxu0 0.0
    %987 = vmatpush1.msra.mxu0 0.0
    %988 = vmatprep.subr.mxu0 0.0
    %989 = vmatpush1.msra.mxu0 0.0
    %990 = vmatprep.subr.mxu0 0.0
    %991 = vmatpush1.msra.mxu0 0.0
    %992 = vmatprep.subr.mxu0 0.0
    %993 = vmatpush1.msra.mxu0 0.0
    %994 = vmatprep.subr.mxu0 0.0
    %995 = vmatpush1.msra.mxu0 0.0
    %996 = vmatprep.subr.mxu0 0.0
    %997 = vmatpush1.msra.mxu0 0.0
    %998 = vmatprep.subr.mxu0 0.0
    %999 = vmatpush1.msra.mxu0 0.0
    %1000 = vmatprep.subr.mxu0 0.0
    %1001 = vmatpush1.msra.mxu0 0.0
    %1002 = vmatprep.subr.mxu0 0.0
    %1003 = vmatpush1.msra.mxu0 0.0
    %1004 = vmatprep.subr.mxu0 0.0
    %1005 = vmatpush1.msra.mxu0 0.0
    %1006 = vmatprep.subr.mxu0 0.0
    %1007 = vmatpush1.msra.mxu0 0.0
    %v1008 = vand.u32 %v491, 4294901760
    %1009 = vmatprep.subr.mxu0 %v1008
    %v1010 = vand.u32 %v488, 4294901760
    %1011 = vmatpush1.msra.mxu0 %v1010
    %v1012 = vand.u32 %v469, 4294901760
    %1013 = vmatprep.subr.mxu0 %v1012
    %v1014 = vand.u32 %v468, 4294901760
    %1015 = vmatpush1.msra.mxu0 %v1014
    %v1016 = vand.u32 %v465, 4294901760
    %1017 = vmatprep.subr.mxu0 %v1016
    %v1018 = vand.u32 %v464, 4294901760
    %1019 = vmatpush1.msra.mxu0 %v1018
    %v1020 = vand.u32 %v461, 4294901760
    %1021 = vmatprep.subr.mxu0 %v1020
    %v1022 = vand.u32 %v460, 4294901760
    %1023 = vmatpush1.msra.mxu0 %v1022
    %v1024 = vand.u32 %v457, 4294901760
    %1025 = vmatprep.subr.mxu0 %v1024
    %v1026 = vand.u32 %v456, 4294901760
    %1027 = vmatpush1.msra.mxu0 %v1026
    %1028 = vmatprep.subr.mxu0 0.0
    %1029 = vmatpush2.msra.mxu0 0.0
    %1030 = vmatprep.subr.mxu0 0.0
    %1031 = vmatpush2.msra.mxu0 0.0
    %1032 = vmatprep.subr.mxu0 0.0
    %1033 = vmatpush2.msra.mxu0 0.0
    %1034 = vmatprep.subr.mxu0 0.0
    %1035 = vmatpush2.msra.mxu0 0.0
    %1036 = vmatprep.subr.mxu0 0.0
    %1037 = vmatpush2.msra.mxu0 0.0
    %1038 = vmatprep.subr.mxu0 0.0
    %1039 = vmatpush2.msra.mxu0 0.0
    %1040 = vmatprep.subr.mxu0 0.0
    %1041 = vmatpush2.msra.mxu0 0.0
    %1042 = vmatprep.subr.mxu0 0.0
    %1043 = vmatpush2.msra.mxu0 0.0
    %1044 = vmatprep.subr.mxu0 0.0
    %1045 = vmatpush2.msra.mxu0 0.0
    %1046 = vmatprep.subr.mxu0 0.0
    %1047 = vmatpush2.msra.mxu0 0.0
    %1048 = vmatprep.subr.mxu0 0.0
    %1049 = vmatpush2.msra.mxu0 0.0
    %1050 = vmatprep.subr.mxu0 0.0
    %1051 = vmatpush2.msra.mxu0 0.0
    %1052 = vmatprep.subr.mxu0 0.0
    %1053 = vmatpush2.msra.mxu0 0.0
    %1054 = vmatprep.subr.mxu0 0.0
    %1055 = vmatpush2.msra.mxu0 0.0
    %1056 = vmatprep.subr.mxu0 0.0
    %1057 = vmatpush2.msra.mxu0 0.0
    %1058 = vmatprep.subr.mxu0 0.0
    %1059 = vmatpush2.msra.mxu0 0.0
    %1060 = vmatprep.mubr.f32.mxu0 0.0
    %v1061 = vand.u32 %v484, 4294901760
    %1062 = vmatmul.mubr.f32.gmra.mxu0 %v1061
    %v1063 = vpop.f32.mrf.mxu0
    %v1064 = vadd.f32 %v982, %v1063
    %v1065 = vpop.f32.mrf.mxu0
    %v1066 = vadd.f32 %v984, %v1065
    %1067 = vdwg.mxu0
    %1068 = vmatprep.subr.mxu0 0.0
    %1069 = vmatpush1.msra.mxu0 0.0
    %1070 = vmatprep.subr.mxu0 0.0
    %1071 = vmatpush1.msra.mxu0 0.0
    %1072 = vmatprep.subr.mxu0 0.0
    %1073 = vmatpush1.msra.mxu0 0.0
    %1074 = vmatprep.subr.mxu0 0.0
    %1075 = vmatpush1.msra.mxu0 0.0
    %1076 = vmatprep.subr.mxu0 0.0
    %1077 = vmatpush1.msra.mxu0 0.0
    %1078 = vmatprep.subr.mxu0 0.0
    %1079 = vmatpush1.msra.mxu0 0.0
    %1080 = vmatprep.subr.mxu0 0.0
    %1081 = vmatpush1.msra.mxu0 0.0
    %1082 = vmatprep.subr.mxu0 0.0
    %1083 = vmatpush1.msra.mxu0 0.0
    %1084 = vmatprep.subr.mxu0 0.0
    %1085 = vmatpush1.msra.mxu0 0.0
    %1086 = vmatprep.subr.mxu0 0.0
    %1087 = vmatpush1.msra.mxu0 0.0
    %1088 = vmatprep.subr.mxu0 0.0
    %1089 = vmatpush1.msra.mxu0 0.0
    %v1090 = vand.u32 %v497, 4294901760
    %1091 = vmatprep.subr.mxu0 %v1090
    %v1092 = vand.u32 %v494, 4294901760
    %1093 = vmatpush1.msra.mxu0 %v1092
    %v1094 = vand.u32 %v471, 4294901760
    %1095 = vmatprep.subr.mxu0 %v1094
    %v1096 = vand.u32 %v470, 4294901760
    %1097 = vmatpush1.msra.mxu0 %v1096
    %v1098 = vand.u32 %v467, 4294901760
    %1099 = vmatprep.subr.mxu0 %v1098
    %v1100 = vand.u32 %v466, 4294901760
    %1101 = vmatpush1.msra.mxu0 %v1100
    %v1102 = vand.u32 %v463, 4294901760
    %1103 = vmatprep.subr.mxu0 %v1102
    %v1104 = vand.u32 %v462, 4294901760
    %1105 = vmatpush1.msra.mxu0 %v1104
    %v1106 = vand.u32 %v459, 4294901760
    %1107 = vmatprep.subr.mxu0 %v1106
    %v1108 = vand.u32 %v458, 4294901760
    %1109 = vmatpush1.msra.mxu0 %v1108
    %1110 = vmatprep.subr.mxu0 0.0
    %1111 = vmatpush2.msra.mxu0 0.0
    %1112 = vmatprep.subr.mxu0 0.0
    %1113 = vmatpush2.msra.mxu0 0.0
    %1114 = vmatprep.subr.mxu0 0.0
    %1115 = vmatpush2.msra.mxu0 0.0
    %1116 = vmatprep.subr.mxu0 0.0
    %1117 = vmatpush2.msra.mxu0 0.0
    %1118 = vmatprep.subr.mxu0 0.0
    %1119 = vmatpush2.msra.mxu0 0.0
    %1120 = vmatprep.subr.mxu0 0.0
    %1121 = vmatpush2.msra.mxu0 0.0
    %1122 = vmatprep.subr.mxu0 0.0
    %1123 = vmatpush2.msra.mxu0 0.0
    %1124 = vmatprep.subr.mxu0 0.0
    %1125 = vmatpush2.msra.mxu0 0.0
    %1126 = vmatprep.subr.mxu0 0.0
    %1127 = vmatpush2.msra.mxu0 0.0
    %1128 = vmatprep.subr.mxu0 0.0
    %1129 = vmatpush2.msra.mxu0 0.0
    %1130 = vmatprep.subr.mxu0 0.0
    %1131 = vmatpush2.msra.mxu0 0.0
    %1132 = vmatprep.subr.mxu0 0.0
    %1133 = vmatpush2.msra.mxu0 0.0
    %1134 = vmatprep.subr.mxu0 0.0
    %1135 = vmatpush2.msra.mxu0 0.0
    %1136 = vmatprep.subr.mxu0 0.0
    %1137 = vmatpush2.msra.mxu0 0.0
    %1138 = vmatprep.subr.mxu0 0.0
    %1139 = vmatpush2.msra.mxu0 0.0
    %1140 = vmatprep.subr.mxu0 0.0
    %1141 = vmatpush2.msra.mxu0 0.0
    %1142 = vmatprep.mubr.f32.mxu0 0.0
    %v1143 = vand.u32 %v484, 4294901760
    %v1144 = vsub.f32 %v484, %v1143
    %v1145 = vand.u32 %v1144, 4294901760
    %v1146 = vsub.f32 %v1144, %v1145
    %v1147 = vand.u32 %v1146, 4294901760
    %1148 = vmatmul.mubr.f32.gmra.mxu0 %v1147
    %v1149 = vpop.f32.mrf.mxu0
    %v1150 = vadd.f32 %v480, %v1149
    %v1151 = vpop.f32.mrf.mxu0
    %v1152 = vadd.f32 %v480, %v1151
    %1153 = vdwg.mxu0
    %1154 = vmatprep.subr.mxu0 0.0
    %1155 = vmatpush1.msra.mxu0 0.0
    %1156 = vmatprep.subr.mxu0 0.0
    %1157 = vmatpush1.msra.mxu0 0.0
    %1158 = vmatprep.subr.mxu0 0.0
    %1159 = vmatpush1.msra.mxu0 0.0
    %1160 = vmatprep.subr.mxu0 0.0
    %1161 = vmatpush1.msra.mxu0 0.0
    %1162 = vmatprep.subr.mxu0 0.0
    %1163 = vmatpush1.msra.mxu0 0.0
    %1164 = vmatprep.subr.mxu0 0.0
    %1165 = vmatpush1.msra.mxu0 0.0
    %1166 = vmatprep.subr.mxu0 0.0
    %1167 = vmatpush1.msra.mxu0 0.0
    %1168 = vmatprep.subr.mxu0 0.0
    %1169 = vmatpush1.msra.mxu0 0.0
    %1170 = vmatprep.subr.mxu0 0.0
    %1171 = vmatpush1.msra.mxu0 0.0
    %1172 = vmatprep.subr.mxu0 0.0
    %1173 = vmatpush1.msra.mxu0 0.0
    %1174 = vmatprep.subr.mxu0 0.0
    %1175 = vmatpush1.msra.mxu0 0.0
    %v1176 = vand.u32 %v497, 4294901760
    %v1177 = vsub.f32 %v497, %v1176
    %v1178 = vand.u32 %v1177, 4294901760
    %v1179 = vsub.f32 %v1177, %v1178
    %v1180 = vand.u32 %v1179, 4294901760
    %1181 = vmatprep.subr.mxu0 %v1180
    %v1182 = vand.u32 %v494, 4294901760
    %v1183 = vsub.f32 %v494, %v1182
    %v1184 = vand.u32 %v1183, 4294901760
    %v1185 = vsub.f32 %v1183, %v1184
    %v1186 = vand.u32 %v1185, 4294901760
    %1187 = vmatpush1.msra.mxu0 %v1186
    %v1188 = vand.u32 %v471, 4294901760
    %v1189 = vsub.f32 %v471, %v1188
    %v1190 = vand.u32 %v1189, 4294901760
    %v1191 = vsub.f32 %v1189, %v1190
    %v1192 = vand.u32 %v1191, 4294901760
    %1193 = vmatprep.subr.mxu0 %v1192
    %v1194 = vand.u32 %v470, 4294901760
    %v1195 = vsub.f32 %v470, %v1194
    %v1196 = vand.u32 %v1195, 4294901760
    %v1197 = vsub.f32 %v1195, %v1196
    %v1198 = vand.u32 %v1197, 4294901760
    %1199 = vmatpush1.msra.mxu0 %v1198
    %v1200 = vand.u32 %v467, 4294901760
    %v1201 = vsub.f32 %v467, %v1200
    %v1202 = vand.u32 %v1201, 4294901760
    %v1203 = vsub.f32 %v1201, %v1202
    %v1204 = vand.u32 %v1203, 4294901760
    %1205 = vmatprep.subr.mxu0 %v1204
    %v1206 = vand.u32 %v466, 4294901760
    %v1207 = vsub.f32 %v466, %v1206
    %v1208 = vand.u32 %v1207, 4294901760
    %v1209 = vsub.f32 %v1207, %v1208
    %v1210 = vand.u32 %v1209, 4294901760
    %1211 = vmatpush1.msra.mxu0 %v1210
    %v1212 = vand.u32 %v463, 4294901760
    %v1213 = vsub.f32 %v463, %v1212
    %v1214 = vand.u32 %v1213, 4294901760
    %v1215 = vsub.f32 %v1213, %v1214
    %v1216 = vand.u32 %v1215, 4294901760
    %1217 = vmatprep.subr.mxu0 %v1216
    %v1218 = vand.u32 %v462, 4294901760
    %v1219 = vsub.f32 %v462, %v1218
    %v1220 = vand.u32 %v1219, 4294901760
    %v1221 = vsub.f32 %v1219, %v1220
    %v1222 = vand.u32 %v1221, 4294901760
    %1223 = vmatpush1.msra.mxu0 %v1222
    %v1224 = vand.u32 %v459, 4294901760
    %v1225 = vsub.f32 %v459, %v1224
    %v1226 = vand.u32 %v1225, 4294901760
    %v1227 = vsub.f32 %v1225, %v1226
    %v1228 = vand.u32 %v1227, 4294901760
    %1229 = vmatprep.subr.mxu0 %v1228
    %v1230 = vand.u32 %v458, 4294901760
    %v1231 = vsub.f32 %v458, %v1230
    %v1232 = vand.u32 %v1231, 4294901760
    %v1233 = vsub.f32 %v1231, %v1232
    %v1234 = vand.u32 %v1233, 4294901760
    %1235 = vmatpush1.msra.mxu0 %v1234
    %1236 = vmatprep.subr.mxu0 0.0
    %1237 = vmatpush2.msra.mxu0 0.0
    %1238 = vmatprep.subr.mxu0 0.0
    %1239 = vmatpush2.msra.mxu0 0.0
    %1240 = vmatprep.subr.mxu0 0.0
    %1241 = vmatpush2.msra.mxu0 0.0
    %1242 = vmatprep.subr.mxu0 0.0
    %1243 = vmatpush2.msra.mxu0 0.0
    %1244 = vmatprep.subr.mxu0 0.0
    %1245 = vmatpush2.msra.mxu0 0.0
    %1246 = vmatprep.subr.mxu0 0.0
    %1247 = vmatpush2.msra.mxu0 0.0
    %1248 = vmatprep.subr.mxu0 0.0
    %1249 = vmatpush2.msra.mxu0 0.0
    %1250 = vmatprep.subr.mxu0 0.0
    %1251 = vmatpush2.msra.mxu0 0.0
    %1252 = vmatprep.subr.mxu0 0.0
    %1253 = vmatpush2.msra.mxu0 0.0
    %1254 = vmatprep.subr.mxu0 0.0
    %1255 = vmatpush2.msra.mxu0 0.0
    %1256 = vmatprep.subr.mxu0 0.0
    %1257 = vmatpush2.msra.mxu0 0.0
    %1258 = vmatprep.subr.mxu0 0.0
    %1259 = vmatpush2.msra.mxu0 0.0
    %1260 = vmatprep.subr.mxu0 0.0
    %1261 = vmatpush2.msra.mxu0 0.0
    %1262 = vmatprep.subr.mxu0 0.0
    %1263 = vmatpush2.msra.mxu0 0.0
    %1264 = vmatprep.subr.mxu0 0.0
    %1265 = vmatpush2.msra.mxu0 0.0
    %1266 = vmatprep.subr.mxu0 0.0
    %1267 = vmatpush2.msra.mxu0 0.0
    %1268 = vmatprep.mubr.f32.mxu0 0.0
    %v1269 = vand.u32 %v484, 4294901760
    %1270 = vmatmul.mubr.f32.gmra.mxu0 %v1269
    %v1271 = vpop.f32.mrf.mxu0
    %v1272 = vadd.f32 %v1150, %v1271
    %v1273 = vpop.f32.mrf.mxu0
    %v1274 = vadd.f32 %v1152, %v1273
    %1275 = vdwg.mxu0
    %1276 = vmatprep.subr.mxu0 0.0
    %1277 = vmatpush1.msra.mxu0 0.0
    %1278 = vmatprep.subr.mxu0 0.0
    %1279 = vmatpush1.msra.mxu0 0.0
    %1280 = vmatprep.subr.mxu0 0.0
    %1281 = vmatpush1.msra.mxu0 0.0
    %1282 = vmatprep.subr.mxu0 0.0
    %1283 = vmatpush1.msra.mxu0 0.0
    %1284 = vmatprep.subr.mxu0 0.0
    %1285 = vmatpush1.msra.mxu0 0.0
    %1286 = vmatprep.subr.mxu0 0.0
    %1287 = vmatpush1.msra.mxu0 0.0
    %1288 = vmatprep.subr.mxu0 0.0
    %1289 = vmatpush1.msra.mxu0 0.0
    %1290 = vmatprep.subr.mxu0 0.0
    %1291 = vmatpush1.msra.mxu0 0.0
    %1292 = vmatprep.subr.mxu0 0.0
    %1293 = vmatpush1.msra.mxu0 0.0
    %1294 = vmatprep.subr.mxu0 0.0
    %1295 = vmatpush1.msra.mxu0 0.0
    %1296 = vmatprep.subr.mxu0 0.0
    %1297 = vmatpush1.msra.mxu0 0.0
    %v1298 = vand.u32 %v497, 4294901760
    %v1299 = vsub.f32 %v497, %v1298
    %1300 = vmatprep.subr.mxu0 %v1299
    %v1301 = vand.u32 %v494, 4294901760
    %v1302 = vsub.f32 %v494, %v1301
    %1303 = vmatpush1.msra.mxu0 %v1302
    %v1304 = vand.u32 %v471, 4294901760
    %v1305 = vsub.f32 %v471, %v1304
    %1306 = vmatprep.subr.mxu0 %v1305
    %v1307 = vand.u32 %v470, 4294901760
    %v1308 = vsub.f32 %v470, %v1307
    %1309 = vmatpush1.msra.mxu0 %v1308
    %v1310 = vand.u32 %v467, 4294901760
    %v1311 = vsub.f32 %v467, %v1310
    %1312 = vmatprep.subr.mxu0 %v1311
    %v1313 = vand.u32 %v466, 4294901760
    %v1314 = vsub.f32 %v466, %v1313
    %1315 = vmatpush1.msra.mxu0 %v1314
    %v1316 = vand.u32 %v463, 4294901760
    %v1317 = vsub.f32 %v463, %v1316
    %1318 = vmatprep.subr.mxu0 %v1317
    %v1319 = vand.u32 %v462, 4294901760
    %v1320 = vsub.f32 %v462, %v1319
    %1321 = vmatpush1.msra.mxu0 %v1320
    %v1322 = vand.u32 %v459, 4294901760
    %v1323 = vsub.f32 %v459, %v1322
    %1324 = vmatprep.subr.mxu0 %v1323
    %v1325 = vand.u32 %v458, 4294901760
    %v1326 = vsub.f32 %v458, %v1325
    %1327 = vmatpush1.msra.mxu0 %v1326
    %1328 = vmatprep.subr.mxu0 0.0
    %1329 = vmatpush2.msra.mxu0 0.0
    %1330 = vmatprep.subr.mxu0 0.0
    %1331 = vmatpush2.msra.mxu0 0.0
    %1332 = vmatprep.subr.mxu0 0.0
    %1333 = vmatpush2.msra.mxu0 0.0
    %1334 = vmatprep.subr.mxu0 0.0
    %1335 = vmatpush2.msra.mxu0 0.0
    %1336 = vmatprep.subr.mxu0 0.0
    %1337 = vmatpush2.msra.mxu0 0.0
    %1338 = vmatprep.subr.mxu0 0.0
    %1339 = vmatpush2.msra.mxu0 0.0
    %1340 = vmatprep.subr.mxu0 0.0
    %1341 = vmatpush2.msra.mxu0 0.0
    %1342 = vmatprep.subr.mxu0 0.0
    %1343 = vmatpush2.msra.mxu0 0.0
    %1344 = vmatprep.subr.mxu0 0.0
    %1345 = vmatpush2.msra.mxu0 0.0
    %1346 = vmatprep.subr.mxu0 0.0
    %1347 = vmatpush2.msra.mxu0 0.0
    %1348 = vmatprep.subr.mxu0 0.0
    %1349 = vmatpush2.msra.mxu0 0.0
    %1350 = vmatprep.subr.mxu0 0.0
    %1351 = vmatpush2.msra.mxu0 0.0
    %1352 = vmatprep.subr.mxu0 0.0
    %1353 = vmatpush2.msra.mxu0 0.0
    %1354 = vmatprep.subr.mxu0 0.0
    %1355 = vmatpush2.msra.mxu0 0.0
    %1356 = vmatprep.subr.mxu0 0.0
    %1357 = vmatpush2.msra.mxu0 0.0
    %1358 = vmatprep.subr.mxu0 0.0
    %1359 = vmatpush2.msra.mxu0 0.0
    %1360 = vmatprep.mubr.f32.mxu0 0.0
    %v1361 = vand.u32 %v484, 4294901760
    %v1362 = vsub.f32 %v484, %v1361
    %1363 = vmatmul.mubr.f32.gmra.mxu0 %v1362
    %v1364 = vpop.f32.mrf.mxu0
    %v1365 = vadd.f32 %v1272, %v1364
    %v1366 = vpop.f32.mrf.mxu0
    %v1367 = vadd.f32 %v1274, %v1366
    %1368 = vdwg.mxu0
    %1369 = vmatprep.subr.mxu0 0.0
    %1370 = vmatpush1.msra.mxu0 0.0
    %1371 = vmatprep.subr.mxu0 0.0
    %1372 = vmatpush1.msra.mxu0 0.0
    %1373 = vmatprep.subr.mxu0 0.0
    %1374 = vmatpush1.msra.mxu0 0.0
    %1375 = vmatprep.subr.mxu0 0.0
    %1376 = vmatpush1.msra.mxu0 0.0
    %1377 = vmatprep.subr.mxu0 0.0
    %1378 = vmatpush1.msra.mxu0 0.0
    %1379 = vmatprep.subr.mxu0 0.0
    %1380 = vmatpush1.msra.mxu0 0.0
    %1381 = vmatprep.subr.mxu0 0.0
    %1382 = vmatpush1.msra.mxu0 0.0
    %1383 = vmatprep.subr.mxu0 0.0
    %1384 = vmatpush1.msra.mxu0 0.0
    %1385 = vmatprep.subr.mxu0 0.0
    %1386 = vmatpush1.msra.mxu0 0.0
    %1387 = vmatprep.subr.mxu0 0.0
    %1388 = vmatpush1.msra.mxu0 0.0
    %1389 = vmatprep.subr.mxu0 0.0
    %1390 = vmatpush1.msra.mxu0 0.0
    %v1391 = vand.u32 %v497, 4294901760
    %1392 = vmatprep.subr.mxu0 %v1391
    %v1393 = vand.u32 %v494, 4294901760
    %1394 = vmatpush1.msra.mxu0 %v1393
    %v1395 = vand.u32 %v471, 4294901760
    %1396 = vmatprep.subr.mxu0 %v1395
    %v1397 = vand.u32 %v470, 4294901760
    %1398 = vmatpush1.msra.mxu0 %v1397
    %v1399 = vand.u32 %v467, 4294901760
    %1400 = vmatprep.subr.mxu0 %v1399
    %v1401 = vand.u32 %v466, 4294901760
    %1402 = vmatpush1.msra.mxu0 %v1401
    %v1403 = vand.u32 %v463, 4294901760
    %1404 = vmatprep.subr.mxu0 %v1403
    %v1405 = vand.u32 %v462, 4294901760
    %1406 = vmatpush1.msra.mxu0 %v1405
    %v1407 = vand.u32 %v459, 4294901760
    %1408 = vmatprep.subr.mxu0 %v1407
    %v1409 = vand.u32 %v458, 4294901760
    %1410 = vmatpush1.msra.mxu0 %v1409
    %1411 = vmatprep.subr.mxu0 0.0
    %1412 = vmatpush2.msra.mxu0 0.0
    %1413 = vmatprep.subr.mxu0 0.0
    %1414 = vmatpush2.msra.mxu0 0.0
    %1415 = vmatprep.subr.mxu0 0.0
    %1416 = vmatpush2.msra.mxu0 0.0
    %1417 = vmatprep.subr.mxu0 0.0
    %1418 = vmatpush2.msra.mxu0 0.0
    %1419 = vmatprep.subr.mxu0 0.0
    %1420 = vmatpush2.msra.mxu0 0.0
    %1421 = vmatprep.subr.mxu0 0.0
    %1422 = vmatpush2.msra.mxu0 0.0
    %1423 = vmatprep.subr.mxu0 0.0
    %1424 = vmatpush2.msra.mxu0 0.0
    %1425 = vmatprep.subr.mxu0 0.0
    %1426 = vmatpush2.msra.mxu0 0.0
    %1427 = vmatprep.subr.mxu0 0.0
    %1428 = vmatpush2.msra.mxu0 0.0
    %1429 = vmatprep.subr.mxu0 0.0
    %1430 = vmatpush2.msra.mxu0 0.0
    %1431 = vmatprep.subr.mxu0 0.0
    %1432 = vmatpush2.msra.mxu0 0.0
    %1433 = vmatprep.subr.mxu0 0.0
    %1434 = vmatpush2.msra.mxu0 0.0
    %1435 = vmatprep.subr.mxu0 0.0
    %1436 = vmatpush2.msra.mxu0 0.0
    %1437 = vmatprep.subr.mxu0 0.0
    %1438 = vmatpush2.msra.mxu0 0.0
    %1439 = vmatprep.subr.mxu0 0.0
    %1440 = vmatpush2.msra.mxu0 0.0
    %1441 = vmatprep.subr.mxu0 0.0
    %1442 = vmatpush2.msra.mxu0 0.0
    %1443 = vmatprep.mubr.f32.mxu0 0.0
    %v1444 = vand.u32 %v484, 4294901760
    %v1445 = vsub.f32 %v484, %v1444
    %v1446 = vand.u32 %v1445, 4294901760
    %1447 = vmatmul.mubr.f32.gmra.mxu0 %v1446
    %v1448 = vpop.f32.mrf.mxu0
    %v1449 = vadd.f32 %v1365, %v1448
    %v1450 = vpop.f32.mrf.mxu0
    %v1451 = vadd.f32 %v1367, %v1450
    %1452 = vdwg.mxu0
    %1453 = vmatprep.subr.mxu0 0.0
    %1454 = vmatpush1.msra.mxu0 0.0
    %1455 = vmatprep.subr.mxu0 0.0
    %1456 = vmatpush1.msra.mxu0 0.0
    %1457 = vmatprep.subr.mxu0 0.0
    %1458 = vmatpush1.msra.mxu0 0.0
    %1459 = vmatprep.subr.mxu0 0.0
    %1460 = vmatpush1.msra.mxu0 0.0
    %1461 = vmatprep.subr.mxu0 0.0
    %1462 = vmatpush1.msra.mxu0 0.0
    %1463 = vmatprep.subr.mxu0 0.0
    %1464 = vmatpush1.msra.mxu0 0.0
    %1465 = vmatprep.subr.mxu0 0.0
    %1466 = vmatpush1.msra.mxu0 0.0
    %1467 = vmatprep.subr.mxu0 0.0
    %1468 = vmatpush1.msra.mxu0 0.0
    %1469 = vmatprep.subr.mxu0 0.0
    %1470 = vmatpush1.msra.mxu0 0.0
    %1471 = vmatprep.subr.mxu0 0.0
    %1472 = vmatpush1.msra.mxu0 0.0
    %1473 = vmatprep.subr.mxu0 0.0
    %1474 = vmatpush1.msra.mxu0 0.0
    %v1475 = vand.u32 %v497, 4294901760
    %v1476 = vsub.f32 %v497, %v1475
    %v1477 = vand.u32 %v1476, 4294901760
    %1478 = vmatprep.subr.mxu0 %v1477
    %v1479 = vand.u32 %v494, 4294901760
    %v1480 = vsub.f32 %v494, %v1479
    %v1481 = vand.u32 %v1480, 4294901760
    %1482 = vmatpush1.msra.mxu0 %v1481
    %v1483 = vand.u32 %v471, 4294901760
    %v1484 = vsub.f32 %v471, %v1483
    %v1485 = vand.u32 %v1484, 4294901760
    %1486 = vmatprep.subr.mxu0 %v1485
    %v1487 = vand.u32 %v470, 4294901760
    %v1488 = vsub.f32 %v470, %v1487
    %v1489 = vand.u32 %v1488, 4294901760
    %1490 = vmatpush1.msra.mxu0 %v1489
    %v1491 = vand.u32 %v467, 4294901760
    %v1492 = vsub.f32 %v467, %v1491
    %v1493 = vand.u32 %v1492, 4294901760
    %1494 = vmatprep.subr.mxu0 %v1493
    %v1495 = vand.u32 %v466, 4294901760
    %v1496 = vsub.f32 %v466, %v1495
    %v1497 = vand.u32 %v1496, 4294901760
    %1498 = vmatpush1.msra.mxu0 %v1497
    %v1499 = vand.u32 %v463, 4294901760
    %v1500 = vsub.f32 %v463, %v1499
    %v1501 = vand.u32 %v1500, 4294901760
    %1502 = vmatprep.subr.mxu0 %v1501
    %v1503 = vand.u32 %v462, 4294901760
    %v1504 = vsub.f32 %v462, %v1503
    %v1505 = vand.u32 %v1504, 4294901760
    %1506 = vmatpush1.msra.mxu0 %v1505
    %v1507 = vand.u32 %v459, 4294901760
    %v1508 = vsub.f32 %v459, %v1507
    %v1509 = vand.u32 %v1508, 4294901760
    %1510 = vmatprep.subr.mxu0 %v1509
    %v1511 = vand.u32 %v458, 4294901760
    %v1512 = vsub.f32 %v458, %v1511
    %v1513 = vand.u32 %v1512, 4294901760
    %1514 = vmatpush1.msra.mxu0 %v1513
    %1515 = vmatprep.subr.mxu0 0.0
    %1516 = vmatpush2.msra.mxu0 0.0
    %1517 = vmatprep.subr.mxu0 0.0
    %1518 = vmatpush2.msra.mxu0 0.0
    %1519 = vmatprep.subr.mxu0 0.0
    %1520 = vmatpush2.msra.mxu0 0.0
    %1521 = vmatprep.subr.mxu0 0.0
    %1522 = vmatpush2.msra.mxu0 0.0
    %1523 = vmatprep.subr.mxu0 0.0
    %1524 = vmatpush2.msra.mxu0 0.0
    %1525 = vmatprep.subr.mxu0 0.0
    %1526 = vmatpush2.msra.mxu0 0.0
    %1527 = vmatprep.subr.mxu0 0.0
    %1528 = vmatpush2.msra.mxu0 0.0
    %1529 = vmatprep.subr.mxu0 0.0
    %1530 = vmatpush2.msra.mxu0 0.0
    %1531 = vmatprep.subr.mxu0 0.0
    %1532 = vmatpush2.msra.mxu0 0.0
    %1533 = vmatprep.subr.mxu0 0.0
    %1534 = vmatpush2.msra.mxu0 0.0
    %1535 = vmatprep.subr.mxu0 0.0
    %1536 = vmatpush2.msra.mxu0 0.0
    %1537 = vmatprep.subr.mxu0 0.0
    %1538 = vmatpush2.msra.mxu0 0.0
    %1539 = vmatprep.subr.mxu0 0.0
    %1540 = vmatpush2.msra.mxu0 0.0
    %1541 = vmatprep.subr.mxu0 0.0
    %1542 = vmatpush2.msra.mxu0 0.0
    %1543 = vmatprep.subr.mxu0 0.0
    %1544 = vmatpush2.msra.mxu0 0.0
    %1545 = vmatprep.subr.mxu0 0.0
    %1546 = vmatpush2.msra.mxu0 0.0
    %1547 = vmatprep.mubr.f32.mxu0 0.0
    %v1548 = vand.u32 %v484, 4294901760
    %1549 = vmatmul.mubr.f32.gmra.mxu0 %v1548
    %v1550 = vpop.f32.mrf.mxu0
    %v1551 = vadd.f32 %v1449, %v1550
    %v1552 = vpop.f32.mrf.mxu0
    %v1553 = vadd.f32 %v1451, %v1552
    %1554 = vdwg.mxu0
    %1555 = vmatprep.subr.mxu0 0.0
    %1556 = vmatpush1.msra.mxu0 0.0
    %1557 = vmatprep.subr.mxu0 0.0
    %1558 = vmatpush1.msra.mxu0 0.0
    %1559 = vmatprep.subr.mxu0 0.0
    %1560 = vmatpush1.msra.mxu0 0.0
    %1561 = vmatprep.subr.mxu0 0.0
    %1562 = vmatpush1.msra.mxu0 0.0
    %1563 = vmatprep.subr.mxu0 0.0
    %1564 = vmatpush1.msra.mxu0 0.0
    %1565 = vmatprep.subr.mxu0 0.0
    %1566 = vmatpush1.msra.mxu0 0.0
    %1567 = vmatprep.subr.mxu0 0.0
    %1568 = vmatpush1.msra.mxu0 0.0
    %1569 = vmatprep.subr.mxu0 0.0
    %1570 = vmatpush1.msra.mxu0 0.0
    %1571 = vmatprep.subr.mxu0 0.0
    %1572 = vmatpush1.msra.mxu0 0.0
    %1573 = vmatprep.subr.mxu0 0.0
    %1574 = vmatpush1.msra.mxu0 0.0
    %1575 = vmatprep.subr.mxu0 0.0
    %1576 = vmatpush1.msra.mxu0 0.0
    %v1577 = vand.u32 %v497, 4294901760
    %1578 = vmatprep.subr.mxu0 %v1577
    %v1579 = vand.u32 %v494, 4294901760
    %1580 = vmatpush1.msra.mxu0 %v1579
    %v1581 = vand.u32 %v471, 4294901760
    %1582 = vmatprep.subr.mxu0 %v1581
    %v1583 = vand.u32 %v470, 4294901760
    %1584 = vmatpush1.msra.mxu0 %v1583
    %v1585 = vand.u32 %v467, 4294901760
    %1586 = vmatprep.subr.mxu0 %v1585
    %v1587 = vand.u32 %v466, 4294901760
    %1588 = vmatpush1.msra.mxu0 %v1587
    %v1589 = vand.u32 %v463, 4294901760
    %1590 = vmatprep.subr.mxu0 %v1589
    %v1591 = vand.u32 %v462, 4294901760
    %1592 = vmatpush1.msra.mxu0 %v1591
    %v1593 = vand.u32 %v459, 4294901760
    %1594 = vmatprep.subr.mxu0 %v1593
    %v1595 = vand.u32 %v458, 4294901760
    %1596 = vmatpush1.msra.mxu0 %v1595
    %1597 = vmatprep.subr.mxu0 0.0
    %1598 = vmatpush2.msra.mxu0 0.0
    %1599 = vmatprep.subr.mxu0 0.0
    %1600 = vmatpush2.msra.mxu0 0.0
    %1601 = vmatprep.subr.mxu0 0.0
    %1602 = vmatpush2.msra.mxu0 0.0
    %1603 = vmatprep.subr.mxu0 0.0
    %1604 = vmatpush2.msra.mxu0 0.0
    %1605 = vmatprep.subr.mxu0 0.0
    %1606 = vmatpush2.msra.mxu0 0.0
    %1607 = vmatprep.subr.mxu0 0.0
    %1608 = vmatpush2.msra.mxu0 0.0
    %1609 = vmatprep.subr.mxu0 0.0
    %1610 = vmatpush2.msra.mxu0 0.0
    %1611 = vmatprep.subr.mxu0 0.0
    %1612 = vmatpush2.msra.mxu0 0.0
    %1613 = vmatprep.subr.mxu0 0.0
    %1614 = vmatpush2.msra.mxu0 0.0
    %1615 = vmatprep.subr.mxu0 0.0
    %1616 = vmatpush2.msra.mxu0 0.0
    %1617 = vmatprep.subr.mxu0 0.0
    %1618 = vmatpush2.msra.mxu0 0.0
    %1619 = vmatprep.subr.mxu0 0.0
    %1620 = vmatpush2.msra.mxu0 0.0
    %1621 = vmatprep.subr.mxu0 0.0
    %1622 = vmatpush2.msra.mxu0 0.0
    %1623 = vmatprep.subr.mxu0 0.0
    %1624 = vmatpush2.msra.mxu0 0.0
    %1625 = vmatprep.subr.mxu0 0.0
    %1626 = vmatpush2.msra.mxu0 0.0
    %1627 = vmatprep.subr.mxu0 0.0
    %1628 = vmatpush2.msra.mxu0 0.0
    %1629 = vmatprep.mubr.f32.mxu0 0.0
    %v1630 = vand.u32 %v484, 4294901760
    %1631 = vmatmul.mubr.f32.gmra.mxu0 %v1630
    %v1632 = vpop.f32.mrf.mxu0
    %v1633 = vadd.f32 %v1551, %v1632
    %v1634 = vpop.f32.mrf.mxu0
    %v1635 = vadd.f32 %v1553, %v1634
    %1636 = vdwg.mxu0
    %1637 = vst [vmem:[%s7] sm:$0xff] %v1064
    %1638 = vst [vmem:[%s7 + $0x8] sm:$0xff] %v1066
    %1639 = vst [vmem:[%s7 + $0x10] sm:$0xff] %v1633
    %1640 = vst [vmem:[%s7 + $0x18] sm:$0xff] %v1635
    %v1641 = vmax.f32 %v1064, 0.0
    %v1642 = vmax.f32 %v1066, 0.0
    %v1643 = vmax.f32 %v1633, 0.0
    %v1644 = vmax.f32 %v1635, 0.0
    %1645 = vst [vmem:[#allocation4] sm:$0xff] %v1641
    %1646 = vst [vmem:[#allocation4 + $0x8] sm:$0xff] %v1642
    %1647 = vst [vmem:[#allocation4 + $0x10] sm:$0xff] %v1643
    %1648 = vst [vmem:[#allocation4 + $0x18] sm:$0xff] %v1644
    %1649 = vst.msk [vmem:[#allocation4 + $0x20] sm:$0xff] %vm40, 0.0
    %v1650 = vld [vmem:[#allocation4] sm:$0xff]
    %v1651 = vld [vmem:[#allocation4 + $0x8] sm:$0xff]
    %v1652 = vld [vmem:[#allocation4 + $0x10] sm:$0xff]
    %v1653 = vld [vmem:[#allocation4 + $0x18] sm:$0xff]
    %v1654 = vld [vmem:[#allocation4 + $0x20] sm:$0xff]
    %1660 = vrot.lane.b32.xlu0 %v1650, 127
    %v1661 = vpop.permute.xlu0 %1660
    %1662 = vrot.lane.b32.xlu0 %v1651, 127
    %v1663 = vpop.permute.xlu0 %1662
    %1664 = vrot.lane.b32.xlu0 %v1652, 127
    %v1665 = vpop.permute.xlu0 %1664
    %1666 = vrot.lane.b32.xlu0 %v1653, 127
    %v1667 = vpop.permute.xlu0 %1666
    %1668 = vrot.lane.b32.xlu0 %v1654, 127
    %v1669 = vpop.permute.xlu0 %1668
    %vm1670 = vcmask 1039360
    %v1671 = vsel %vm1670, %v1661, %v1663
    %v1672 = vsel %vm1670, %v1663, %v1665
    %v1673 = vsel %vm1670, %v1665, %v1667
    %v1674 = vsel %vm1670, %v1667, %v1669
    %v1679 = vmax.f32 %v1650, %v1671
    %v1680 = vmax.f32 %v1651, %v1672
    %v1681 = vmax.f32 %v1652, %v1673
    %v1682 = vmax.f32 %v1653, %v1674
    %v1684 = vmax.f32 %v1654, %v1669
    %1690 = vrot.lane.b32.xlu0 %v1679, 112
    %v1691 = vpop.permute.xlu0 %1690
    %1692 = vrot.lane.b32.xlu0 %v1680, 112
    %v1693 = vpop.permute.xlu0 %1692
    %1694 = vrot.lane.b32.xlu0 %v1681, 112
    %v1695 = vpop.permute.xlu0 %1694
    %1696 = vrot.lane.b32.xlu0 %v1682, 112
    %v1697 = vpop.permute.xlu0 %1696
    %1698 = vrot.lane.b32.xlu0 %v1684, 112
    %v1699 = vpop.permute.xlu0 %1698
    %v1700 = vsel %vm131, %v1691, %v1693
    %v1701 = vsel %vm131, %v1693, %v1695
    %v1702 = vsel %vm131, %v1695, %v1697
    %v1703 = vsel %vm131, %v1697, %v1699
    %v1708 = vmax.f32 %v1679, %v1700
    %v1709 = vmax.f32 %v1680, %v1701
    %v1710 = vmax.f32 %v1681, %v1702
    %v1711 = vmax.f32 %v1682, %v1703
    %v1712 = vld [vmem:[%s5] sm:$0xff]
    %v1713 = vld [vmem:[%s5 + $0x8] sm:$0xff]
    %v1714 = vld [vmem:[%s5 + $0x10] sm:$0xff]
    %v1715 = vld [vmem:[%s5 + $0x18] sm:$0xff]
    %v1716 = vld [vmem:[%s5 + $0x20] sm:$0xff]
    %v1717 = vld [vmem:[%s5 + $0x28] sm:$0xff]
    %v1718 = vld [vmem:[%s5 + $0x30] sm:$0xff]
    %v1719 = vld [vmem:[%s5 + $0x38] sm:$0xff]
    %v1720 = vld [vmem:[%s5 + $0x40] sm:$0xff]
    %v1721 = vld [vmem:[%s5 + $0x48] sm:$0xff]
    %v1722 = vld [vmem:[%s5 + $0x50] sm:$0xff]
    %v1723 = vld [vmem:[%s5 + $0x58] sm:$0xff]
    %v1724 = vld [vmem:[%s5 + $0x60] sm:$0xff]
    %v1725 = vld [vmem:[%s5 + $0x68] sm:$0xff]
    %v1726 = vld [vmem:[%s5 + $0x70] sm:$0xff]
    %v1727 = vld [vmem:[%s5 + $0x78] sm:$0xff]
    %v1728 = vld [vmem:[%s5 + $0x80] sm:$0xff]
    %v1729 = vld [vmem:[%s5 + $0x88] sm:$0xff]
    %v1730 = vld [vmem:[%s5 + $0x90] sm:$0xff]
    %v1731 = vld [vmem:[%s5 + $0x98] sm:$0xff]
    %v1732 = vld [vmem:[%s5 + $0xa0] sm:$0xff]
    %v1733 = vld [vmem:[%s5 + $0xa8] sm:$0xff]
    %v1734 = vld [vmem:[%s5 + $0xb0] sm:$0xff]
    %v1735 = vld [vmem:[%s5 + $0xb8] sm:$0xff]
    %v1736 = vld [vmem:[%s5 + $0xc0] sm:$0xff]
    %v1737 = vld [vmem:[%s5 + $0xc8] sm:$0xff]
    %v1738 = vld [vmem:[%s5 + $0xd0] sm:$0xff]
    %v1739 = vld [vmem:[%s5 + $0xd8] sm:$0xff]
    %v1740 = vld [vmem:[%s5 + $0xe0] sm:$0xff]
    %v1741 = vld [vmem:[%s5 + $0xe8] sm:$0xff]
    %v1742 = vld [vmem:[%s5 + $0xf0] sm:$0xff]
    %v1743 = vld [vmem:[%s5 + $0xf8] sm:$0xff]
    %v1744 = vld [vmem:[%s5 + $0x100] sm:$0xff]
    %v1745 = vld [vmem:[%s5 + $0x108] sm:$0xff]
    %v1746 = vld [vmem:[%s5 + $0x110] sm:$0xff]
    %v1747 = vld [vmem:[%s5 + $0x118] sm:$0xff]
    %v1748 = vld [vmem:[%s5 + $0x120] sm:$0xff]
    %v1749 = vld [vmem:[%s5 + $0x128] sm:$0xff]
    %v1750 = vld [vmem:[%s5 + $0x130] sm:$0xff]
    %v1751 = vld [vmem:[%s5 + $0x138] sm:$0xff]
    %v1752 = vld [vmem:[%s5 + $0x140] sm:$0xff]
    %v1753 = vld [vmem:[%s5 + $0x148] sm:$0xff]
    %v1754 = vld [vmem:[%s5 + $0x150] sm:$0xff]
    %v1755 = vld [vmem:[%s5 + $0x158] sm:$0xff]
    %v1756 = vld [vmem:[%s5 + $0x160] sm:$0xff]
    %v1757 = vld [vmem:[%s5 + $0x168] sm:$0xff]
    %v1758 = vld [vmem:[%s5 + $0x170] sm:$0xff]
    %v1759 = vld [vmem:[%s5 + $0x178] sm:$0xff]
    %v1760 = vld [vmem:[%s5 + $0x180] sm:$0xff]
    %v1761 = vld [vmem:[%s5 + $0x188] sm:$0xff]
    %v1762 = vld [vmem:[%s5 + $0x190] sm:$0xff]
    %v1763 = vld [vmem:[%s5 + $0x198] sm:$0xff]
    %v1764 = vld [vmem:[%s5 + $0x1a0] sm:$0xff]
    %v1765 = vld [vmem:[%s5 + $0x1a8] sm:$0xff]
    %v1766 = vld [vmem:[%s5 + $0x1b0] sm:$0xff]
    %v1767 = vld [vmem:[%s5 + $0x1b8] sm:$0xff]
    %v1768 = vld [vmem:[%s5 + $0x1c0] sm:$0xff]
    %v1769 = vld [vmem:[%s5 + $0x1c8] sm:$0xff]
    %v1770 = vld [vmem:[%s5 + $0x1d0] sm:$0xff]
    %v1771 = vld [vmem:[%s5 + $0x1d8] sm:$0xff]
    %v1772 = vld [vmem:[%s5 + $0x1e0] sm:$0xff]
    %v1773 = vld [vmem:[%s5 + $0x1e8] sm:$0xff]
    %v1774 = vld [vmem:[%s5 + $0x1f0] sm:$0xff]
    %v1775 = vld [vmem:[%s5 + $0x1f8] sm:$0xff]
    %1776 = vmatprep.subr.mxu0 0.0
    %v1777 = vand.u32 %v1727, 4294901760
    %1778 = vmatpush1.msra.mxu0 %v1777
    %1779 = vmatprep.subr.mxu0 0.0
    %v1780 = vand.u32 %v1726, 4294901760
    %1781 = vmatpush1.msra.mxu0 %v1780
    %1782 = vmatprep.subr.mxu0 0.0
    %v1783 = vand.u32 %v1725, 4294901760
    %1784 = vmatpush1.msra.mxu0 %v1783
    %1785 = vmatprep.subr.mxu0 0.0
    %v1786 = vand.u32 %v1724, 4294901760
    %1787 = vmatpush1.msra.mxu0 %v1786
    %1788 = vmatprep.subr.mxu0 0.0
    %v1789 = vand.u32 %v1723, 4294901760
    %1790 = vmatpush1.msra.mxu0 %v1789
    %1791 = vmatprep.subr.mxu0 0.0
    %v1792 = vand.u32 %v1722, 4294901760
    %1793 = vmatpush1.msra.mxu0 %v1792
    %1794 = vmatprep.subr.mxu0 0.0
    %v1795 = vand.u32 %v1721, 4294901760
    %1796 = vmatpush1.msra.mxu0 %v1795
    %1797 = vmatprep.subr.mxu0 0.0
    %v1798 = vand.u32 %v1720, 4294901760
    %1799 = vmatpush1.msra.mxu0 %v1798
    %1800 = vmatprep.subr.mxu0 0.0
    %v1801 = vand.u32 %v1719, 4294901760
    %1802 = vmatpush1.msra.mxu0 %v1801
    %1803 = vmatprep.subr.mxu0 0.0
    %v1804 = vand.u32 %v1718, 4294901760
    %1805 = vmatpush1.msra.mxu0 %v1804
    %1806 = vmatprep.subr.mxu0 0.0
    %v1807 = vand.u32 %v1717, 4294901760
    %1808 = vmatpush1.msra.mxu0 %v1807
    %1809 = vmatprep.subr.mxu0 0.0
    %v1810 = vand.u32 %v1716, 4294901760
    %1811 = vmatpush1.msra.mxu0 %v1810
    %1812 = vmatprep.subr.mxu0 0.0
    %v1813 = vand.u32 %v1715, 4294901760
    %1814 = vmatpush1.msra.mxu0 %v1813
    %1815 = vmatprep.subr.mxu0 0.0
    %v1816 = vand.u32 %v1714, 4294901760
    %1817 = vmatpush1.msra.mxu0 %v1816
    %1818 = vmatprep.subr.mxu0 0.0
    %v1819 = vand.u32 %v1713, 4294901760
    %1820 = vmatpush1.msra.mxu0 %v1819
    %1821 = vmatprep.subr.mxu0 0.0
    %v1822 = vand.u32 %v1712, 4294901760
    %1823 = vmatpush1.msra.mxu0 %v1822
    %1824 = vmatprep.subr.mxu0 0.0
    %v1825 = vand.u32 %v1743, 4294901760
    %1826 = vmatpush2.msra.mxu0 %v1825
    %1827 = vmatprep.subr.mxu0 0.0
    %v1828 = vand.u32 %v1742, 4294901760
    %1829 = vmatpush2.msra.mxu0 %v1828
    %1830 = vmatprep.subr.mxu0 0.0
    %v1831 = vand.u32 %v1741, 4294901760
    %1832 = vmatpush2.msra.mxu0 %v1831
    %1833 = vmatprep.subr.mxu0 0.0
    %v1834 = vand.u32 %v1740, 4294901760
    %1835 = vmatpush2.msra.mxu0 %v1834
    %1836 = vmatprep.subr.mxu0 0.0
    %v1837 = vand.u32 %v1739, 4294901760
    %1838 = vmatpush2.msra.mxu0 %v1837
    %1839 = vmatprep.subr.mxu0 0.0
    %v1840 = vand.u32 %v1738, 4294901760
    %1841 = vmatpush2.msra.mxu0 %v1840
    %1842 = vmatprep.subr.mxu0 0.0
    %v1843 = vand.u32 %v1737, 4294901760
    %1844 = vmatpush2.msra.mxu0 %v1843
    %1845 = vmatprep.subr.mxu0 0.0
    %v1846 = vand.u32 %v1736, 4294901760
    %1847 = vmatpush2.msra.mxu0 %v1846
    %1848 = vmatprep.subr.mxu0 0.0
    %v1849 = vand.u32 %v1735, 4294901760
    %1850 = vmatpush2.msra.mxu0 %v1849
    %1851 = vmatprep.subr.mxu0 0.0
    %v1852 = vand.u32 %v1734, 4294901760
    %1853 = vmatpush2.msra.mxu0 %v1852
    %1854 = vmatprep.subr.mxu0 0.0
    %v1855 = vand.u32 %v1733, 4294901760
    %1856 = vmatpush2.msra.mxu0 %v1855
    %1857 = vmatprep.subr.mxu0 0.0
    %v1858 = vand.u32 %v1732, 4294901760
    %1859 = vmatpush2.msra.mxu0 %v1858
    %1860 = vmatprep.subr.mxu0 0.0
    %v1861 = vand.u32 %v1731, 4294901760
    %1862 = vmatpush2.msra.mxu0 %v1861
    %1863 = vmatprep.subr.mxu0 0.0
    %v1864 = vand.u32 %v1730, 4294901760
    %1865 = vmatpush2.msra.mxu0 %v1864
    %1866 = vmatprep.subr.mxu0 0.0
    %v1867 = vand.u32 %v1729, 4294901760
    %1868 = vmatpush2.msra.mxu0 %v1867
    %1869 = vmatprep.subr.mxu0 0.0
    %v1870 = vand.u32 %v1728, 4294901760
    %1871 = vmatpush2.msra.mxu0 %v1870
    %v1872 = vand.u32 %v1709, 4294901760
    %v1873 = vsub.f32 %v1709, %v1872
    %v1874 = vand.u32 %v1873, 4294901760
    %v1875 = vsub.f32 %v1873, %v1874
    %v1876 = vand.u32 %v1875, 4294901760
    %1877 = vmatprep.mubr.f32.mxu0 %v1876
    %v1878 = vand.u32 %v1708, 4294901760
    %v1879 = vsub.f32 %v1708, %v1878
    %v1880 = vand.u32 %v1879, 4294901760
    %v1881 = vsub.f32 %v1879, %v1880
    %v1882 = vand.u32 %v1881, 4294901760
    %1883 = vmatmul.mubr.f32.gmra.mxu0 %v1882
    %v1884 = vpop.f32.mrf.mxu0
    %v1885 = vadd.f32 0.0, %v1884
    %v1886 = vpop.f32.mrf.mxu0
    %1887 = vdwg.mxu0
    %1888 = vmatprep.subr.mxu0 0.0
    %v1889 = vand.u32 %v1727, 4294901760
    %v1890 = vsub.f32 %v1727, %v1889
    %v1891 = vand.u32 %v1890, 4294901760
    %v1892 = vsub.f32 %v1890, %v1891
    %v1893 = vand.u32 %v1892, 4294901760
    %1894 = vmatpush1.msra.mxu0 %v1893
    %1895 = vmatprep.subr.mxu0 0.0
    %v1896 = vand.u32 %v1726, 4294901760
    %v1897 = vsub.f32 %v1726, %v1896
    %v1898 = vand.u32 %v1897, 4294901760
    %v1899 = vsub.f32 %v1897, %v1898
    %v1900 = vand.u32 %v1899, 4294901760
    %1901 = vmatpush1.msra.mxu0 %v1900
    %1902 = vmatprep.subr.mxu0 0.0
    %v1903 = vand.u32 %v1725, 4294901760
    %v1904 = vsub.f32 %v1725, %v1903
    %v1905 = vand.u32 %v1904, 4294901760
    %v1906 = vsub.f32 %v1904, %v1905
    %v1907 = vand.u32 %v1906, 4294901760
    %1908 = vmatpush1.msra.mxu0 %v1907
    %1909 = vmatprep.subr.mxu0 0.0
    %v1910 = vand.u32 %v1724, 4294901760
    %v1911 = vsub.f32 %v1724, %v1910
    %v1912 = vand.u32 %v1911, 4294901760
    %v1913 = vsub.f32 %v1911, %v1912
    %v1914 = vand.u32 %v1913, 4294901760
    %1915 = vmatpush1.msra.mxu0 %v1914
    %1916 = vmatprep.subr.mxu0 0.0
    %v1917 = vand.u32 %v1723, 4294901760
    %v1918 = vsub.f32 %v1723, %v1917
    %v1919 = vand.u32 %v1918, 4294901760
    %v1920 = vsub.f32 %v1918, %v1919
    %v1921 = vand.u32 %v1920, 4294901760
    %1922 = vmatpush1.msra.mxu0 %v1921
    %1923 = vmatprep.subr.mxu0 0.0
    %v1924 = vand.u32 %v1722, 4294901760
    %v1925 = vsub.f32 %v1722, %v1924
    %v1926 = vand.u32 %v1925, 4294901760
    %v1927 = vsub.f32 %v1925, %v1926
    %v1928 = vand.u32 %v1927, 4294901760
    %1929 = vmatpush1.msra.mxu0 %v1928
    %1930 = vmatprep.subr.mxu0 0.0
    %v1931 = vand.u32 %v1721, 4294901760
    %v1932 = vsub.f32 %v1721, %v1931
    %v1933 = vand.u32 %v1932, 4294901760
    %v1934 = vsub.f32 %v1932, %v1933
    %v1935 = vand.u32 %v1934, 4294901760
    %1936 = vmatpush1.msra.mxu0 %v1935
    %1937 = vmatprep.subr.mxu0 0.0
    %v1938 = vand.u32 %v1720, 4294901760
    %v1939 = vsub.f32 %v1720, %v1938
    %v1940 = vand.u32 %v1939, 4294901760
    %v1941 = vsub.f32 %v1939, %v1940
    %v1942 = vand.u32 %v1941, 4294901760
    %1943 = vmatpush1.msra.mxu0 %v1942
    %1944 = vmatprep.subr.mxu0 0.0
    %v1945 = vand.u32 %v1719, 4294901760
    %v1946 = vsub.f32 %v1719, %v1945
    %v1947 = vand.u32 %v1946, 4294901760
    %v1948 = vsub.f32 %v1946, %v1947
    %v1949 = vand.u32 %v1948, 4294901760
    %1950 = vmatpush1.msra.mxu0 %v1949
    %1951 = vmatprep.subr.mxu0 0.0
    %v1952 = vand.u32 %v1718, 4294901760
    %v1953 = vsub.f32 %v1718, %v1952
    %v1954 = vand.u32 %v1953, 4294901760
    %v1955 = vsub.f32 %v1953, %v1954
    %v1956 = vand.u32 %v1955, 4294901760
    %1957 = vmatpush1.msra.mxu0 %v1956
    %1958 = vmatprep.subr.mxu0 0.0
    %v1959 = vand.u32 %v1717, 4294901760
    %v1960 = vsub.f32 %v1717, %v1959
    %v1961 = vand.u32 %v1960, 4294901760
    %v1962 = vsub.f32 %v1960, %v1961
    %v1963 = vand.u32 %v1962, 4294901760
    %1964 = vmatpush1.msra.mxu0 %v1963
    %1965 = vmatprep.subr.mxu0 0.0
    %v1966 = vand.u32 %v1716, 4294901760
    %v1967 = vsub.f32 %v1716, %v1966
    %v1968 = vand.u32 %v1967, 4294901760
    %v1969 = vsub.f32 %v1967, %v1968
    %v1970 = vand.u32 %v1969, 4294901760
    %1971 = vmatpush1.msra.mxu0 %v1970
    %1972 = vmatprep.subr.mxu0 0.0
    %v1973 = vand.u32 %v1715, 4294901760
    %v1974 = vsub.f32 %v1715, %v1973
    %v1975 = vand.u32 %v1974, 4294901760
    %v1976 = vsub.f32 %v1974, %v1975
    %v1977 = vand.u32 %v1976, 4294901760
    %1978 = vmatpush1.msra.mxu0 %v1977
    %1979 = vmatprep.subr.mxu0 0.0
    %v1980 = vand.u32 %v1714, 4294901760
    %v1981 = vsub.f32 %v1714, %v1980
    %v1982 = vand.u32 %v1981, 4294901760
    %v1983 = vsub.f32 %v1981, %v1982
    %v1984 = vand.u32 %v1983, 4294901760
    %1985 = vmatpush1.msra.mxu0 %v1984
    %1986 = vmatprep.subr.mxu0 0.0
    %v1987 = vand.u32 %v1713, 4294901760
    %v1988 = vsub.f32 %v1713, %v1987
    %v1989 = vand.u32 %v1988, 4294901760
    %v1990 = vsub.f32 %v1988, %v1989
    %v1991 = vand.u32 %v1990, 4294901760
    %1992 = vmatpush1.msra.mxu0 %v1991
    %1993 = vmatprep.subr.mxu0 0.0
    %v1994 = vand.u32 %v1712, 4294901760
    %v1995 = vsub.f32 %v1712, %v1994
    %v1996 = vand.u32 %v1995, 4294901760
    %v1997 = vsub.f32 %v1995, %v1996
    %v1998 = vand.u32 %v1997, 4294901760
    %1999 = vmatpush1.msra.mxu0 %v1998
    %2000 = vmatprep.subr.mxu0 0.0
    %v2001 = vand.u32 %v1743, 4294901760
    %v2002 = vsub.f32 %v1743, %v2001
    %v2003 = vand.u32 %v2002, 4294901760
    %v2004 = vsub.f32 %v2002, %v2003
    %v2005 = vand.u32 %v2004, 4294901760
    %2006 = vmatpush2.msra.mxu0 %v2005
    %2007 = vmatprep.subr.mxu0 0.0
    %v2008 = vand.u32 %v1742, 4294901760
    %v2009 = vsub.f32 %v1742, %v2008
    %v2010 = vand.u32 %v2009, 4294901760
    %v2011 = vsub.f32 %v2009, %v2010
    %v2012 = vand.u32 %v2011, 4294901760
    %2013 = vmatpush2.msra.mxu0 %v2012
    %2014 = vmatprep.subr.mxu0 0.0
    %v2015 = vand.u32 %v1741, 4294901760
    %v2016 = vsub.f32 %v1741, %v2015
    %v2017 = vand.u32 %v2016, 4294901760
    %v2018 = vsub.f32 %v2016, %v2017
    %v2019 = vand.u32 %v2018, 4294901760
    %2020 = vmatpush2.msra.mxu0 %v2019
    %2021 = vmatprep.subr.mxu0 0.0
    %v2022 = vand.u32 %v1740, 4294901760
    %v2023 = vsub.f32 %v1740, %v2022
    %v2024 = vand.u32 %v2023, 4294901760
    %v2025 = vsub.f32 %v2023, %v2024
    %v2026 = vand.u32 %v2025, 4294901760
    %2027 = vmatpush2.msra.mxu0 %v2026
    %2028 = vmatprep.subr.mxu0 0.0
    %v2029 = vand.u32 %v1739, 4294901760
    %v2030 = vsub.f32 %v1739, %v2029
    %v2031 = vand.u32 %v2030, 4294901760
    %v2032 = vsub.f32 %v2030, %v2031
    %v2033 = vand.u32 %v2032, 4294901760
    %2034 = vmatpush2.msra.mxu0 %v2033
    %2035 = vmatprep.subr.mxu0 0.0
    %v2036 = vand.u32 %v1738, 4294901760
    %v2037 = vsub.f32 %v1738, %v2036
    %v2038 = vand.u32 %v2037, 4294901760
    %v2039 = vsub.f32 %v2037, %v2038
    %v2040 = vand.u32 %v2039, 4294901760
    %2041 = vmatpush2.msra.mxu0 %v2040
    %2042 = vmatprep.subr.mxu0 0.0
    %v2043 = vand.u32 %v1737, 4294901760
    %v2044 = vsub.f32 %v1737, %v2043
    %v2045 = vand.u32 %v2044, 4294901760
    %v2046 = vsub.f32 %v2044, %v2045
    %v2047 = vand.u32 %v2046, 4294901760
    %2048 = vmatpush2.msra.mxu0 %v2047
    %2049 = vmatprep.subr.mxu0 0.0
    %v2050 = vand.u32 %v1736, 4294901760
    %v2051 = vsub.f32 %v1736, %v2050
    %v2052 = vand.u32 %v2051, 4294901760
    %v2053 = vsub.f32 %v2051, %v2052
    %v2054 = vand.u32 %v2053, 4294901760
    %2055 = vmatpush2.msra.mxu0 %v2054
    %2056 = vmatprep.subr.mxu0 0.0
    %v2057 = vand.u32 %v1735, 4294901760
    %v2058 = vsub.f32 %v1735, %v2057
    %v2059 = vand.u32 %v2058, 4294901760
    %v2060 = vsub.f32 %v2058, %v2059
    %v2061 = vand.u32 %v2060, 4294901760
    %2062 = vmatpush2.msra.mxu0 %v2061
    %2063 = vmatprep.subr.mxu0 0.0
    %v2064 = vand.u32 %v1734, 4294901760
    %v2065 = vsub.f32 %v1734, %v2064
    %v2066 = vand.u32 %v2065, 4294901760
    %v2067 = vsub.f32 %v2065, %v2066
    %v2068 = vand.u32 %v2067, 4294901760
    %2069 = vmatpush2.msra.mxu0 %v2068
    %2070 = vmatprep.subr.mxu0 0.0
    %v2071 = vand.u32 %v1733, 4294901760
    %v2072 = vsub.f32 %v1733, %v2071
    %v2073 = vand.u32 %v2072, 4294901760
    %v2074 = vsub.f32 %v2072, %v2073
    %v2075 = vand.u32 %v2074, 4294901760
    %2076 = vmatpush2.msra.mxu0 %v2075
    %2077 = vmatprep.subr.mxu0 0.0
    %v2078 = vand.u32 %v1732, 4294901760
    %v2079 = vsub.f32 %v1732, %v2078
    %v2080 = vand.u32 %v2079, 4294901760
    %v2081 = vsub.f32 %v2079, %v2080
    %v2082 = vand.u32 %v2081, 4294901760
    %2083 = vmatpush2.msra.mxu0 %v2082
    %2084 = vmatprep.subr.mxu0 0.0
    %v2085 = vand.u32 %v1731, 4294901760
    %v2086 = vsub.f32 %v1731, %v2085
    %v2087 = vand.u32 %v2086, 4294901760
    %v2088 = vsub.f32 %v2086, %v2087
    %v2089 = vand.u32 %v2088, 4294901760
    %2090 = vmatpush2.msra.mxu0 %v2089
    %2091 = vmatprep.subr.mxu0 0.0
    %v2092 = vand.u32 %v1730, 4294901760
    %v2093 = vsub.f32 %v1730, %v2092
    %v2094 = vand.u32 %v2093, 4294901760
    %v2095 = vsub.f32 %v2093, %v2094
    %v2096 = vand.u32 %v2095, 4294901760
    %2097 = vmatpush2.msra.mxu0 %v2096
    %2098 = vmatprep.subr.mxu0 0.0
    %v2099 = vand.u32 %v1729, 4294901760
    %v2100 = vsub.f32 %v1729, %v2099
    %v2101 = vand.u32 %v2100, 4294901760
    %v2102 = vsub.f32 %v2100, %v2101
    %v2103 = vand.u32 %v2102, 4294901760
    %2104 = vmatpush2.msra.mxu0 %v2103
    %2105 = vmatprep.subr.mxu0 0.0
    %v2106 = vand.u32 %v1728, 4294901760
    %v2107 = vsub.f32 %v1728, %v2106
    %v2108 = vand.u32 %v2107, 4294901760
    %v2109 = vsub.f32 %v2107, %v2108
    %v2110 = vand.u32 %v2109, 4294901760
    %2111 = vmatpush2.msra.mxu0 %v2110
    %v2112 = vand.u32 %v1709, 4294901760
    %2113 = vmatprep.mubr.f32.mxu0 %v2112
    %v2114 = vand.u32 %v1708, 4294901760
    %2115 = vmatmul.mubr.f32.gmra.mxu0 %v2114
    %v2116 = vpop.f32.mrf.mxu0
    %v2117 = vadd.f32 %v1885, %v2116
    %v2118 = vpop.f32.mrf.mxu0
    %2119 = vdwg.mxu0
    %2120 = vmatprep.subr.mxu0 0.0
    %v2121 = vand.u32 %v1727, 4294901760
    %v2122 = vsub.f32 %v1727, %v2121
    %2123 = vmatpush1.msra.mxu0 %v2122
    %2124 = vmatprep.subr.mxu0 0.0
    %v2125 = vand.u32 %v1726, 4294901760
    %v2126 = vsub.f32 %v1726, %v2125
    %2127 = vmatpush1.msra.mxu0 %v2126
    %2128 = vmatprep.subr.mxu0 0.0
    %v2129 = vand.u32 %v1725, 4294901760
    %v2130 = vsub.f32 %v1725, %v2129
    %2131 = vmatpush1.msra.mxu0 %v2130
    %2132 = vmatprep.subr.mxu0 0.0
    %v2133 = vand.u32 %v1724, 4294901760
    %v2134 = vsub.f32 %v1724, %v2133
    %2135 = vmatpush1.msra.mxu0 %v2134
    %2136 = vmatprep.subr.mxu0 0.0
    %v2137 = vand.u32 %v1723, 4294901760
    %v2138 = vsub.f32 %v1723, %v2137
    %2139 = vmatpush1.msra.mxu0 %v2138
    %2140 = vmatprep.subr.mxu0 0.0
    %v2141 = vand.u32 %v1722, 4294901760
    %v2142 = vsub.f32 %v1722, %v2141
    %2143 = vmatpush1.msra.mxu0 %v2142
    %2144 = vmatprep.subr.mxu0 0.0
    %v2145 = vand.u32 %v1721, 4294901760
    %v2146 = vsub.f32 %v1721, %v2145
    %2147 = vmatpush1.msra.mxu0 %v2146
    %2148 = vmatprep.subr.mxu0 0.0
    %v2149 = vand.u32 %v1720, 4294901760
    %v2150 = vsub.f32 %v1720, %v2149
    %2151 = vmatpush1.msra.mxu0 %v2150
    %2152 = vmatprep.subr.mxu0 0.0
    %v2153 = vand.u32 %v1719, 4294901760
    %v2154 = vsub.f32 %v1719, %v2153
    %2155 = vmatpush1.msra.mxu0 %v2154
    %2156 = vmatprep.subr.mxu0 0.0
    %v2157 = vand.u32 %v1718, 4294901760
    %v2158 = vsub.f32 %v1718, %v2157
    %2159 = vmatpush1.msra.mxu0 %v2158
    %2160 = vmatprep.subr.mxu0 0.0
    %v2161 = vand.u32 %v1717, 4294901760
    %v2162 = vsub.f32 %v1717, %v2161
    %2163 = vmatpush1.msra.mxu0 %v2162
    %2164 = vmatprep.subr.mxu0 0.0
    %v2165 = vand.u32 %v1716, 4294901760
    %v2166 = vsub.f32 %v1716, %v2165
    %2167 = vmatpush1.msra.mxu0 %v2166
    %2168 = vmatprep.subr.mxu0 0.0
    %v2169 = vand.u32 %v1715, 4294901760
    %v2170 = vsub.f32 %v1715, %v2169
    %2171 = vmatpush1.msra.mxu0 %v2170
    %2172 = vmatprep.subr.mxu0 0.0
    %v2173 = vand.u32 %v1714, 4294901760
    %v2174 = vsub.f32 %v1714, %v2173
    %2175 = vmatpush1.msra.mxu0 %v2174
    %2176 = vmatprep.subr.mxu0 0.0
    %v2177 = vand.u32 %v1713, 4294901760
    %v2178 = vsub.f32 %v1713, %v2177
    %2179 = vmatpush1.msra.mxu0 %v2178
    %2180 = vmatprep.subr.mxu0 0.0
    %v2181 = vand.u32 %v1712, 4294901760
    %v2182 = vsub.f32 %v1712, %v2181
    %2183 = vmatpush1.msra.mxu0 %v2182
    %2184 = vmatprep.subr.mxu0 0.0
    %v2185 = vand.u32 %v1743, 4294901760
    %v2186 = vsub.f32 %v1743, %v2185
    %2187 = vmatpush2.msra.mxu0 %v2186
    %2188 = vmatprep.subr.mxu0 0.0
    %v2189 = vand.u32 %v1742, 4294901760
    %v2190 = vsub.f32 %v1742, %v2189
    %2191 = vmatpush2.msra.mxu0 %v2190
    %2192 = vmatprep.subr.mxu0 0.0
    %v2193 = vand.u32 %v1741, 4294901760
    %v2194 = vsub.f32 %v1741, %v2193
    %2195 = vmatpush2.msra.mxu0 %v2194
    %2196 = vmatprep.subr.mxu0 0.0
    %v2197 = vand.u32 %v1740, 4294901760
    %v2198 = vsub.f32 %v1740, %v2197
    %2199 = vmatpush2.msra.mxu0 %v2198
    %2200 = vmatprep.subr.mxu0 0.0
    %v2201 = vand.u32 %v1739, 4294901760
    %v2202 = vsub.f32 %v1739, %v2201
    %2203 = vmatpush2.msra.mxu0 %v2202
    %2204 = vmatprep.subr.mxu0 0.0
    %v2205 = vand.u32 %v1738, 4294901760
    %v2206 = vsub.f32 %v1738, %v2205
    %2207 = vmatpush2.msra.mxu0 %v2206
    %2208 = vmatprep.subr.mxu0 0.0
    %v2209 = vand.u32 %v1737, 4294901760
    %v2210 = vsub.f32 %v1737, %v2209
    %2211 = vmatpush2.msra.mxu0 %v2210
    %2212 = vmatprep.subr.mxu0 0.0
    %v2213 = vand.u32 %v1736, 4294901760
    %v2214 = vsub.f32 %v1736, %v2213
    %2215 = vmatpush2.msra.mxu0 %v2214
    %2216 = vmatprep.subr.mxu0 0.0
    %v2217 = vand.u32 %v1735, 4294901760
    %v2218 = vsub.f32 %v1735, %v2217
    %2219 = vmatpush2.msra.mxu0 %v2218
    %2220 = vmatprep.subr.mxu0 0.0
    %v2221 = vand.u32 %v1734, 4294901760
    %v2222 = vsub.f32 %v1734, %v2221
    %2223 = vmatpush2.msra.mxu0 %v2222
    %2224 = vmatprep.subr.mxu0 0.0
    %v2225 = vand.u32 %v1733, 4294901760
    %v2226 = vsub.f32 %v1733, %v2225
    %2227 = vmatpush2.msra.mxu0 %v2226
    %2228 = vmatprep.subr.mxu0 0.0
    %v2229 = vand.u32 %v1732, 4294901760
    %v2230 = vsub.f32 %v1732, %v2229
    %2231 = vmatpush2.msra.mxu0 %v2230
    %2232 = vmatprep.subr.mxu0 0.0
    %v2233 = vand.u32 %v1731, 4294901760
    %v2234 = vsub.f32 %v1731, %v2233
    %2235 = vmatpush2.msra.mxu0 %v2234
    %2236 = vmatprep.subr.mxu0 0.0
    %v2237 = vand.u32 %v1730, 4294901760
    %v2238 = vsub.f32 %v1730, %v2237
    %2239 = vmatpush2.msra.mxu0 %v2238
    %2240 = vmatprep.subr.mxu0 0.0
    %v2241 = vand.u32 %v1729, 4294901760
    %v2242 = vsub.f32 %v1729, %v2241
    %2243 = vmatpush2.msra.mxu0 %v2242
    %2244 = vmatprep.subr.mxu0 0.0
    %v2245 = vand.u32 %v1728, 4294901760
    %v2246 = vsub.f32 %v1728, %v2245
    %2247 = vmatpush2.msra.mxu0 %v2246
    %v2248 = vand.u32 %v1709, 4294901760
    %v2249 = vsub.f32 %v1709, %v2248
    %2250 = vmatprep.mubr.f32.mxu0 %v2249
    %v2251 = vand.u32 %v1708, 4294901760
    %v2252 = vsub.f32 %v1708, %v2251
    %2253 = vmatmul.mubr.f32.gmra.mxu0 %v2252
    %v2254 = vpop.f32.mrf.mxu0
    %v2255 = vadd.f32 %v2117, %v2254
    %v2256 = vpop.f32.mrf.mxu0
    %2257 = vdwg.mxu0
    %2258 = vmatprep.subr.mxu0 0.0
    %v2259 = vand.u32 %v1727, 4294901760
    %2260 = vmatpush1.msra.mxu0 %v2259
    %2261 = vmatprep.subr.mxu0 0.0
    %v2262 = vand.u32 %v1726, 4294901760
    %2263 = vmatpush1.msra.mxu0 %v2262
    %2264 = vmatprep.subr.mxu0 0.0
    %v2265 = vand.u32 %v1725, 4294901760
    %2266 = vmatpush1.msra.mxu0 %v2265
    %2267 = vmatprep.subr.mxu0 0.0
    %v2268 = vand.u32 %v1724, 4294901760
    %2269 = vmatpush1.msra.mxu0 %v2268
    %2270 = vmatprep.subr.mxu0 0.0
    %v2271 = vand.u32 %v1723, 4294901760
    %2272 = vmatpush1.msra.mxu0 %v2271
    %2273 = vmatprep.subr.mxu0 0.0
    %v2274 = vand.u32 %v1722, 4294901760
    %2275 = vmatpush1.msra.mxu0 %v2274
    %2276 = vmatprep.subr.mxu0 0.0
    %v2277 = vand.u32 %v1721, 4294901760
    %2278 = vmatpush1.msra.mxu0 %v2277
    %2279 = vmatprep.subr.mxu0 0.0
    %v2280 = vand.u32 %v1720, 4294901760
    %2281 = vmatpush1.msra.mxu0 %v2280
    %2282 = vmatprep.subr.mxu0 0.0
    %v2283 = vand.u32 %v1719, 4294901760
    %2284 = vmatpush1.msra.mxu0 %v2283
    %2285 = vmatprep.subr.mxu0 0.0
    %v2286 = vand.u32 %v1718, 4294901760
    %2287 = vmatpush1.msra.mxu0 %v2286
    %2288 = vmatprep.subr.mxu0 0.0
    %v2289 = vand.u32 %v1717, 4294901760
    %2290 = vmatpush1.msra.mxu0 %v2289
    %2291 = vmatprep.subr.mxu0 0.0
    %v2292 = vand.u32 %v1716, 4294901760
    %2293 = vmatpush1.msra.mxu0 %v2292
    %2294 = vmatprep.subr.mxu0 0.0
    %v2295 = vand.u32 %v1715, 4294901760
    %2296 = vmatpush1.msra.mxu0 %v2295
    %2297 = vmatprep.subr.mxu0 0.0
    %v2298 = vand.u32 %v1714, 4294901760
    %2299 = vmatpush1.msra.mxu0 %v2298
    %2300 = vmatprep.subr.mxu0 0.0
    %v2301 = vand.u32 %v1713, 4294901760
    %2302 = vmatpush1.msra.mxu0 %v2301
    %2303 = vmatprep.subr.mxu0 0.0
    %v2304 = vand.u32 %v1712, 4294901760
    %2305 = vmatpush1.msra.mxu0 %v2304
    %2306 = vmatprep.subr.mxu0 0.0
    %v2307 = vand.u32 %v1743, 4294901760
    %2308 = vmatpush2.msra.mxu0 %v2307
    %2309 = vmatprep.subr.mxu0 0.0
    %v2310 = vand.u32 %v1742, 4294901760
    %2311 = vmatpush2.msra.mxu0 %v2310
    %2312 = vmatprep.subr.mxu0 0.0
    %v2313 = vand.u32 %v1741, 4294901760
    %2314 = vmatpush2.msra.mxu0 %v2313
    %2315 = vmatprep.subr.mxu0 0.0
    %v2316 = vand.u32 %v1740, 4294901760
    %2317 = vmatpush2.msra.mxu0 %v2316
    %2318 = vmatprep.subr.mxu0 0.0
    %v2319 = vand.u32 %v1739, 4294901760
    %2320 = vmatpush2.msra.mxu0 %v2319
    %2321 = vmatprep.subr.mxu0 0.0
    %v2322 = vand.u32 %v1738, 4294901760
    %2323 = vmatpush2.msra.mxu0 %v2322
    %2324 = vmatprep.subr.mxu0 0.0
    %v2325 = vand.u32 %v1737, 4294901760
    %2326 = vmatpush2.msra.mxu0 %v2325
    %2327 = vmatprep.subr.mxu0 0.0
    %v2328 = vand.u32 %v1736, 4294901760
    %2329 = vmatpush2.msra.mxu0 %v2328
    %2330 = vmatprep.subr.mxu0 0.0
    %v2331 = vand.u32 %v1735, 4294901760
    %2332 = vmatpush2.msra.mxu0 %v2331
    %2333 = vmatprep.subr.mxu0 0.0
    %v2334 = vand.u32 %v1734, 4294901760
    %2335 = vmatpush2.msra.mxu0 %v2334
    %2336 = vmatprep.subr.mxu0 0.0
    %v2337 = vand.u32 %v1733, 4294901760
    %2338 = vmatpush2.msra.mxu0 %v2337
    %2339 = vmatprep.subr.mxu0 0.0
    %v2340 = vand.u32 %v1732, 4294901760
    %2341 = vmatpush2.msra.mxu0 %v2340
    %2342 = vmatprep.subr.mxu0 0.0
    %v2343 = vand.u32 %v1731, 4294901760
    %2344 = vmatpush2.msra.mxu0 %v2343
    %2345 = vmatprep.subr.mxu0 0.0
    %v2346 = vand.u32 %v1730, 4294901760
    %2347 = vmatpush2.msra.mxu0 %v2346
    %2348 = vmatprep.subr.mxu0 0.0
    %v2349 = vand.u32 %v1729, 4294901760
    %2350 = vmatpush2.msra.mxu0 %v2349
    %2351 = vmatprep.subr.mxu0 0.0
    %v2352 = vand.u32 %v1728, 4294901760
    %2353 = vmatpush2.msra.mxu0 %v2352
    %v2354 = vand.u32 %v1709, 4294901760
    %v2355 = vsub.f32 %v1709, %v2354
    %v2356 = vand.u32 %v2355, 4294901760
    %2357 = vmatprep.mubr.f32.mxu0 %v2356
    %v2358 = vand.u32 %v1708, 4294901760
    %v2359 = vsub.f32 %v1708, %v2358
    %v2360 = vand.u32 %v2359, 4294901760
    %2361 = vmatmul.mubr.f32.gmra.mxu0 %v2360
    %v2362 = vpop.f32.mrf.mxu0
    %v2363 = vadd.f32 %v2255, %v2362
    %v2364 = vpop.f32.mrf.mxu0
    %2365 = vdwg.mxu0
    %2366 = vmatprep.subr.mxu0 0.0
    %v2367 = vand.u32 %v1727, 4294901760
    %v2368 = vsub.f32 %v1727, %v2367
    %v2369 = vand.u32 %v2368, 4294901760
    %2370 = vmatpush1.msra.mxu0 %v2369
    %2371 = vmatprep.subr.mxu0 0.0
    %v2372 = vand.u32 %v1726, 4294901760
    %v2373 = vsub.f32 %v1726, %v2372
    %v2374 = vand.u32 %v2373, 4294901760
    %2375 = vmatpush1.msra.mxu0 %v2374
    %2376 = vmatprep.subr.mxu0 0.0
    %v2377 = vand.u32 %v1725, 4294901760
    %v2378 = vsub.f32 %v1725, %v2377
    %v2379 = vand.u32 %v2378, 4294901760
    %2380 = vmatpush1.msra.mxu0 %v2379
    %2381 = vmatprep.subr.mxu0 0.0
    %v2382 = vand.u32 %v1724, 4294901760
    %v2383 = vsub.f32 %v1724, %v2382
    %v2384 = vand.u32 %v2383, 4294901760
    %2385 = vmatpush1.msra.mxu0 %v2384
    %2386 = vmatprep.subr.mxu0 0.0
    %v2387 = vand.u32 %v1723, 4294901760
    %v2388 = vsub.f32 %v1723, %v2387
    %v2389 = vand.u32 %v2388, 4294901760
    %2390 = vmatpush1.msra.mxu0 %v2389
    %2391 = vmatprep.subr.mxu0 0.0
    %v2392 = vand.u32 %v1722, 4294901760
    %v2393 = vsub.f32 %v1722, %v2392
    %v2394 = vand.u32 %v2393, 4294901760
    %2395 = vmatpush1.msra.mxu0 %v2394
    %2396 = vmatprep.subr.mxu0 0.0
    %v2397 = vand.u32 %v1721, 4294901760
    %v2398 = vsub.f32 %v1721, %v2397
    %v2399 = vand.u32 %v2398, 4294901760
    %2400 = vmatpush1.msra.mxu0 %v2399
    %2401 = vmatprep.subr.mxu0 0.0
    %v2402 = vand.u32 %v1720, 4294901760
    %v2403 = vsub.f32 %v1720, %v2402
    %v2404 = vand.u32 %v2403, 4294901760
    %2405 = vmatpush1.msra.mxu0 %v2404
    %2406 = vmatprep.subr.mxu0 0.0
    %v2407 = vand.u32 %v1719, 4294901760
    %v2408 = vsub.f32 %v1719, %v2407
    %v2409 = vand.u32 %v2408, 4294901760
    %2410 = vmatpush1.msra.mxu0 %v2409
    %2411 = vmatprep.subr.mxu0 0.0
    %v2412 = vand.u32 %v1718, 4294901760
    %v2413 = vsub.f32 %v1718, %v2412
    %v2414 = vand.u32 %v2413, 4294901760
    %2415 = vmatpush1.msra.mxu0 %v2414
    %2416 = vmatprep.subr.mxu0 0.0
    %v2417 = vand.u32 %v1717, 4294901760
    %v2418 = vsub.f32 %v1717, %v2417
    %v2419 = vand.u32 %v2418, 4294901760
    %2420 = vmatpush1.msra.mxu0 %v2419
    %2421 = vmatprep.subr.mxu0 0.0
    %v2422 = vand.u32 %v1716, 4294901760
    %v2423 = vsub.f32 %v1716, %v2422
    %v2424 = vand.u32 %v2423, 4294901760
    %2425 = vmatpush1.msra.mxu0 %v2424
    %2426 = vmatprep.subr.mxu0 0.0
    %v2427 = vand.u32 %v1715, 4294901760
    %v2428 = vsub.f32 %v1715, %v2427
    %v2429 = vand.u32 %v2428, 4294901760
    %2430 = vmatpush1.msra.mxu0 %v2429
    %2431 = vmatprep.subr.mxu0 0.0
    %v2432 = vand.u32 %v1714, 4294901760
    %v2433 = vsub.f32 %v1714, %v2432
    %v2434 = vand.u32 %v2433, 4294901760
    %2435 = vmatpush1.msra.mxu0 %v2434
    %2436 = vmatprep.subr.mxu0 0.0
    %v2437 = vand.u32 %v1713, 4294901760
    %v2438 = vsub.f32 %v1713, %v2437
    %v2439 = vand.u32 %v2438, 4294901760
    %2440 = vmatpush1.msra.mxu0 %v2439
    %2441 = vmatprep.subr.mxu0 0.0
    %v2442 = vand.u32 %v1712, 4294901760
    %v2443 = vsub.f32 %v1712, %v2442
    %v2444 = vand.u32 %v2443, 4294901760
    %2445 = vmatpush1.msra.mxu0 %v2444
    %2446 = vmatprep.subr.mxu0 0.0
    %v2447 = vand.u32 %v1743, 4294901760
    %v2448 = vsub.f32 %v1743, %v2447
    %v2449 = vand.u32 %v2448, 4294901760
    %2450 = vmatpush2.msra.mxu0 %v2449
    %2451 = vmatprep.subr.mxu0 0.0
    %v2452 = vand.u32 %v1742, 4294901760
    %v2453 = vsub.f32 %v1742, %v2452
    %v2454 = vand.u32 %v2453, 4294901760
    %2455 = vmatpush2.msra.mxu0 %v2454
    %2456 = vmatprep.subr.mxu0 0.0
    %v2457 = vand.u32 %v1741, 4294901760
    %v2458 = vsub.f32 %v1741, %v2457
    %v2459 = vand.u32 %v2458, 4294901760
    %2460 = vmatpush2.msra.mxu0 %v2459
    %2461 = vmatprep.subr.mxu0 0.0
    %v2462 = vand.u32 %v1740, 4294901760
    %v2463 = vsub.f32 %v1740, %v2462
    %v2464 = vand.u32 %v2463, 4294901760
    %2465 = vmatpush2.msra.mxu0 %v2464
    %2466 = vmatprep.subr.mxu0 0.0
    %v2467 = vand.u32 %v1739, 4294901760
    %v2468 = vsub.f32 %v1739, %v2467
    %v2469 = vand.u32 %v2468, 4294901760
    %2470 = vmatpush2.msra.mxu0 %v2469
    %2471 = vmatprep.subr.mxu0 0.0
    %v2472 = vand.u32 %v1738, 4294901760
    %v2473 = vsub.f32 %v1738, %v2472
    %v2474 = vand.u32 %v2473, 4294901760
    %2475 = vmatpush2.msra.mxu0 %v2474
    %2476 = vmatprep.subr.mxu0 0.0
    %v2477 = vand.u32 %v1737, 4294901760
    %v2478 = vsub.f32 %v1737, %v2477
    %v2479 = vand.u32 %v2478, 4294901760
    %2480 = vmatpush2.msra.mxu0 %v2479
    %2481 = vmatprep.subr.mxu0 0.0
    %v2482 = vand.u32 %v1736, 4294901760
    %v2483 = vsub.f32 %v1736, %v2482
    %v2484 = vand.u32 %v2483, 4294901760
    %2485 = vmatpush2.msra.mxu0 %v2484
    %2486 = vmatprep.subr.mxu0 0.0
    %v2487 = vand.u32 %v1735, 4294901760
    %v2488 = vsub.f32 %v1735, %v2487
    %v2489 = vand.u32 %v2488, 4294901760
    %2490 = vmatpush2.msra.mxu0 %v2489
    %2491 = vmatprep.subr.mxu0 0.0
    %v2492 = vand.u32 %v1734, 4294901760
    %v2493 = vsub.f32 %v1734, %v2492
    %v2494 = vand.u32 %v2493, 4294901760
    %2495 = vmatpush2.msra.mxu0 %v2494
    %2496 = vmatprep.subr.mxu0 0.0
    %v2497 = vand.u32 %v1733, 4294901760
    %v2498 = vsub.f32 %v1733, %v2497
    %v2499 = vand.u32 %v2498, 4294901760
    %2500 = vmatpush2.msra.mxu0 %v2499
    %2501 = vmatprep.subr.mxu0 0.0
    %v2502 = vand.u32 %v1732, 4294901760
    %v2503 = vsub.f32 %v1732, %v2502
    %v2504 = vand.u32 %v2503, 4294901760
    %2505 = vmatpush2.msra.mxu0 %v2504
    %2506 = vmatprep.subr.mxu0 0.0
    %v2507 = vand.u32 %v1731, 4294901760
    %v2508 = vsub.f32 %v1731, %v2507
    %v2509 = vand.u32 %v2508, 4294901760
    %2510 = vmatpush2.msra.mxu0 %v2509
    %2511 = vmatprep.subr.mxu0 0.0
    %v2512 = vand.u32 %v1730, 4294901760
    %v2513 = vsub.f32 %v1730, %v2512
    %v2514 = vand.u32 %v2513, 4294901760
    %2515 = vmatpush2.msra.mxu0 %v2514
    %2516 = vmatprep.subr.mxu0 0.0
    %v2517 = vand.u32 %v1729, 4294901760
    %v2518 = vsub.f32 %v1729, %v2517
    %v2519 = vand.u32 %v2518, 4294901760
    %2520 = vmatpush2.msra.mxu0 %v2519
    %2521 = vmatprep.subr.mxu0 0.0
    %v2522 = vand.u32 %v1728, 4294901760
    %v2523 = vsub.f32 %v1728, %v2522
    %v2524 = vand.u32 %v2523, 4294901760
    %2525 = vmatpush2.msra.mxu0 %v2524
    %v2526 = vand.u32 %v1709, 4294901760
    %2527 = vmatprep.mubr.f32.mxu0 %v2526
    %v2528 = vand.u32 %v1708, 4294901760
    %2529 = vmatmul.mubr.f32.gmra.mxu0 %v2528
    %v2530 = vpop.f32.mrf.mxu0
    %v2531 = vadd.f32 %v2363, %v2530
    %v2532 = vpop.f32.mrf.mxu0
    %2533 = vdwg.mxu0
    %2534 = vmatprep.subr.mxu0 0.0
    %v2535 = vand.u32 %v1727, 4294901760
    %2536 = vmatpush1.msra.mxu0 %v2535
    %2537 = vmatprep.subr.mxu0 0.0
    %v2538 = vand.u32 %v1726, 4294901760
    %2539 = vmatpush1.msra.mxu0 %v2538
    %2540 = vmatprep.subr.mxu0 0.0
    %v2541 = vand.u32 %v1725, 4294901760
    %2542 = vmatpush1.msra.mxu0 %v2541
    %2543 = vmatprep.subr.mxu0 0.0
    %v2544 = vand.u32 %v1724, 4294901760
    %2545 = vmatpush1.msra.mxu0 %v2544
    %2546 = vmatprep.subr.mxu0 0.0
    %v2547 = vand.u32 %v1723, 4294901760
    %2548 = vmatpush1.msra.mxu0 %v2547
    %2549 = vmatprep.subr.mxu0 0.0
    %v2550 = vand.u32 %v1722, 4294901760
    %2551 = vmatpush1.msra.mxu0 %v2550
    %2552 = vmatprep.subr.mxu0 0.0
    %v2553 = vand.u32 %v1721, 4294901760
    %2554 = vmatpush1.msra.mxu0 %v2553
    %2555 = vmatprep.subr.mxu0 0.0
    %v2556 = vand.u32 %v1720, 4294901760
    %2557 = vmatpush1.msra.mxu0 %v2556
    %2558 = vmatprep.subr.mxu0 0.0
    %v2559 = vand.u32 %v1719, 4294901760
    %2560 = vmatpush1.msra.mxu0 %v2559
    %2561 = vmatprep.subr.mxu0 0.0
    %v2562 = vand.u32 %v1718, 4294901760
    %2563 = vmatpush1.msra.mxu0 %v2562
    %2564 = vmatprep.subr.mxu0 0.0
    %v2565 = vand.u32 %v1717, 4294901760
    %2566 = vmatpush1.msra.mxu0 %v2565
    %2567 = vmatprep.subr.mxu0 0.0
    %v2568 = vand.u32 %v1716, 4294901760
    %2569 = vmatpush1.msra.mxu0 %v2568
    %2570 = vmatprep.subr.mxu0 0.0
    %v2571 = vand.u32 %v1715, 4294901760
    %2572 = vmatpush1.msra.mxu0 %v2571
    %2573 = vmatprep.subr.mxu0 0.0
    %v2574 = vand.u32 %v1714, 4294901760
    %2575 = vmatpush1.msra.mxu0 %v2574
    %2576 = vmatprep.subr.mxu0 0.0
    %v2577 = vand.u32 %v1713, 4294901760
    %2578 = vmatpush1.msra.mxu0 %v2577
    %2579 = vmatprep.subr.mxu0 0.0
    %v2580 = vand.u32 %v1712, 4294901760
    %2581 = vmatpush1.msra.mxu0 %v2580
    %2582 = vmatprep.subr.mxu0 0.0
    %v2583 = vand.u32 %v1743, 4294901760
    %2584 = vmatpush2.msra.mxu0 %v2583
    %2585 = vmatprep.subr.mxu0 0.0
    %v2586 = vand.u32 %v1742, 4294901760
    %2587 = vmatpush2.msra.mxu0 %v2586
    %2588 = vmatprep.subr.mxu0 0.0
    %v2589 = vand.u32 %v1741, 4294901760
    %2590 = vmatpush2.msra.mxu0 %v2589
    %2591 = vmatprep.subr.mxu0 0.0
    %v2592 = vand.u32 %v1740, 4294901760
    %2593 = vmatpush2.msra.mxu0 %v2592
    %2594 = vmatprep.subr.mxu0 0.0
    %v2595 = vand.u32 %v1739, 4294901760
    %2596 = vmatpush2.msra.mxu0 %v2595
    %2597 = vmatprep.subr.mxu0 0.0
    %v2598 = vand.u32 %v1738, 4294901760
    %2599 = vmatpush2.msra.mxu0 %v2598
    %2600 = vmatprep.subr.mxu0 0.0
    %v2601 = vand.u32 %v1737, 4294901760
    %2602 = vmatpush2.msra.mxu0 %v2601
    %2603 = vmatprep.subr.mxu0 0.0
    %v2604 = vand.u32 %v1736, 4294901760
    %2605 = vmatpush2.msra.mxu0 %v2604
    %2606 = vmatprep.subr.mxu0 0.0
    %v2607 = vand.u32 %v1735, 4294901760
    %2608 = vmatpush2.msra.mxu0 %v2607
    %2609 = vmatprep.subr.mxu0 0.0
    %v2610 = vand.u32 %v1734, 4294901760
    %2611 = vmatpush2.msra.mxu0 %v2610
    %2612 = vmatprep.subr.mxu0 0.0
    %v2613 = vand.u32 %v1733, 4294901760
    %2614 = vmatpush2.msra.mxu0 %v2613
    %2615 = vmatprep.subr.mxu0 0.0
    %v2616 = vand.u32 %v1732, 4294901760
    %2617 = vmatpush2.msra.mxu0 %v2616
    %2618 = vmatprep.subr.mxu0 0.0
    %v2619 = vand.u32 %v1731, 4294901760
    %2620 = vmatpush2.msra.mxu0 %v2619
    %2621 = vmatprep.subr.mxu0 0.0
    %v2622 = vand.u32 %v1730, 4294901760
    %2623 = vmatpush2.msra.mxu0 %v2622
    %2624 = vmatprep.subr.mxu0 0.0
    %v2625 = vand.u32 %v1729, 4294901760
    %2626 = vmatpush2.msra.mxu0 %v2625
    %2627 = vmatprep.subr.mxu0 0.0
    %v2628 = vand.u32 %v1728, 4294901760
    %2629 = vmatpush2.msra.mxu0 %v2628
    %v2630 = vand.u32 %v1709, 4294901760
    %2631 = vmatprep.mubr.f32.mxu0 %v2630
    %v2632 = vand.u32 %v1708, 4294901760
    %2633 = vmatmul.mubr.f32.gmra.mxu0 %v2632
    %v2634 = vpop.f32.mrf.mxu0
    %v2635 = vadd.f32 %v2531, %v2634
    %v2636 = vpop.f32.mrf.mxu0
    %2637 = vdwg.mxu0
    %2638 = vmatprep.subr.mxu0 0.0
    %v2639 = vand.u32 %v1759, 4294901760
    %2640 = vmatpush1.msra.mxu0 %v2639
    %2641 = vmatprep.subr.mxu0 0.0
    %v2642 = vand.u32 %v1758, 4294901760
    %2643 = vmatpush1.msra.mxu0 %v2642
    %2644 = vmatprep.subr.mxu0 0.0
    %v2645 = vand.u32 %v1757, 4294901760
    %2646 = vmatpush1.msra.mxu0 %v2645
    %2647 = vmatprep.subr.mxu0 0.0
    %v2648 = vand.u32 %v1756, 4294901760
    %2649 = vmatpush1.msra.mxu0 %v2648
    %2650 = vmatprep.subr.mxu0 0.0
    %v2651 = vand.u32 %v1755, 4294901760
    %2652 = vmatpush1.msra.mxu0 %v2651
    %2653 = vmatprep.subr.mxu0 0.0
    %v2654 = vand.u32 %v1754, 4294901760
    %2655 = vmatpush1.msra.mxu0 %v2654
    %2656 = vmatprep.subr.mxu0 0.0
    %v2657 = vand.u32 %v1753, 4294901760
    %2658 = vmatpush1.msra.mxu0 %v2657
    %2659 = vmatprep.subr.mxu0 0.0
    %v2660 = vand.u32 %v1752, 4294901760
    %2661 = vmatpush1.msra.mxu0 %v2660
    %2662 = vmatprep.subr.mxu0 0.0
    %v2663 = vand.u32 %v1751, 4294901760
    %2664 = vmatpush1.msra.mxu0 %v2663
    %2665 = vmatprep.subr.mxu0 0.0
    %v2666 = vand.u32 %v1750, 4294901760
    %2667 = vmatpush1.msra.mxu0 %v2666
    %2668 = vmatprep.subr.mxu0 0.0
    %v2669 = vand.u32 %v1749, 4294901760
    %2670 = vmatpush1.msra.mxu0 %v2669
    %2671 = vmatprep.subr.mxu0 0.0
    %v2672 = vand.u32 %v1748, 4294901760
    %2673 = vmatpush1.msra.mxu0 %v2672
    %2674 = vmatprep.subr.mxu0 0.0
    %v2675 = vand.u32 %v1747, 4294901760
    %2676 = vmatpush1.msra.mxu0 %v2675
    %2677 = vmatprep.subr.mxu0 0.0
    %v2678 = vand.u32 %v1746, 4294901760
    %2679 = vmatpush1.msra.mxu0 %v2678
    %2680 = vmatprep.subr.mxu0 0.0
    %v2681 = vand.u32 %v1745, 4294901760
    %2682 = vmatpush1.msra.mxu0 %v2681
    %2683 = vmatprep.subr.mxu0 0.0
    %v2684 = vand.u32 %v1744, 4294901760
    %2685 = vmatpush1.msra.mxu0 %v2684
    %2686 = vmatprep.subr.mxu0 0.0
    %v2687 = vand.u32 %v1775, 4294901760
    %2688 = vmatpush2.msra.mxu0 %v2687
    %2689 = vmatprep.subr.mxu0 0.0
    %v2690 = vand.u32 %v1774, 4294901760
    %2691 = vmatpush2.msra.mxu0 %v2690
    %2692 = vmatprep.subr.mxu0 0.0
    %v2693 = vand.u32 %v1773, 4294901760
    %2694 = vmatpush2.msra.mxu0 %v2693
    %2695 = vmatprep.subr.mxu0 0.0
    %v2696 = vand.u32 %v1772, 4294901760
    %2697 = vmatpush2.msra.mxu0 %v2696
    %2698 = vmatprep.subr.mxu0 0.0
    %v2699 = vand.u32 %v1771, 4294901760
    %2700 = vmatpush2.msra.mxu0 %v2699
    %2701 = vmatprep.subr.mxu0 0.0
    %v2702 = vand.u32 %v1770, 4294901760
    %2703 = vmatpush2.msra.mxu0 %v2702
    %2704 = vmatprep.subr.mxu0 0.0
    %v2705 = vand.u32 %v1769, 4294901760
    %2706 = vmatpush2.msra.mxu0 %v2705
    %2707 = vmatprep.subr.mxu0 0.0
    %v2708 = vand.u32 %v1768, 4294901760
    %2709 = vmatpush2.msra.mxu0 %v2708
    %2710 = vmatprep.subr.mxu0 0.0
    %v2711 = vand.u32 %v1767, 4294901760
    %2712 = vmatpush2.msra.mxu0 %v2711
    %2713 = vmatprep.subr.mxu0 0.0
    %v2714 = vand.u32 %v1766, 4294901760
    %2715 = vmatpush2.msra.mxu0 %v2714
    %2716 = vmatprep.subr.mxu0 0.0
    %v2717 = vand.u32 %v1765, 4294901760
    %2718 = vmatpush2.msra.mxu0 %v2717
    %2719 = vmatprep.subr.mxu0 0.0
    %v2720 = vand.u32 %v1764, 4294901760
    %2721 = vmatpush2.msra.mxu0 %v2720
    %2722 = vmatprep.subr.mxu0 0.0
    %v2723 = vand.u32 %v1763, 4294901760
    %2724 = vmatpush2.msra.mxu0 %v2723
    %2725 = vmatprep.subr.mxu0 0.0
    %v2726 = vand.u32 %v1762, 4294901760
    %2727 = vmatpush2.msra.mxu0 %v2726
    %2728 = vmatprep.subr.mxu0 0.0
    %v2729 = vand.u32 %v1761, 4294901760
    %2730 = vmatpush2.msra.mxu0 %v2729
    %2731 = vmatprep.subr.mxu0 0.0
    %v2732 = vand.u32 %v1760, 4294901760
    %2733 = vmatpush2.msra.mxu0 %v2732
    %v2734 = vand.u32 %v1711, 4294901760
    %v2735 = vsub.f32 %v1711, %v2734
    %v2736 = vand.u32 %v2735, 4294901760
    %v2737 = vsub.f32 %v2735, %v2736
    %v2738 = vand.u32 %v2737, 4294901760
    %2739 = vmatprep.mubr.f32.mxu0 %v2738
    %v2740 = vand.u32 %v1710, 4294901760
    %v2741 = vsub.f32 %v1710, %v2740
    %v2742 = vand.u32 %v2741, 4294901760
    %v2743 = vsub.f32 %v2741, %v2742
    %v2744 = vand.u32 %v2743, 4294901760
    %2745 = vmatmul.mubr.f32.gmra.mxu0 %v2744
    %v2746 = vpop.f32.mrf.mxu0
    %v2747 = vadd.f32 %v2635, %v2746
    %v2748 = vpop.f32.mrf.mxu0
    %2749 = vdwg.mxu0
    %2750 = vmatprep.subr.mxu0 0.0
    %v2751 = vand.u32 %v1759, 4294901760
    %v2752 = vsub.f32 %v1759, %v2751
    %v2753 = vand.u32 %v2752, 4294901760
    %v2754 = vsub.f32 %v2752, %v2753
    %v2755 = vand.u32 %v2754, 4294901760
    %2756 = vmatpush1.msra.mxu0 %v2755
    %2757 = vmatprep.subr.mxu0 0.0
    %v2758 = vand.u32 %v1758, 4294901760
    %v2759 = vsub.f32 %v1758, %v2758
    %v2760 = vand.u32 %v2759, 4294901760
    %v2761 = vsub.f32 %v2759, %v2760
    %v2762 = vand.u32 %v2761, 4294901760
    %2763 = vmatpush1.msra.mxu0 %v2762
    %2764 = vmatprep.subr.mxu0 0.0
    %v2765 = vand.u32 %v1757, 4294901760
    %v2766 = vsub.f32 %v1757, %v2765
    %v2767 = vand.u32 %v2766, 4294901760
    %v2768 = vsub.f32 %v2766, %v2767
    %v2769 = vand.u32 %v2768, 4294901760
    %2770 = vmatpush1.msra.mxu0 %v2769
    %2771 = vmatprep.subr.mxu0 0.0
    %v2772 = vand.u32 %v1756, 4294901760
    %v2773 = vsub.f32 %v1756, %v2772
    %v2774 = vand.u32 %v2773, 4294901760
    %v2775 = vsub.f32 %v2773, %v2774
    %v2776 = vand.u32 %v2775, 4294901760
    %2777 = vmatpush1.msra.mxu0 %v2776
    %2778 = vmatprep.subr.mxu0 0.0
    %v2779 = vand.u32 %v1755, 4294901760
    %v2780 = vsub.f32 %v1755, %v2779
    %v2781 = vand.u32 %v2780, 4294901760
    %v2782 = vsub.f32 %v2780, %v2781
    %v2783 = vand.u32 %v2782, 4294901760
    %2784 = vmatpush1.msra.mxu0 %v2783
    %2785 = vmatprep.subr.mxu0 0.0
    %v2786 = vand.u32 %v1754, 4294901760
    %v2787 = vsub.f32 %v1754, %v2786
    %v2788 = vand.u32 %v2787, 4294901760
    %v2789 = vsub.f32 %v2787, %v2788
    %v2790 = vand.u32 %v2789, 4294901760
    %2791 = vmatpush1.msra.mxu0 %v2790
    %2792 = vmatprep.subr.mxu0 0.0
    %v2793 = vand.u32 %v1753, 4294901760
    %v2794 = vsub.f32 %v1753, %v2793
    %v2795 = vand.u32 %v2794, 4294901760
    %v2796 = vsub.f32 %v2794, %v2795
    %v2797 = vand.u32 %v2796, 4294901760
    %2798 = vmatpush1.msra.mxu0 %v2797
    %2799 = vmatprep.subr.mxu0 0.0
    %v2800 = vand.u32 %v1752, 4294901760
    %v2801 = vsub.f32 %v1752, %v2800
    %v2802 = vand.u32 %v2801, 4294901760
    %v2803 = vsub.f32 %v2801, %v2802
    %v2804 = vand.u32 %v2803, 4294901760
    %2805 = vmatpush1.msra.mxu0 %v2804
    %2806 = vmatprep.subr.mxu0 0.0
    %v2807 = vand.u32 %v1751, 4294901760
    %v2808 = vsub.f32 %v1751, %v2807
    %v2809 = vand.u32 %v2808, 4294901760
    %v2810 = vsub.f32 %v2808, %v2809
    %v2811 = vand.u32 %v2810, 4294901760
    %2812 = vmatpush1.msra.mxu0 %v2811
    %2813 = vmatprep.subr.mxu0 0.0
    %v2814 = vand.u32 %v1750, 4294901760
    %v2815 = vsub.f32 %v1750, %v2814
    %v2816 = vand.u32 %v2815, 4294901760
    %v2817 = vsub.f32 %v2815, %v2816
    %v2818 = vand.u32 %v2817, 4294901760
    %2819 = vmatpush1.msra.mxu0 %v2818
    %2820 = vmatprep.subr.mxu0 0.0
    %v2821 = vand.u32 %v1749, 4294901760
    %v2822 = vsub.f32 %v1749, %v2821
    %v2823 = vand.u32 %v2822, 4294901760
    %v2824 = vsub.f32 %v2822, %v2823
    %v2825 = vand.u32 %v2824, 4294901760
    %2826 = vmatpush1.msra.mxu0 %v2825
    %2827 = vmatprep.subr.mxu0 0.0
    %v2828 = vand.u32 %v1748, 4294901760
    %v2829 = vsub.f32 %v1748, %v2828
    %v2830 = vand.u32 %v2829, 4294901760
    %v2831 = vsub.f32 %v2829, %v2830
    %v2832 = vand.u32 %v2831, 4294901760
    %2833 = vmatpush1.msra.mxu0 %v2832
    %2834 = vmatprep.subr.mxu0 0.0
    %v2835 = vand.u32 %v1747, 4294901760
    %v2836 = vsub.f32 %v1747, %v2835
    %v2837 = vand.u32 %v2836, 4294901760
    %v2838 = vsub.f32 %v2836, %v2837
    %v2839 = vand.u32 %v2838, 4294901760
    %2840 = vmatpush1.msra.mxu0 %v2839
    %2841 = vmatprep.subr.mxu0 0.0
    %v2842 = vand.u32 %v1746, 4294901760
    %v2843 = vsub.f32 %v1746, %v2842
    %v2844 = vand.u32 %v2843, 4294901760
    %v2845 = vsub.f32 %v2843, %v2844
    %v2846 = vand.u32 %v2845, 4294901760
    %2847 = vmatpush1.msra.mxu0 %v2846
    %2848 = vmatprep.subr.mxu0 0.0
    %v2849 = vand.u32 %v1745, 4294901760
    %v2850 = vsub.f32 %v1745, %v2849
    %v2851 = vand.u32 %v2850, 4294901760
    %v2852 = vsub.f32 %v2850, %v2851
    %v2853 = vand.u32 %v2852, 4294901760
    %2854 = vmatpush1.msra.mxu0 %v2853
    %2855 = vmatprep.subr.mxu0 0.0
    %v2856 = vand.u32 %v1744, 4294901760
    %v2857 = vsub.f32 %v1744, %v2856
    %v2858 = vand.u32 %v2857, 4294901760
    %v2859 = vsub.f32 %v2857, %v2858
    %v2860 = vand.u32 %v2859, 4294901760
    %2861 = vmatpush1.msra.mxu0 %v2860
    %2862 = vmatprep.subr.mxu0 0.0
    %v2863 = vand.u32 %v1775, 4294901760
    %v2864 = vsub.f32 %v1775, %v2863
    %v2865 = vand.u32 %v2864, 4294901760
    %v2866 = vsub.f32 %v2864, %v2865
    %v2867 = vand.u32 %v2866, 4294901760
    %2868 = vmatpush2.msra.mxu0 %v2867
    %2869 = vmatprep.subr.mxu0 0.0
    %v2870 = vand.u32 %v1774, 4294901760
    %v2871 = vsub.f32 %v1774, %v2870
    %v2872 = vand.u32 %v2871, 4294901760
    %v2873 = vsub.f32 %v2871, %v2872
    %v2874 = vand.u32 %v2873, 4294901760
    %2875 = vmatpush2.msra.mxu0 %v2874
    %2876 = vmatprep.subr.mxu0 0.0
    %v2877 = vand.u32 %v1773, 4294901760
    %v2878 = vsub.f32 %v1773, %v2877
    %v2879 = vand.u32 %v2878, 4294901760
    %v2880 = vsub.f32 %v2878, %v2879
    %v2881 = vand.u32 %v2880, 4294901760
    %2882 = vmatpush2.msra.mxu0 %v2881
    %2883 = vmatprep.subr.mxu0 0.0
    %v2884 = vand.u32 %v1772, 4294901760
    %v2885 = vsub.f32 %v1772, %v2884
    %v2886 = vand.u32 %v2885, 4294901760
    %v2887 = vsub.f32 %v2885, %v2886
    %v2888 = vand.u32 %v2887, 4294901760
    %2889 = vmatpush2.msra.mxu0 %v2888
    %2890 = vmatprep.subr.mxu0 0.0
    %v2891 = vand.u32 %v1771, 4294901760
    %v2892 = vsub.f32 %v1771, %v2891
    %v2893 = vand.u32 %v2892, 4294901760
    %v2894 = vsub.f32 %v2892, %v2893
    %v2895 = vand.u32 %v2894, 4294901760
    %2896 = vmatpush2.msra.mxu0 %v2895
    %2897 = vmatprep.subr.mxu0 0.0
    %v2898 = vand.u32 %v1770, 4294901760
    %v2899 = vsub.f32 %v1770, %v2898
    %v2900 = vand.u32 %v2899, 4294901760
    %v2901 = vsub.f32 %v2899, %v2900
    %v2902 = vand.u32 %v2901, 4294901760
    %2903 = vmatpush2.msra.mxu0 %v2902
    %2904 = vmatprep.subr.mxu0 0.0
    %v2905 = vand.u32 %v1769, 4294901760
    %v2906 = vsub.f32 %v1769, %v2905
    %v2907 = vand.u32 %v2906, 4294901760
    %v2908 = vsub.f32 %v2906, %v2907
    %v2909 = vand.u32 %v2908, 4294901760
    %2910 = vmatpush2.msra.mxu0 %v2909
    %2911 = vmatprep.subr.mxu0 0.0
    %v2912 = vand.u32 %v1768, 4294901760
    %v2913 = vsub.f32 %v1768, %v2912
    %v2914 = vand.u32 %v2913, 4294901760
    %v2915 = vsub.f32 %v2913, %v2914
    %v2916 = vand.u32 %v2915, 4294901760
    %2917 = vmatpush2.msra.mxu0 %v2916
    %2918 = vmatprep.subr.mxu0 0.0
    %v2919 = vand.u32 %v1767, 4294901760
    %v2920 = vsub.f32 %v1767, %v2919
    %v2921 = vand.u32 %v2920, 4294901760
    %v2922 = vsub.f32 %v2920, %v2921
    %v2923 = vand.u32 %v2922, 4294901760
    %2924 = vmatpush2.msra.mxu0 %v2923
    %2925 = vmatprep.subr.mxu0 0.0
    %v2926 = vand.u32 %v1766, 4294901760
    %v2927 = vsub.f32 %v1766, %v2926
    %v2928 = vand.u32 %v2927, 4294901760
    %v2929 = vsub.f32 %v2927, %v2928
    %v2930 = vand.u32 %v2929, 4294901760
    %2931 = vmatpush2.msra.mxu0 %v2930
    %2932 = vmatprep.subr.mxu0 0.0
    %v2933 = vand.u32 %v1765, 4294901760
    %v2934 = vsub.f32 %v1765, %v2933
    %v2935 = vand.u32 %v2934, 4294901760
    %v2936 = vsub.f32 %v2934, %v2935
    %v2937 = vand.u32 %v2936, 4294901760
    %2938 = vmatpush2.msra.mxu0 %v2937
    %2939 = vmatprep.subr.mxu0 0.0
    %v2940 = vand.u32 %v1764, 4294901760
    %v2941 = vsub.f32 %v1764, %v2940
    %v2942 = vand.u32 %v2941, 4294901760
    %v2943 = vsub.f32 %v2941, %v2942
    %v2944 = vand.u32 %v2943, 4294901760
    %2945 = vmatpush2.msra.mxu0 %v2944
    %2946 = vmatprep.subr.mxu0 0.0
    %v2947 = vand.u32 %v1763, 4294901760
    %v2948 = vsub.f32 %v1763, %v2947
    %v2949 = vand.u32 %v2948, 4294901760
    %v2950 = vsub.f32 %v2948, %v2949
    %v2951 = vand.u32 %v2950, 4294901760
    %2952 = vmatpush2.msra.mxu0 %v2951
    %2953 = vmatprep.subr.mxu0 0.0
    %v2954 = vand.u32 %v1762, 4294901760
    %v2955 = vsub.f32 %v1762, %v2954
    %v2956 = vand.u32 %v2955, 4294901760
    %v2957 = vsub.f32 %v2955, %v2956
    %v2958 = vand.u32 %v2957, 4294901760
    %2959 = vmatpush2.msra.mxu0 %v2958
    %2960 = vmatprep.subr.mxu0 0.0
    %v2961 = vand.u32 %v1761, 4294901760
    %v2962 = vsub.f32 %v1761, %v2961
    %v2963 = vand.u32 %v2962, 4294901760
    %v2964 = vsub.f32 %v2962, %v2963
    %v2965 = vand.u32 %v2964, 4294901760
    %2966 = vmatpush2.msra.mxu0 %v2965
    %2967 = vmatprep.subr.mxu0 0.0
    %v2968 = vand.u32 %v1760, 4294901760
    %v2969 = vsub.f32 %v1760, %v2968
    %v2970 = vand.u32 %v2969, 4294901760
    %v2971 = vsub.f32 %v2969, %v2970
    %v2972 = vand.u32 %v2971, 4294901760
    %2973 = vmatpush2.msra.mxu0 %v2972
    %v2974 = vand.u32 %v1711, 4294901760
    %2975 = vmatprep.mubr.f32.mxu0 %v2974
    %v2976 = vand.u32 %v1710, 4294901760
    %2977 = vmatmul.mubr.f32.gmra.mxu0 %v2976
    %v2978 = vpop.f32.mrf.mxu0
    %v2979 = vadd.f32 %v2747, %v2978
    %v2980 = vpop.f32.mrf.mxu0
    %2981 = vdwg.mxu0
    %2982 = vmatprep.subr.mxu0 0.0
    %v2983 = vand.u32 %v1759, 4294901760
    %v2984 = vsub.f32 %v1759, %v2983
    %2985 = vmatpush1.msra.mxu0 %v2984
    %2986 = vmatprep.subr.mxu0 0.0
    %v2987 = vand.u32 %v1758, 4294901760
    %v2988 = vsub.f32 %v1758, %v2987
    %2989 = vmatpush1.msra.mxu0 %v2988
    %2990 = vmatprep.subr.mxu0 0.0
    %v2991 = vand.u32 %v1757, 4294901760
    %v2992 = vsub.f32 %v1757, %v2991
    %2993 = vmatpush1.msra.mxu0 %v2992
    %2994 = vmatprep.subr.mxu0 0.0
    %v2995 = vand.u32 %v1756, 4294901760
    %v2996 = vsub.f32 %v1756, %v2995
    %2997 = vmatpush1.msra.mxu0 %v2996
    %2998 = vmatprep.subr.mxu0 0.0
    %v2999 = vand.u32 %v1755, 4294901760
    %v3000 = vsub.f32 %v1755, %v2999
    %3001 = vmatpush1.msra.mxu0 %v3000
    %3002 = vmatprep.subr.mxu0 0.0
    %v3003 = vand.u32 %v1754, 4294901760
    %v3004 = vsub.f32 %v1754, %v3003
    %3005 = vmatpush1.msra.mxu0 %v3004
    %3006 = vmatprep.subr.mxu0 0.0
    %v3007 = vand.u32 %v1753, 4294901760
    %v3008 = vsub.f32 %v1753, %v3007
    %3009 = vmatpush1.msra.mxu0 %v3008
    %3010 = vmatprep.subr.mxu0 0.0
    %v3011 = vand.u32 %v1752, 4294901760
    %v3012 = vsub.f32 %v1752, %v3011
    %3013 = vmatpush1.msra.mxu0 %v3012
    %3014 = vmatprep.subr.mxu0 0.0
    %v3015 = vand.u32 %v1751, 4294901760
    %v3016 = vsub.f32 %v1751, %v3015
    %3017 = vmatpush1.msra.mxu0 %v3016
    %3018 = vmatprep.subr.mxu0 0.0
    %v3019 = vand.u32 %v1750, 4294901760
    %v3020 = vsub.f32 %v1750, %v3019
    %3021 = vmatpush1.msra.mxu0 %v3020
    %3022 = vmatprep.subr.mxu0 0.0
    %v3023 = vand.u32 %v1749, 4294901760
    %v3024 = vsub.f32 %v1749, %v3023
    %3025 = vmatpush1.msra.mxu0 %v3024
    %3026 = vmatprep.subr.mxu0 0.0
    %v3027 = vand.u32 %v1748, 4294901760
    %v3028 = vsub.f32 %v1748, %v3027
    %3029 = vmatpush1.msra.mxu0 %v3028
    %3030 = vmatprep.subr.mxu0 0.0
    %v3031 = vand.u32 %v1747, 4294901760
    %v3032 = vsub.f32 %v1747, %v3031
    %3033 = vmatpush1.msra.mxu0 %v3032
    %3034 = vmatprep.subr.mxu0 0.0
    %v3035 = vand.u32 %v1746, 4294901760
    %v3036 = vsub.f32 %v1746, %v3035
    %3037 = vmatpush1.msra.mxu0 %v3036
    %3038 = vmatprep.subr.mxu0 0.0
    %v3039 = vand.u32 %v1745, 4294901760
    %v3040 = vsub.f32 %v1745, %v3039
    %3041 = vmatpush1.msra.mxu0 %v3040
    %3042 = vmatprep.subr.mxu0 0.0
    %v3043 = vand.u32 %v1744, 4294901760
    %v3044 = vsub.f32 %v1744, %v3043
    %3045 = vmatpush1.msra.mxu0 %v3044
    %3046 = vmatprep.subr.mxu0 0.0
    %v3047 = vand.u32 %v1775, 4294901760
    %v3048 = vsub.f32 %v1775, %v3047
    %3049 = vmatpush2.msra.mxu0 %v3048
    %3050 = vmatprep.subr.mxu0 0.0
    %v3051 = vand.u32 %v1774, 4294901760
    %v3052 = vsub.f32 %v1774, %v3051
    %3053 = vmatpush2.msra.mxu0 %v3052
    %3054 = vmatprep.subr.mxu0 0.0
    %v3055 = vand.u32 %v1773, 4294901760
    %v3056 = vsub.f32 %v1773, %v3055
    %3057 = vmatpush2.msra.mxu0 %v3056
    %3058 = vmatprep.subr.mxu0 0.0
    %v3059 = vand.u32 %v1772, 4294901760
    %v3060 = vsub.f32 %v1772, %v3059
    %3061 = vmatpush2.msra.mxu0 %v3060
    %3062 = vmatprep.subr.mxu0 0.0
    %v3063 = vand.u32 %v1771, 4294901760
    %v3064 = vsub.f32 %v1771, %v3063
    %3065 = vmatpush2.msra.mxu0 %v3064
    %3066 = vmatprep.subr.mxu0 0.0
    %v3067 = vand.u32 %v1770, 4294901760
    %v3068 = vsub.f32 %v1770, %v3067
    %3069 = vmatpush2.msra.mxu0 %v3068
    %3070 = vmatprep.subr.mxu0 0.0
    %v3071 = vand.u32 %v1769, 4294901760
    %v3072 = vsub.f32 %v1769, %v3071
    %3073 = vmatpush2.msra.mxu0 %v3072
    %3074 = vmatprep.subr.mxu0 0.0
    %v3075 = vand.u32 %v1768, 4294901760
    %v3076 = vsub.f32 %v1768, %v3075
    %3077 = vmatpush2.msra.mxu0 %v3076
    %3078 = vmatprep.subr.mxu0 0.0
    %v3079 = vand.u32 %v1767, 4294901760
    %v3080 = vsub.f32 %v1767, %v3079
    %3081 = vmatpush2.msra.mxu0 %v3080
    %3082 = vmatprep.subr.mxu0 0.0
    %v3083 = vand.u32 %v1766, 4294901760
    %v3084 = vsub.f32 %v1766, %v3083
    %3085 = vmatpush2.msra.mxu0 %v3084
    %3086 = vmatprep.subr.mxu0 0.0
    %v3087 = vand.u32 %v1765, 4294901760
    %v3088 = vsub.f32 %v1765, %v3087
    %3089 = vmatpush2.msra.mxu0 %v3088
    %3090 = vmatprep.subr.mxu0 0.0
    %v3091 = vand.u32 %v1764, 4294901760
    %v3092 = vsub.f32 %v1764, %v3091
    %3093 = vmatpush2.msra.mxu0 %v3092
    %3094 = vmatprep.subr.mxu0 0.0
    %v3095 = vand.u32 %v1763, 4294901760
    %v3096 = vsub.f32 %v1763, %v3095
    %3097 = vmatpush2.msra.mxu0 %v3096
    %3098 = vmatprep.subr.mxu0 0.0
    %v3099 = vand.u32 %v1762, 4294901760
    %v3100 = vsub.f32 %v1762, %v3099
    %3101 = vmatpush2.msra.mxu0 %v3100
    %3102 = vmatprep.subr.mxu0 0.0
    %v3103 = vand.u32 %v1761, 4294901760
    %v3104 = vsub.f32 %v1761, %v3103
    %3105 = vmatpush2.msra.mxu0 %v3104
    %3106 = vmatprep.subr.mxu0 0.0
    %v3107 = vand.u32 %v1760, 4294901760
    %v3108 = vsub.f32 %v1760, %v3107
    %3109 = vmatpush2.msra.mxu0 %v3108
    %v3110 = vand.u32 %v1711, 4294901760
    %v3111 = vsub.f32 %v1711, %v3110
    %3112 = vmatprep.mubr.f32.mxu0 %v3111
    %v3113 = vand.u32 %v1710, 4294901760
    %v3114 = vsub.f32 %v1710, %v3113
    %3115 = vmatmul.mubr.f32.gmra.mxu0 %v3114
    %v3116 = vpop.f32.mrf.mxu0
    %v3117 = vadd.f32 %v2979, %v3116
    %v3118 = vpop.f32.mrf.mxu0
    %3119 = vdwg.mxu0
    %3120 = vmatprep.subr.mxu0 0.0
    %v3121 = vand.u32 %v1759, 4294901760
    %3122 = vmatpush1.msra.mxu0 %v3121
    %3123 = vmatprep.subr.mxu0 0.0
    %v3124 = vand.u32 %v1758, 4294901760
    %3125 = vmatpush1.msra.mxu0 %v3124
    %3126 = vmatprep.subr.mxu0 0.0
    %v3127 = vand.u32 %v1757, 4294901760
    %3128 = vmatpush1.msra.mxu0 %v3127
    %3129 = vmatprep.subr.mxu0 0.0
    %v3130 = vand.u32 %v1756, 4294901760
    %3131 = vmatpush1.msra.mxu0 %v3130
    %3132 = vmatprep.subr.mxu0 0.0
    %v3133 = vand.u32 %v1755, 4294901760
    %3134 = vmatpush1.msra.mxu0 %v3133
    %3135 = vmatprep.subr.mxu0 0.0
    %v3136 = vand.u32 %v1754, 4294901760
    %3137 = vmatpush1.msra.mxu0 %v3136
    %3138 = vmatprep.subr.mxu0 0.0
    %v3139 = vand.u32 %v1753, 4294901760
    %3140 = vmatpush1.msra.mxu0 %v3139
    %3141 = vmatprep.subr.mxu0 0.0
    %v3142 = vand.u32 %v1752, 4294901760
    %3143 = vmatpush1.msra.mxu0 %v3142
    %3144 = vmatprep.subr.mxu0 0.0
    %v3145 = vand.u32 %v1751, 4294901760
    %3146 = vmatpush1.msra.mxu0 %v3145
    %3147 = vmatprep.subr.mxu0 0.0
    %v3148 = vand.u32 %v1750, 4294901760
    %3149 = vmatpush1.msra.mxu0 %v3148
    %3150 = vmatprep.subr.mxu0 0.0
    %v3151 = vand.u32 %v1749, 4294901760
    %3152 = vmatpush1.msra.mxu0 %v3151
    %3153 = vmatprep.subr.mxu0 0.0
    %v3154 = vand.u32 %v1748, 4294901760
    %3155 = vmatpush1.msra.mxu0 %v3154
    %3156 = vmatprep.subr.mxu0 0.0
    %v3157 = vand.u32 %v1747, 4294901760
    %3158 = vmatpush1.msra.mxu0 %v3157
    %3159 = vmatprep.subr.mxu0 0.0
    %v3160 = vand.u32 %v1746, 4294901760
    %3161 = vmatpush1.msra.mxu0 %v3160
    %3162 = vmatprep.subr.mxu0 0.0
    %v3163 = vand.u32 %v1745, 4294901760
    %3164 = vmatpush1.msra.mxu0 %v3163
    %3165 = vmatprep.subr.mxu0 0.0
    %v3166 = vand.u32 %v1744, 4294901760
    %3167 = vmatpush1.msra.mxu0 %v3166
    %3168 = vmatprep.subr.mxu0 0.0
    %v3169 = vand.u32 %v1775, 4294901760
    %3170 = vmatpush2.msra.mxu0 %v3169
    %3171 = vmatprep.subr.mxu0 0.0
    %v3172 = vand.u32 %v1774, 4294901760
    %3173 = vmatpush2.msra.mxu0 %v3172
    %3174 = vmatprep.subr.mxu0 0.0
    %v3175 = vand.u32 %v1773, 4294901760
    %3176 = vmatpush2.msra.mxu0 %v3175
    %3177 = vmatprep.subr.mxu0 0.0
    %v3178 = vand.u32 %v1772, 4294901760
    %3179 = vmatpush2.msra.mxu0 %v3178
    %3180 = vmatprep.subr.mxu0 0.0
    %v3181 = vand.u32 %v1771, 4294901760
    %3182 = vmatpush2.msra.mxu0 %v3181
    %3183 = vmatprep.subr.mxu0 0.0
    %v3184 = vand.u32 %v1770, 4294901760
    %3185 = vmatpush2.msra.mxu0 %v3184
    %3186 = vmatprep.subr.mxu0 0.0
    %v3187 = vand.u32 %v1769, 4294901760
    %3188 = vmatpush2.msra.mxu0 %v3187
    %3189 = vmatprep.subr.mxu0 0.0
    %v3190 = vand.u32 %v1768, 4294901760
    %3191 = vmatpush2.msra.mxu0 %v3190
    %3192 = vmatprep.subr.mxu0 0.0
    %v3193 = vand.u32 %v1767, 4294901760
    %3194 = vmatpush2.msra.mxu0 %v3193
    %3195 = vmatprep.subr.mxu0 0.0
    %v3196 = vand.u32 %v1766, 4294901760
    %3197 = vmatpush2.msra.mxu0 %v3196
    %3198 = vmatprep.subr.mxu0 0.0
    %v3199 = vand.u32 %v1765, 4294901760
    %3200 = vmatpush2.msra.mxu0 %v3199
    %3201 = vmatprep.subr.mxu0 0.0
    %v3202 = vand.u32 %v1764, 4294901760
    %3203 = vmatpush2.msra.mxu0 %v3202
    %3204 = vmatprep.subr.mxu0 0.0
    %v3205 = vand.u32 %v1763, 4294901760
    %3206 = vmatpush2.msra.mxu0 %v3205
    %3207 = vmatprep.subr.mxu0 0.0
    %v3208 = vand.u32 %v1762, 4294901760
    %3209 = vmatpush2.msra.mxu0 %v3208
    %3210 = vmatprep.subr.mxu0 0.0
    %v3211 = vand.u32 %v1761, 4294901760
    %3212 = vmatpush2.msra.mxu0 %v3211
    %3213 = vmatprep.subr.mxu0 0.0
    %v3214 = vand.u32 %v1760, 4294901760
    %3215 = vmatpush2.msra.mxu0 %v3214
    %v3216 = vand.u32 %v1711, 4294901760
    %v3217 = vsub.f32 %v1711, %v3216
    %v3218 = vand.u32 %v3217, 4294901760
    %3219 = vmatprep.mubr.f32.mxu0 %v3218
    %v3220 = vand.u32 %v1710, 4294901760
    %v3221 = vsub.f32 %v1710, %v3220
    %v3222 = vand.u32 %v3221, 4294901760
    %3223 = vmatmul.mubr.f32.gmra.mxu0 %v3222
    %v3224 = vpop.f32.mrf.mxu0
    %v3225 = vadd.f32 %v3117, %v3224
    %v3226 = vpop.f32.mrf.mxu0
    %3227 = vdwg.mxu0
    %3228 = vmatprep.subr.mxu0 0.0
    %v3229 = vand.u32 %v1759, 4294901760
    %v3230 = vsub.f32 %v1759, %v3229
    %v3231 = vand.u32 %v3230, 4294901760
    %3232 = vmatpush1.msra.mxu0 %v3231
    %3233 = vmatprep.subr.mxu0 0.0
    %v3234 = vand.u32 %v1758, 4294901760
    %v3235 = vsub.f32 %v1758, %v3234
    %v3236 = vand.u32 %v3235, 4294901760
    %3237 = vmatpush1.msra.mxu0 %v3236
    %3238 = vmatprep.subr.mxu0 0.0
    %v3239 = vand.u32 %v1757, 4294901760
    %v3240 = vsub.f32 %v1757, %v3239
    %v3241 = vand.u32 %v3240, 4294901760
    %3242 = vmatpush1.msra.mxu0 %v3241
    %3243 = vmatprep.subr.mxu0 0.0
    %v3244 = vand.u32 %v1756, 4294901760
    %v3245 = vsub.f32 %v1756, %v3244
    %v3246 = vand.u32 %v3245, 4294901760
    %3247 = vmatpush1.msra.mxu0 %v3246
    %3248 = vmatprep.subr.mxu0 0.0
    %v3249 = vand.u32 %v1755, 4294901760
    %v3250 = vsub.f32 %v1755, %v3249
    %v3251 = vand.u32 %v3250, 4294901760
    %3252 = vmatpush1.msra.mxu0 %v3251
    %3253 = vmatprep.subr.mxu0 0.0
    %v3254 = vand.u32 %v1754, 4294901760
    %v3255 = vsub.f32 %v1754, %v3254
    %v3256 = vand.u32 %v3255, 4294901760
    %3257 = vmatpush1.msra.mxu0 %v3256
    %3258 = vmatprep.subr.mxu0 0.0
    %v3259 = vand.u32 %v1753, 4294901760
    %v3260 = vsub.f32 %v1753, %v3259
    %v3261 = vand.u32 %v3260, 4294901760
    %3262 = vmatpush1.msra.mxu0 %v3261
    %3263 = vmatprep.subr.mxu0 0.0
    %v3264 = vand.u32 %v1752, 4294901760
    %v3265 = vsub.f32 %v1752, %v3264
    %v3266 = vand.u32 %v3265, 4294901760
    %3267 = vmatpush1.msra.mxu0 %v3266
    %3268 = vmatprep.subr.mxu0 0.0
    %v3269 = vand.u32 %v1751, 4294901760
    %v3270 = vsub.f32 %v1751, %v3269
    %v3271 = vand.u32 %v3270, 4294901760
    %3272 = vmatpush1.msra.mxu0 %v3271
    %3273 = vmatprep.subr.mxu0 0.0
    %v3274 = vand.u32 %v1750, 4294901760
    %v3275 = vsub.f32 %v1750, %v3274
    %v3276 = vand.u32 %v3275, 4294901760
    %3277 = vmatpush1.msra.mxu0 %v3276
    %3278 = vmatprep.subr.mxu0 0.0
    %v3279 = vand.u32 %v1749, 4294901760
    %v3280 = vsub.f32 %v1749, %v3279
    %v3281 = vand.u32 %v3280, 4294901760
    %3282 = vmatpush1.msra.mxu0 %v3281
    %3283 = vmatprep.subr.mxu0 0.0
    %v3284 = vand.u32 %v1748, 4294901760
    %v3285 = vsub.f32 %v1748, %v3284
    %v3286 = vand.u32 %v3285, 4294901760
    %3287 = vmatpush1.msra.mxu0 %v3286
    %3288 = vmatprep.subr.mxu0 0.0
    %v3289 = vand.u32 %v1747, 4294901760
    %v3290 = vsub.f32 %v1747, %v3289
    %v3291 = vand.u32 %v3290, 4294901760
    %3292 = vmatpush1.msra.mxu0 %v3291
    %3293 = vmatprep.subr.mxu0 0.0
    %v3294 = vand.u32 %v1746, 4294901760
    %v3295 = vsub.f32 %v1746, %v3294
    %v3296 = vand.u32 %v3295, 4294901760
    %3297 = vmatpush1.msra.mxu0 %v3296
    %3298 = vmatprep.subr.mxu0 0.0
    %v3299 = vand.u32 %v1745, 4294901760
    %v3300 = vsub.f32 %v1745, %v3299
    %v3301 = vand.u32 %v3300, 4294901760
    %3302 = vmatpush1.msra.mxu0 %v3301
    %3303 = vmatprep.subr.mxu0 0.0
    %v3304 = vand.u32 %v1744, 4294901760
    %v3305 = vsub.f32 %v1744, %v3304
    %v3306 = vand.u32 %v3305, 4294901760
    %3307 = vmatpush1.msra.mxu0 %v3306
    %3308 = vmatprep.subr.mxu0 0.0
    %v3309 = vand.u32 %v1775, 4294901760
    %v3310 = vsub.f32 %v1775, %v3309
    %v3311 = vand.u32 %v3310, 4294901760
    %3312 = vmatpush2.msra.mxu0 %v3311
    %3313 = vmatprep.subr.mxu0 0.0
    %v3314 = vand.u32 %v1774, 4294901760
    %v3315 = vsub.f32 %v1774, %v3314
    %v3316 = vand.u32 %v3315, 4294901760
    %3317 = vmatpush2.msra.mxu0 %v3316
    %3318 = vmatprep.subr.mxu0 0.0
    %v3319 = vand.u32 %v1773, 4294901760
    %v3320 = vsub.f32 %v1773, %v3319
    %v3321 = vand.u32 %v3320, 4294901760
    %3322 = vmatpush2.msra.mxu0 %v3321
    %3323 = vmatprep.subr.mxu0 0.0
    %v3324 = vand.u32 %v1772, 4294901760
    %v3325 = vsub.f32 %v1772, %v3324
    %v3326 = vand.u32 %v3325, 4294901760
    %3327 = vmatpush2.msra.mxu0 %v3326
    %3328 = vmatprep.subr.mxu0 0.0
    %v3329 = vand.u32 %v1771, 4294901760
    %v3330 = vsub.f32 %v1771, %v3329
    %v3331 = vand.u32 %v3330, 4294901760
    %3332 = vmatpush2.msra.mxu0 %v3331
    %3333 = vmatprep.subr.mxu0 0.0
    %v3334 = vand.u32 %v1770, 4294901760
    %v3335 = vsub.f32 %v1770, %v3334
    %v3336 = vand.u32 %v3335, 4294901760
    %3337 = vmatpush2.msra.mxu0 %v3336
    %3338 = vmatprep.subr.mxu0 0.0
    %v3339 = vand.u32 %v1769, 4294901760
    %v3340 = vsub.f32 %v1769, %v3339
    %v3341 = vand.u32 %v3340, 4294901760
    %3342 = vmatpush2.msra.mxu0 %v3341
    %3343 = vmatprep.subr.mxu0 0.0
    %v3344 = vand.u32 %v1768, 4294901760
    %v3345 = vsub.f32 %v1768, %v3344
    %v3346 = vand.u32 %v3345, 4294901760
    %3347 = vmatpush2.msra.mxu0 %v3346
    %3348 = vmatprep.subr.mxu0 0.0
    %v3349 = vand.u32 %v1767, 4294901760
    %v3350 = vsub.f32 %v1767, %v3349
    %v3351 = vand.u32 %v3350, 4294901760
    %3352 = vmatpush2.msra.mxu0 %v3351
    %3353 = vmatprep.subr.mxu0 0.0
    %v3354 = vand.u32 %v1766, 4294901760
    %v3355 = vsub.f32 %v1766, %v3354
    %v3356 = vand.u32 %v3355, 4294901760
    %3357 = vmatpush2.msra.mxu0 %v3356
    %3358 = vmatprep.subr.mxu0 0.0
    %v3359 = vand.u32 %v1765, 4294901760
    %v3360 = vsub.f32 %v1765, %v3359
    %v3361 = vand.u32 %v3360, 4294901760
    %3362 = vmatpush2.msra.mxu0 %v3361
    %3363 = vmatprep.subr.mxu0 0.0
    %v3364 = vand.u32 %v1764, 4294901760
    %v3365 = vsub.f32 %v1764, %v3364
    %v3366 = vand.u32 %v3365, 4294901760
    %3367 = vmatpush2.msra.mxu0 %v3366
    %3368 = vmatprep.subr.mxu0 0.0
    %v3369 = vand.u32 %v1763, 4294901760
    %v3370 = vsub.f32 %v1763, %v3369
    %v3371 = vand.u32 %v3370, 4294901760
    %3372 = vmatpush2.msra.mxu0 %v3371
    %3373 = vmatprep.subr.mxu0 0.0
    %v3374 = vand.u32 %v1762, 4294901760
    %v3375 = vsub.f32 %v1762, %v3374
    %v3376 = vand.u32 %v3375, 4294901760
    %3377 = vmatpush2.msra.mxu0 %v3376
    %3378 = vmatprep.subr.mxu0 0.0
    %v3379 = vand.u32 %v1761, 4294901760
    %v3380 = vsub.f32 %v1761, %v3379
    %v3381 = vand.u32 %v3380, 4294901760
    %3382 = vmatpush2.msra.mxu0 %v3381
    %3383 = vmatprep.subr.mxu0 0.0
    %v3384 = vand.u32 %v1760, 4294901760
    %v3385 = vsub.f32 %v1760, %v3384
    %v3386 = vand.u32 %v3385, 4294901760
    %3387 = vmatpush2.msra.mxu0 %v3386
    %v3388 = vand.u32 %v1711, 4294901760
    %3389 = vmatprep.mubr.f32.mxu0 %v3388
    %v3390 = vand.u32 %v1710, 4294901760
    %3391 = vmatmul.mubr.f32.gmra.mxu0 %v3390
    %v3392 = vpop.f32.mrf.mxu0
    %v3393 = vadd.f32 %v3225, %v3392
    %v3394 = vpop.f32.mrf.mxu0
    %3395 = vdwg.mxu0
    %3396 = vmatprep.subr.mxu0 0.0
    %v3397 = vand.u32 %v1759, 4294901760
    %3398 = vmatpush1.msra.mxu0 %v3397
    %3399 = vmatprep.subr.mxu0 0.0
    %v3400 = vand.u32 %v1758, 4294901760
    %3401 = vmatpush1.msra.mxu0 %v3400
    %3402 = vmatprep.subr.mxu0 0.0
    %v3403 = vand.u32 %v1757, 4294901760
    %3404 = vmatpush1.msra.mxu0 %v3403
    %3405 = vmatprep.subr.mxu0 0.0
    %v3406 = vand.u32 %v1756, 4294901760
    %3407 = vmatpush1.msra.mxu0 %v3406
    %3408 = vmatprep.subr.mxu0 0.0
    %v3409 = vand.u32 %v1755, 4294901760
    %3410 = vmatpush1.msra.mxu0 %v3409
    %3411 = vmatprep.subr.mxu0 0.0
    %v3412 = vand.u32 %v1754, 4294901760
    %3413 = vmatpush1.msra.mxu0 %v3412
    %3414 = vmatprep.subr.mxu0 0.0
    %v3415 = vand.u32 %v1753, 4294901760
    %3416 = vmatpush1.msra.mxu0 %v3415
    %3417 = vmatprep.subr.mxu0 0.0
    %v3418 = vand.u32 %v1752, 4294901760
    %3419 = vmatpush1.msra.mxu0 %v3418
    %3420 = vmatprep.subr.mxu0 0.0
    %v3421 = vand.u32 %v1751, 4294901760
    %3422 = vmatpush1.msra.mxu0 %v3421
    %3423 = vmatprep.subr.mxu0 0.0
    %v3424 = vand.u32 %v1750, 4294901760
    %3425 = vmatpush1.msra.mxu0 %v3424
    %3426 = vmatprep.subr.mxu0 0.0
    %v3427 = vand.u32 %v1749, 4294901760
    %3428 = vmatpush1.msra.mxu0 %v3427
    %3429 = vmatprep.subr.mxu0 0.0
    %v3430 = vand.u32 %v1748, 4294901760
    %3431 = vmatpush1.msra.mxu0 %v3430
    %3432 = vmatprep.subr.mxu0 0.0
    %v3433 = vand.u32 %v1747, 4294901760
    %3434 = vmatpush1.msra.mxu0 %v3433
    %3435 = vmatprep.subr.mxu0 0.0
    %v3436 = vand.u32 %v1746, 4294901760
    %3437 = vmatpush1.msra.mxu0 %v3436
    %3438 = vmatprep.subr.mxu0 0.0
    %v3439 = vand.u32 %v1745, 4294901760
    %3440 = vmatpush1.msra.mxu0 %v3439
    %3441 = vmatprep.subr.mxu0 0.0
    %v3442 = vand.u32 %v1744, 4294901760
    %3443 = vmatpush1.msra.mxu0 %v3442
    %3444 = vmatprep.subr.mxu0 0.0
    %v3445 = vand.u32 %v1775, 4294901760
    %3446 = vmatpush2.msra.mxu0 %v3445
    %3447 = vmatprep.subr.mxu0 0.0
    %v3448 = vand.u32 %v1774, 4294901760
    %3449 = vmatpush2.msra.mxu0 %v3448
    %3450 = vmatprep.subr.mxu0 0.0
    %v3451 = vand.u32 %v1773, 4294901760
    %3452 = vmatpush2.msra.mxu0 %v3451
    %3453 = vmatprep.subr.mxu0 0.0
    %v3454 = vand.u32 %v1772, 4294901760
    %3455 = vmatpush2.msra.mxu0 %v3454
    %3456 = vmatprep.subr.mxu0 0.0
    %v3457 = vand.u32 %v1771, 4294901760
    %3458 = vmatpush2.msra.mxu0 %v3457
    %3459 = vmatprep.subr.mxu0 0.0
    %v3460 = vand.u32 %v1770, 4294901760
    %3461 = vmatpush2.msra.mxu0 %v3460
    %3462 = vmatprep.subr.mxu0 0.0
    %v3463 = vand.u32 %v1769, 4294901760
    %3464 = vmatpush2.msra.mxu0 %v3463
    %3465 = vmatprep.subr.mxu0 0.0
    %v3466 = vand.u32 %v1768, 4294901760
    %3467 = vmatpush2.msra.mxu0 %v3466
    %3468 = vmatprep.subr.mxu0 0.0
    %v3469 = vand.u32 %v1767, 4294901760
    %3470 = vmatpush2.msra.mxu0 %v3469
    %3471 = vmatprep.subr.mxu0 0.0
    %v3472 = vand.u32 %v1766, 4294901760
    %3473 = vmatpush2.msra.mxu0 %v3472
    %3474 = vmatprep.subr.mxu0 0.0
    %v3475 = vand.u32 %v1765, 4294901760
    %3476 = vmatpush2.msra.mxu0 %v3475
    %3477 = vmatprep.subr.mxu0 0.0
    %v3478 = vand.u32 %v1764, 4294901760
    %3479 = vmatpush2.msra.mxu0 %v3478
    %3480 = vmatprep.subr.mxu0 0.0
    %v3481 = vand.u32 %v1763, 4294901760
    %3482 = vmatpush2.msra.mxu0 %v3481
    %3483 = vmatprep.subr.mxu0 0.0
    %v3484 = vand.u32 %v1762, 4294901760
    %3485 = vmatpush2.msra.mxu0 %v3484
    %3486 = vmatprep.subr.mxu0 0.0
    %v3487 = vand.u32 %v1761, 4294901760
    %3488 = vmatpush2.msra.mxu0 %v3487
    %3489 = vmatprep.subr.mxu0 0.0
    %v3490 = vand.u32 %v1760, 4294901760
    %3491 = vmatpush2.msra.mxu0 %v3490
    %v3492 = vand.u32 %v1711, 4294901760
    %3493 = vmatprep.mubr.f32.mxu0 %v3492
    %v3494 = vand.u32 %v1710, 4294901760
    %3495 = vmatmul.mubr.f32.gmra.mxu0 %v3494
    %v3496 = vpop.f32.mrf.mxu0
    %v3497 = vadd.f32 %v3393, %v3496
    %v3498 = vpop.f32.mrf.mxu0
    %3499 = vdwg.mxu0
    %3500 = vst [vmem:[#allocation8] sm:$0xff] %v3497
    %vm3501 = vcmask 130048
    %3502 = vst.msk [vmem:[#allocation5] sm:$0xff] %vm3501, 0.0
    %3504 = vrot.lane.b32.xlu0 %v3497, 16
    %v3505 = vpop.permute.xlu0 %3504
    %vm3507 = vcmask 654464
    %3508 = vst.msk [vmem:[#allocation5] sm:$0xff] %vm3507, %v3505
    %vm3509 = vcmask 786048
    %3510 = vst.msk [vmem:[#allocation5] sm:$0xff] %vm3509, 0.0
    %3511 = vrot.lane.b32.xlu0 %v3497, 32
    %v3512 = vpop.permute.xlu0 %3511
    %vm3514 = vcmask 1048320
    %3515 = vst.msk [vmem:[#allocation5] sm:$0xff] %vm3514, %v3512
    %3516 = vst.msk [vmem:[#allocation5 + $0x8] sm:$0xff] %vm40, %v3512
    %vm3517 = vcmask 392448
    %3518 = vst.msk [vmem:[#allocation5 + $0x8] sm:$0xff] %vm3517, 0.0
    %v3519 = vand.u32 %v67, 7
    %vm3520 = vcmp.gt.s32.totalorder %v3519, 0
    %vm3521 = vcmp.lt.s32.totalorder %v3519, 7
    %v3522 = vld [vmem:[#allocation5] sm:$0xff]
    %v3523 = vsel %vm3520, 1, 0
    %vm3524 = vcmp.eq.s32.totalorder %v3523, 1
    %3526 = vrot.lane.b32.xlu0 %v3522, 121
    %v3527 = vpop.permute.xlu0 %3526
    %v3529 = vsel %vm3524, %v3527, 0.0
    %3530 = vst.msk [vmem:[#allocation6] sm:$0xff] %vm55, %v3529
    %v3531 = vld [vmem:[#allocation5] sm:$0xff]
    %v3532 = vld [vmem:[#allocation5 + $0x8] sm:$0xff]
    %3535 = vrot.lane.b32.xlu0 %v3531, 41
    %v3536 = vpop.permute.xlu0 %3535
    %3537 = vrot.lane.b32.xlu0 %v3532, 41
    %v3538 = vpop.permute.xlu0 %3537
    %vm3539 = vcmask 334848
    %v3540 = vsel %vm3539, %v3536, %v3538
    %v3542 = vsel %vm3524, %v3540, 0.0
    %3544 = vrot.lane.b32.xlu0 %v3542, 64
    %v3545 = vpop.permute.xlu0 %3544
    %vm3547 = vcmask 1048064
    %3548 = vst.msk [vmem:[#allocation6] sm:$0xff] %vm3547, %v3545
    %v3549 = vld [vmem:[#allocation5] sm:$0xff]
    %3551 = vrot.lane.b32.xlu0 %v3549, 120
    %v3552 = vpop.permute.xlu0 %3551
    %3554 = vst.msk [vmem:[#allocation6 + $0x8] sm:$0xff] %vm55, %v3552
    %v3555 = vld [vmem:[#allocation5] sm:$0xff]
    %v3556 = vld [vmem:[#allocation5 + $0x8] sm:$0xff]
    %3559 = vrot.lane.b32.xlu0 %v3555, 104
    %v3560 = vpop.permute.xlu0 %3559
    %3561 = vrot.lane.b32.xlu0 %v3556, 104
    %v3562 = vpop.permute.xlu0 %3561
    %vm3563 = vcmask 850944
    %v3564 = vsel %vm3563, %v3560, %v3562
    %3566 = vst.msk [vmem:[#allocation6 + $0x8] sm:$0xff] %vm3547, %v3564
    %v3567 = vld [vmem:[#allocation5] sm:$0xff]
    %v3568 = vsel %vm3521, 1, 0
    %vm3569 = vcmp.eq.s32.totalorder %v3568, 1
    %3571 = vrot.lane.b32.xlu0 %v3567, 119
    %v3572 = vpop.permute.xlu0 %3571
    %v3574 = vsel %vm3569, %v3572, 0.0
    %3575 = vst.msk [vmem:[#allocation6 + $0x10] sm:$0xff] %vm55, %v3574
    %v3576 = vld [vmem:[#allocation5] sm:$0xff]
    %v3577 = vld [vmem:[#allocation5 + $0x8] sm:$0xff]
    %3580 = vrot.lane.b32.xlu0 %v3576, 39
    %v3581 = vpop.permute.xlu0 %3580
    %3582 = vrot.lane.b32.xlu0 %v3577, 39
    %v3583 = vpop.permute.xlu0 %3582
    %vm3584 = vcmask 318464
    %v3585 = vsel %vm3584, %v3581, %v3583
    %v3587 = vsel %vm3569, %v3585, 0.0
    %3589 = vrot.lane.b32.xlu0 %v3587, 64
    %v3590 = vpop.permute.xlu0 %3589
    %3592 = vst.msk [vmem:[#allocation6 + $0x10] sm:$0xff] %vm3547, %v3590
    %v3593 = vld [vmem:[#allocation5] sm:$0xff]
    %3595 = vrot.lane.b32.xlu0 %v3593, 113
    %v3596 = vpop.permute.xlu0 %3595
    %v3598 = vsel %vm3524, %v3596, 0.0
    %3599 = vst.msk [vmem:[#allocation6 + $0x18] sm:$0xff] %vm55, %v3598
    %v3600 = vld [vmem:[#allocation5] sm:$0xff]
    %v3601 = vld [vmem:[#allocation5 + $0x8] sm:$0xff]
    %3604 = vrot.lane.b32.xlu0 %v3600, 33
    %v3605 = vpop.permute.xlu0 %3604
    %3606 = vrot.lane.b32.xlu0 %v3601, 33
    %v3607 = vpop.permute.xlu0 %3606
    %vm3608 = vcmask 269312
    %v3609 = vsel %vm3608, %v3605, %v3607
    %v3611 = vsel %vm3524, %v3609, 0.0
    %3613 = vrot.lane.b32.xlu0 %v3611, 64
    %v3614 = vpop.permute.xlu0 %3613
    %3616 = vst.msk [vmem:[#allocation6 + $0x18] sm:$0xff] %vm3547, %v3614
    %v3617 = vld [vmem:[#allocation5] sm:$0xff]
    %3619 = vrot.lane.b32.xlu0 %v3617, 112
    %v3620 = vpop.permute.xlu0 %3619
    %3622 = vst.msk [vmem:[#allocation6 + $0x20] sm:$0xff] %vm55, %v3620
    %v3623 = vld [vmem:[#allocation5] sm:$0xff]
    %v3624 = vld [vmem:[#allocation5 + $0x8] sm:$0xff]
    %3627 = vrot.lane.b32.xlu0 %v3623, 96
    %v3628 = vpop.permute.xlu0 %3627
    %3629 = vrot.lane.b32.xlu0 %v3624, 96
    %v3630 = vpop.permute.xlu0 %3629
    %v3631 = vsel %vm264, %v3628, %v3630
    %3633 = vst.msk [vmem:[#allocation6 + $0x20] sm:$0xff] %vm3547, %v3631
    %v3634 = vld [vmem:[#allocation5] sm:$0xff]
    %3636 = vrot.lane.b32.xlu0 %v3634, 111
    %v3637 = vpop.permute.xlu0 %3636
    %v3639 = vsel %vm3569, %v3637, 0.0
    %3640 = vst.msk [vmem:[#allocation6 + $0x28] sm:$0xff] %vm55, %v3639
    %v3641 = vld [vmem:[#allocation5] sm:$0xff]
    %v3642 = vld [vmem:[#allocation5 + $0x8] sm:$0xff]
    %3645 = vrot.lane.b32.xlu0 %v3641, 31
    %v3646 = vpop.permute.xlu0 %3645
    %3647 = vrot.lane.b32.xlu0 %v3642, 31
    %v3648 = vpop.permute.xlu0 %3647
    %vm3649 = vcmask 252928
    %v3650 = vsel %vm3649, %v3646, %v3648
    %v3652 = vsel %vm3569, %v3650, 0.0
    %3654 = vrot.lane.b32.xlu0 %v3652, 64
    %v3655 = vpop.permute.xlu0 %3654
    %3657 = vst.msk [vmem:[#allocation6 + $0x28] sm:$0xff] %vm3547, %v3655
    %v3658 = vld [vmem:[#allocation5] sm:$0xff]
    %3660 = vrot.lane.b32.xlu0 %v3658, 105
    %v3661 = vpop.permute.xlu0 %3660
    %v3663 = vsel %vm3524, %v3661, 0.0
    %3664 = vst.msk [vmem:[#allocation6 + $0x30] sm:$0xff] %vm55, %v3663
    %v3665 = vld [vmem:[#allocation5] sm:$0xff]
    %v3666 = vld [vmem:[#allocation5 + $0x8] sm:$0xff]
    %3669 = vrot.lane.b32.xlu0 %v3665, 25
    %v3670 = vpop.permute.xlu0 %3669
    %3671 = vrot.lane.b32.xlu0 %v3666, 25
    %v3672 = vpop.permute.xlu0 %3671
    %vm3673 = vcmask 203776
    %v3674 = vsel %vm3673, %v3670, %v3672
    %v3676 = vsel %vm3524, %v3674, 0.0
    %3678 = vrot.lane.b32.xlu0 %v3676, 64
    %v3679 = vpop.permute.xlu0 %3678
    %3681 = vst.msk [vmem:[#allocation6 + $0x30] sm:$0xff] %vm3547, %v3679
    %v3682 = vld [vmem:[#allocation5] sm:$0xff]
    %3684 = vrot.lane.b32.xlu0 %v3682, 104
    %v3685 = vpop.permute.xlu0 %3684
    %3687 = vst.msk [vmem:[#allocation6 + $0x38] sm:$0xff] %vm55, %v3685
    %v3688 = vld [vmem:[#allocation5] sm:$0xff]
    %v3689 = vld [vmem:[#allocation5 + $0x8] sm:$0xff]
    %3692 = vrot.lane.b32.xlu0 %v3688, 88
    %v3693 = vpop.permute.xlu0 %3692
    %3694 = vrot.lane.b32.xlu0 %v3689, 88
    %v3695 = vpop.permute.xlu0 %3694
    %vm3696 = vcmask 719872
    %v3697 = vsel %vm3696, %v3693, %v3695
    %3699 = vst.msk [vmem:[#allocation6 + $0x38] sm:$0xff] %vm3547, %v3697
    %v3700 = vld [vmem:[#allocation5] sm:$0xff]
    %3702 = vrot.lane.b32.xlu0 %v3700, 103
    %v3703 = vpop.permute.xlu0 %3702
    %v3705 = vsel %vm3569, %v3703, 0.0
    %3706 = vst.msk [vmem:[#allocation6 + $0x40] sm:$0xff] %vm55, %v3705
    %v3707 = vld [vmem:[#allocation5] sm:$0xff]
    %v3708 = vld [vmem:[#allocation5 + $0x8] sm:$0xff]
    %3711 = vrot.lane.b32.xlu0 %v3707, 23
    %v3712 = vpop.permute.xlu0 %3711
    %3713 = vrot.lane.b32.xlu0 %v3708, 23
    %v3714 = vpop.permute.xlu0 %3713
    %vm3715 = vcmask 187392
    %v3716 = vsel %vm3715, %v3712, %v3714
    %v3718 = vsel %vm3569, %v3716, 0.0
    %3720 = vrot.lane.b32.xlu0 %v3718, 64
    %v3721 = vpop.permute.xlu0 %3720
    %3723 = vst.msk [vmem:[#allocation6 + $0x40] sm:$0xff] %vm3547, %v3721
    %v3724 = vld [vmem:[%s3] sm:$0xff]
    %v3725 = vld [vmem:[%s3 + $0x8] sm:$0xff]
    %v3726 = vld [vmem:[#allocation6] sm:$0xff]
    %v3727 = vld [vmem:[#allocation6 + $0x8] sm:$0xff]
    %v3728 = vld [vmem:[#allocation6 + $0x10] sm:$0xff]
    %v3729 = vld [vmem:[#allocation6 + $0x18] sm:$0xff]
    %v3730 = vld [vmem:[#allocation6 + $0x20] sm:$0xff]
    %v3731 = vld [vmem:[#allocation6 + $0x28] sm:$0xff]
    %v3732 = vld [vmem:[#allocation6 + $0x30] sm:$0xff]
    %v3733 = vld [vmem:[#allocation6 + $0x38] sm:$0xff]
    %v3734 = vld [vmem:[#allocation6 + $0x40] sm:$0xff]
    %v3735 = vld [vmem:[%s4] sm:$0xff]
    %v3736 = vld [vmem:[%s4 + $0x8] sm:$0xff]
    %3738 = vset.pattern.permute.xlu0 0
    %3739 = vperm.xlu0 %3738, %v3735
    %v3740 = vpop.permute.xlu0 %3739
    %3743 = vset.pattern.permute.xlu0 0
    %3744 = vperm.xlu0 %3743, %v3736
    %v3745 = vpop.permute.xlu0 %3744
    %vm3747 = vcmask 588800
    %v3749 = vsel %vm3747, %v3724, 0
    %v3752 = vsel %vm3747, %v3725, 0
    %3754 = vmatprep.subr.mxu0 0.0
    %3755 = vmatpush1.msra.mxu0 0.0
    %3756 = vmatprep.subr.mxu0 0.0
    %3757 = vmatpush1.msra.mxu0 0.0
    %3758 = vmatprep.subr.mxu0 0.0
    %3759 = vmatpush1.msra.mxu0 0.0
    %3760 = vmatprep.subr.mxu0 0.0
    %3761 = vmatpush1.msra.mxu0 0.0
    %3762 = vmatprep.subr.mxu0 0.0
    %3763 = vmatpush1.msra.mxu0 0.0
    %3764 = vmatprep.subr.mxu0 0.0
    %3765 = vmatpush1.msra.mxu0 0.0
    %3766 = vmatprep.subr.mxu0 0.0
    %3767 = vmatpush1.msra.mxu0 0.0
    %3768 = vmatprep.subr.mxu0 0.0
    %v3769 = vand.u32 %v3734, 4294901760
    %3770 = vmatpush1.msra.mxu0 %v3769
    %3771 = vmatprep.subr.mxu0 0.0
    %v3772 = vand.u32 %v3733, 4294901760
    %3773 = vmatpush1.msra.mxu0 %v3772
    %3774 = vmatprep.subr.mxu0 0.0
    %v3775 = vand.u32 %v3732, 4294901760
    %3776 = vmatpush1.msra.mxu0 %v3775
    %3777 = vmatprep.subr.mxu0 0.0
    %v3778 = vand.u32 %v3731, 4294901760
    %3779 = vmatpush1.msra.mxu0 %v3778
    %3780 = vmatprep.subr.mxu0 0.0
    %v3781 = vand.u32 %v3730, 4294901760
    %3782 = vmatpush1.msra.mxu0 %v3781
    %3783 = vmatprep.subr.mxu0 0.0
    %v3784 = vand.u32 %v3729, 4294901760
    %3785 = vmatpush1.msra.mxu0 %v3784
    %3786 = vmatprep.subr.mxu0 0.0
    %v3787 = vand.u32 %v3728, 4294901760
    %3788 = vmatpush1.msra.mxu0 %v3787
    %3789 = vmatprep.subr.mxu0 0.0
    %v3790 = vand.u32 %v3727, 4294901760
    %3791 = vmatpush1.msra.mxu0 %v3790
    %3792 = vmatprep.subr.mxu0 0.0
    %v3793 = vand.u32 %v3726, 4294901760
    %3794 = vmatpush1.msra.mxu0 %v3793
    %3795 = vmatprep.subr.mxu0 0.0
    %3796 = vmatpush2.msra.mxu0 0.0
    %3797 = vmatprep.subr.mxu0 0.0
    %3798 = vmatpush2.msra.mxu0 0.0
    %3799 = vmatprep.subr.mxu0 0.0
    %3800 = vmatpush2.msra.mxu0 0.0
    %3801 = vmatprep.subr.mxu0 0.0
    %3802 = vmatpush2.msra.mxu0 0.0
    %3803 = vmatprep.subr.mxu0 0.0
    %3804 = vmatpush2.msra.mxu0 0.0
    %3805 = vmatprep.subr.mxu0 0.0
    %3806 = vmatpush2.msra.mxu0 0.0
    %3807 = vmatprep.subr.mxu0 0.0
    %3808 = vmatpush2.msra.mxu0 0.0
    %3809 = vmatprep.subr.mxu0 0.0
    %3810 = vmatpush2.msra.mxu0 0.0
    %3811 = vmatprep.subr.mxu0 0.0
    %3812 = vmatpush2.msra.mxu0 0.0
    %3813 = vmatprep.subr.mxu0 0.0
    %3814 = vmatpush2.msra.mxu0 0.0
    %3815 = vmatprep.subr.mxu0 0.0
    %3816 = vmatpush2.msra.mxu0 0.0
    %3817 = vmatprep.subr.mxu0 0.0
    %3818 = vmatpush2.msra.mxu0 0.0
    %3819 = vmatprep.subr.mxu0 0.0
    %3820 = vmatpush2.msra.mxu0 0.0
    %3821 = vmatprep.subr.mxu0 0.0
    %3822 = vmatpush2.msra.mxu0 0.0
    %3823 = vmatprep.subr.mxu0 0.0
    %3824 = vmatpush2.msra.mxu0 0.0
    %3825 = vmatprep.subr.mxu0 0.0
    %3826 = vmatpush2.msra.mxu0 0.0
    %3827 = vmatprep.mubr.f32.mxu0 0.0
    %v3828 = vand.u32 %v3749, 4294901760
    %v3829 = vsub.f32 %v3749, %v3828
    %v3830 = vand.u32 %v3829, 4294901760
    %v3831 = vsub.f32 %v3829, %v3830
    %v3832 = vand.u32 %v3831, 4294901760
    %3833 = vmatmul.mubr.f32.gmra.mxu0 %v3832
    %v3834 = vpop.f32.mrf.mxu0
    %v3835 = vadd.f32 %v3740, %v3834
    %v3836 = vpop.f32.mrf.mxu0
    %3837 = vmatprep.mubr.f32.mxu0 0.0
    %v3838 = vand.u32 %v3752, 4294901760
    %v3839 = vsub.f32 %v3752, %v3838
    %v3840 = vand.u32 %v3839, 4294901760
    %v3841 = vsub.f32 %v3839, %v3840
    %v3842 = vand.u32 %v3841, 4294901760
    %3843 = vmatmul.mubr.f32.gmra.mxu0 %v3842
    %v3844 = vpop.f32.mrf.mxu0
    %v3845 = vadd.f32 %v3745, %v3844
    %v3846 = vpop.f32.mrf.mxu0
    %3847 = vdwg.mxu0
    %3848 = vmatprep.subr.mxu0 0.0
    %3849 = vmatpush1.msra.mxu0 0.0
    %3850 = vmatprep.subr.mxu0 0.0
    %3851 = vmatpush1.msra.mxu0 0.0
    %3852 = vmatprep.subr.mxu0 0.0
    %3853 = vmatpush1.msra.mxu0 0.0
    %3854 = vmatprep.subr.mxu0 0.0
    %3855 = vmatpush1.msra.mxu0 0.0
    %3856 = vmatprep.subr.mxu0 0.0
    %3857 = vmatpush1.msra.mxu0 0.0
    %3858 = vmatprep.subr.mxu0 0.0
    %3859 = vmatpush1.msra.mxu0 0.0
    %3860 = vmatprep.subr.mxu0 0.0
    %3861 = vmatpush1.msra.mxu0 0.0
    %3862 = vmatprep.subr.mxu0 0.0
    %v3863 = vand.u32 %v3734, 4294901760
    %v3864 = vsub.f32 %v3734, %v3863
    %v3865 = vand.u32 %v3864, 4294901760
    %v3866 = vsub.f32 %v3864, %v3865
    %v3867 = vand.u32 %v3866, 4294901760
    %3868 = vmatpush1.msra.mxu0 %v3867
    %3869 = vmatprep.subr.mxu0 0.0
    %v3870 = vand.u32 %v3733, 4294901760
    %v3871 = vsub.f32 %v3733, %v3870
    %v3872 = vand.u32 %v3871, 4294901760
    %v3873 = vsub.f32 %v3871, %v3872
    %v3874 = vand.u32 %v3873, 4294901760
    %3875 = vmatpush1.msra.mxu0 %v3874
    %3876 = vmatprep.subr.mxu0 0.0
    %v3877 = vand.u32 %v3732, 4294901760
    %v3878 = vsub.f32 %v3732, %v3877
    %v3879 = vand.u32 %v3878, 4294901760
    %v3880 = vsub.f32 %v3878, %v3879
    %v3881 = vand.u32 %v3880, 4294901760
    %3882 = vmatpush1.msra.mxu0 %v3881
    %3883 = vmatprep.subr.mxu0 0.0
    %v3884 = vand.u32 %v3731, 4294901760
    %v3885 = vsub.f32 %v3731, %v3884
    %v3886 = vand.u32 %v3885, 4294901760
    %v3887 = vsub.f32 %v3885, %v3886
    %v3888 = vand.u32 %v3887, 4294901760
    %3889 = vmatpush1.msra.mxu0 %v3888
    %3890 = vmatprep.subr.mxu0 0.0
    %v3891 = vand.u32 %v3730, 4294901760
    %v3892 = vsub.f32 %v3730, %v3891
    %v3893 = vand.u32 %v3892, 4294901760
    %v3894 = vsub.f32 %v3892, %v3893
    %v3895 = vand.u32 %v3894, 4294901760
    %3896 = vmatpush1.msra.mxu0 %v3895
    %3897 = vmatprep.subr.mxu0 0.0
    %v3898 = vand.u32 %v3729, 4294901760
    %v3899 = vsub.f32 %v3729, %v3898
    %v3900 = vand.u32 %v3899, 4294901760
    %v3901 = vsub.f32 %v3899, %v3900
    %v3902 = vand.u32 %v3901, 4294901760
    %3903 = vmatpush1.msra.mxu0 %v3902
    %3904 = vmatprep.subr.mxu0 0.0
    %v3905 = vand.u32 %v3728, 4294901760
    %v3906 = vsub.f32 %v3728, %v3905
    %v3907 = vand.u32 %v3906, 4294901760
    %v3908 = vsub.f32 %v3906, %v3907
    %v3909 = vand.u32 %v3908, 4294901760
    %3910 = vmatpush1.msra.mxu0 %v3909
    %3911 = vmatprep.subr.mxu0 0.0
    %v3912 = vand.u32 %v3727, 4294901760
    %v3913 = vsub.f32 %v3727, %v3912
    %v3914 = vand.u32 %v3913, 4294901760
    %v3915 = vsub.f32 %v3913, %v3914
    %v3916 = vand.u32 %v3915, 4294901760
    %3917 = vmatpush1.msra.mxu0 %v3916
    %3918 = vmatprep.subr.mxu0 0.0
    %v3919 = vand.u32 %v3726, 4294901760
    %v3920 = vsub.f32 %v3726, %v3919
    %v3921 = vand.u32 %v3920, 4294901760
    %v3922 = vsub.f32 %v3920, %v3921
    %v3923 = vand.u32 %v3922, 4294901760
    %3924 = vmatpush1.msra.mxu0 %v3923
    %3925 = vmatprep.subr.mxu0 0.0
    %3926 = vmatpush2.msra.mxu0 0.0
    %3927 = vmatprep.subr.mxu0 0.0
    %3928 = vmatpush2.msra.mxu0 0.0
    %3929 = vmatprep.subr.mxu0 0.0
    %3930 = vmatpush2.msra.mxu0 0.0
    %3931 = vmatprep.subr.mxu0 0.0
    %3932 = vmatpush2.msra.mxu0 0.0
    %3933 = vmatprep.subr.mxu0 0.0
    %3934 = vmatpush2.msra.mxu0 0.0
    %3935 = vmatprep.subr.mxu0 0.0
    %3936 = vmatpush2.msra.mxu0 0.0
    %3937 = vmatprep.subr.mxu0 0.0
    %3938 = vmatpush2.msra.mxu0 0.0
    %3939 = vmatprep.subr.mxu0 0.0
    %3940 = vmatpush2.msra.mxu0 0.0
    %3941 = vmatprep.subr.mxu0 0.0
    %3942 = vmatpush2.msra.mxu0 0.0
    %3943 = vmatprep.subr.mxu0 0.0
    %3944 = vmatpush2.msra.mxu0 0.0
    %3945 = vmatprep.subr.mxu0 0.0
    %3946 = vmatpush2.msra.mxu0 0.0
    %3947 = vmatprep.subr.mxu0 0.0
    %3948 = vmatpush2.msra.mxu0 0.0
    %3949 = vmatprep.subr.mxu0 0.0
    %3950 = vmatpush2.msra.mxu0 0.0
    %3951 = vmatprep.subr.mxu0 0.0
    %3952 = vmatpush2.msra.mxu0 0.0
    %3953 = vmatprep.subr.mxu0 0.0
    %3954 = vmatpush2.msra.mxu0 0.0
    %3955 = vmatprep.subr.mxu0 0.0
    %3956 = vmatpush2.msra.mxu0 0.0
    %3957 = vmatprep.mubr.f32.mxu0 0.0
    %v3958 = vand.u32 %v3749, 4294901760
    %3959 = vmatmul.mubr.f32.gmra.mxu0 %v3958
    %v3960 = vpop.f32.mrf.mxu0
    %v3961 = vadd.f32 %v3835, %v3960
    %v3962 = vpop.f32.mrf.mxu0
    %3963 = vmatprep.mubr.f32.mxu0 0.0
    %v3964 = vand.u32 %v3752, 4294901760
    %3965 = vmatmul.mubr.f32.gmra.mxu0 %v3964
    %v3966 = vpop.f32.mrf.mxu0
    %v3967 = vadd.f32 %v3845, %v3966
    %v3968 = vpop.f32.mrf.mxu0
    %3969 = vdwg.mxu0
    %3970 = vmatprep.subr.mxu0 0.0
    %3971 = vmatpush1.msra.mxu0 0.0
    %3972 = vmatprep.subr.mxu0 0.0
    %3973 = vmatpush1.msra.mxu0 0.0
    %3974 = vmatprep.subr.mxu0 0.0
    %3975 = vmatpush1.msra.mxu0 0.0
    %3976 = vmatprep.subr.mxu0 0.0
    %3977 = vmatpush1.msra.mxu0 0.0
    %3978 = vmatprep.subr.mxu0 0.0
    %3979 = vmatpush1.msra.mxu0 0.0
    %3980 = vmatprep.subr.mxu0 0.0
    %3981 = vmatpush1.msra.mxu0 0.0
    %3982 = vmatprep.subr.mxu0 0.0
    %3983 = vmatpush1.msra.mxu0 0.0
    %3984 = vmatprep.subr.mxu0 0.0
    %v3985 = vand.u32 %v3734, 4294901760
    %v3986 = vsub.f32 %v3734, %v3985
    %3987 = vmatpush1.msra.mxu0 %v3986
    %3988 = vmatprep.subr.mxu0 0.0
    %v3989 = vand.u32 %v3733, 4294901760
    %v3990 = vsub.f32 %v3733, %v3989
    %3991 = vmatpush1.msra.mxu0 %v3990
    %3992 = vmatprep.subr.mxu0 0.0
    %v3993 = vand.u32 %v3732, 4294901760
    %v3994 = vsub.f32 %v3732, %v3993
    %3995 = vmatpush1.msra.mxu0 %v3994
    %3996 = vmatprep.subr.mxu0 0.0
    %v3997 = vand.u32 %v3731, 4294901760
    %v3998 = vsub.f32 %v3731, %v3997
    %3999 = vmatpush1.msra.mxu0 %v3998
    %4000 = vmatprep.subr.mxu0 0.0
    %v4001 = vand.u32 %v3730, 4294901760
    %v4002 = vsub.f32 %v3730, %v4001
    %4003 = vmatpush1.msra.mxu0 %v4002
    %4004 = vmatprep.subr.mxu0 0.0
    %v4005 = vand.u32 %v3729, 4294901760
    %v4006 = vsub.f32 %v3729, %v4005
    %4007 = vmatpush1.msra.mxu0 %v4006
    %4008 = vmatprep.subr.mxu0 0.0
    %v4009 = vand.u32 %v3728, 4294901760
    %v4010 = vsub.f32 %v3728, %v4009
    %4011 = vmatpush1.msra.mxu0 %v4010
    %4012 = vmatprep.subr.mxu0 0.0
    %v4013 = vand.u32 %v3727, 4294901760
    %v4014 = vsub.f32 %v3727, %v4013
    %4015 = vmatpush1.msra.mxu0 %v4014
    %4016 = vmatprep.subr.mxu0 0.0
    %v4017 = vand.u32 %v3726, 4294901760
    %v4018 = vsub.f32 %v3726, %v4017
    %4019 = vmatpush1.msra.mxu0 %v4018
    %4020 = vmatprep.subr.mxu0 0.0
    %4021 = vmatpush2.msra.mxu0 0.0
    %4022 = vmatprep.subr.mxu0 0.0
    %4023 = vmatpush2.msra.mxu0 0.0
    %4024 = vmatprep.subr.mxu0 0.0
    %4025 = vmatpush2.msra.mxu0 0.0
    %4026 = vmatprep.subr.mxu0 0.0
    %4027 = vmatpush2.msra.mxu0 0.0
    %4028 = vmatprep.subr.mxu0 0.0
    %4029 = vmatpush2.msra.mxu0 0.0
    %4030 = vmatprep.subr.mxu0 0.0
    %4031 = vmatpush2.msra.mxu0 0.0
    %4032 = vmatprep.subr.mxu0 0.0
    %4033 = vmatpush2.msra.mxu0 0.0
    %4034 = vmatprep.subr.mxu0 0.0
    %4035 = vmatpush2.msra.mxu0 0.0
    %4036 = vmatprep.subr.mxu0 0.0
    %4037 = vmatpush2.msra.mxu0 0.0
    %4038 = vmatprep.subr.mxu0 0.0
    %4039 = vmatpush2.msra.mxu0 0.0
    %4040 = vmatprep.subr.mxu0 0.0
    %4041 = vmatpush2.msra.mxu0 0.0
    %4042 = vmatprep.subr.mxu0 0.0
    %4043 = vmatpush2.msra.mxu0 0.0
    %4044 = vmatprep.subr.mxu0 0.0
    %4045 = vmatpush2.msra.mxu0 0.0
    %4046 = vmatprep.subr.mxu0 0.0
    %4047 = vmatpush2.msra.mxu0 0.0
    %4048 = vmatprep.subr.mxu0 0.0
    %4049 = vmatpush2.msra.mxu0 0.0
    %4050 = vmatprep.subr.mxu0 0.0
    %4051 = vmatpush2.msra.mxu0 0.0
    %4052 = vmatprep.mubr.f32.mxu0 0.0
    %v4053 = vand.u32 %v3749, 4294901760
    %v4054 = vsub.f32 %v3749, %v4053
    %4055 = vmatmul.mubr.f32.gmra.mxu0 %v4054
    %v4056 = vpop.f32.mrf.mxu0
    %v4057 = vadd.f32 %v3961, %v4056
    %v4058 = vpop.f32.mrf.mxu0
    %4059 = vmatprep.mubr.f32.mxu0 0.0
    %v4060 = vand.u32 %v3752, 4294901760
    %v4061 = vsub.f32 %v3752, %v4060
    %4062 = vmatmul.mubr.f32.gmra.mxu0 %v4061
    %v4063 = vpop.f32.mrf.mxu0
    %v4064 = vadd.f32 %v3967, %v4063
    %v4065 = vpop.f32.mrf.mxu0
    %4066 = vdwg.mxu0
    %4067 = vmatprep.subr.mxu0 0.0
    %4068 = vmatpush1.msra.mxu0 0.0
    %4069 = vmatprep.subr.mxu0 0.0
    %4070 = vmatpush1.msra.mxu0 0.0
    %4071 = vmatprep.subr.mxu0 0.0
    %4072 = vmatpush1.msra.mxu0 0.0
    %4073 = vmatprep.subr.mxu0 0.0
    %4074 = vmatpush1.msra.mxu0 0.0
    %4075 = vmatprep.subr.mxu0 0.0
    %4076 = vmatpush1.msra.mxu0 0.0
    %4077 = vmatprep.subr.mxu0 0.0
    %4078 = vmatpush1.msra.mxu0 0.0
    %4079 = vmatprep.subr.mxu0 0.0
    %4080 = vmatpush1.msra.mxu0 0.0
    %4081 = vmatprep.subr.mxu0 0.0
    %v4082 = vand.u32 %v3734, 4294901760
    %4083 = vmatpush1.msra.mxu0 %v4082
    %4084 = vmatprep.subr.mxu0 0.0
    %v4085 = vand.u32 %v3733, 4294901760
    %4086 = vmatpush1.msra.mxu0 %v4085
    %4087 = vmatprep.subr.mxu0 0.0
    %v4088 = vand.u32 %v3732, 4294901760
    %4089 = vmatpush1.msra.mxu0 %v4088
    %4090 = vmatprep.subr.mxu0 0.0
    %v4091 = vand.u32 %v3731, 4294901760
    %4092 = vmatpush1.msra.mxu0 %v4091
    %4093 = vmatprep.subr.mxu0 0.0
    %v4094 = vand.u32 %v3730, 4294901760
    %4095 = vmatpush1.msra.mxu0 %v4094
    %4096 = vmatprep.subr.mxu0 0.0
    %v4097 = vand.u32 %v3729, 4294901760
    %4098 = vmatpush1.msra.mxu0 %v4097
    %4099 = vmatprep.subr.mxu0 0.0
    %v4100 = vand.u32 %v3728, 4294901760
    %4101 = vmatpush1.msra.mxu0 %v4100
    %4102 = vmatprep.subr.mxu0 0.0
    %v4103 = vand.u32 %v3727, 4294901760
    %4104 = vmatpush1.msra.mxu0 %v4103
    %4105 = vmatprep.subr.mxu0 0.0
    %v4106 = vand.u32 %v3726, 4294901760
    %4107 = vmatpush1.msra.mxu0 %v4106
    %4108 = vmatprep.subr.mxu0 0.0
    %4109 = vmatpush2.msra.mxu0 0.0
    %4110 = vmatprep.subr.mxu0 0.0
    %4111 = vmatpush2.msra.mxu0 0.0
    %4112 = vmatprep.subr.mxu0 0.0
    %4113 = vmatpush2.msra.mxu0 0.0
    %4114 = vmatprep.subr.mxu0 0.0
    %4115 = vmatpush2.msra.mxu0 0.0
    %4116 = vmatprep.subr.mxu0 0.0
    %4117 = vmatpush2.msra.mxu0 0.0
    %4118 = vmatprep.subr.mxu0 0.0
    %4119 = vmatpush2.msra.mxu0 0.0
    %4120 = vmatprep.subr.mxu0 0.0
    %4121 = vmatpush2.msra.mxu0 0.0
    %4122 = vmatprep.subr.mxu0 0.0
    %4123 = vmatpush2.msra.mxu0 0.0
    %4124 = vmatprep.subr.mxu0 0.0
    %4125 = vmatpush2.msra.mxu0 0.0
    %4126 = vmatprep.subr.mxu0 0.0
    %4127 = vmatpush2.msra.mxu0 0.0
    %4128 = vmatprep.subr.mxu0 0.0
    %4129 = vmatpush2.msra.mxu0 0.0
    %4130 = vmatprep.subr.mxu0 0.0
    %4131 = vmatpush2.msra.mxu0 0.0
    %4132 = vmatprep.subr.mxu0 0.0
    %4133 = vmatpush2.msra.mxu0 0.0
    %4134 = vmatprep.subr.mxu0 0.0
    %4135 = vmatpush2.msra.mxu0 0.0
    %4136 = vmatprep.subr.mxu0 0.0
    %4137 = vmatpush2.msra.mxu0 0.0
    %4138 = vmatprep.subr.mxu0 0.0
    %4139 = vmatpush2.msra.mxu0 0.0
    %4140 = vmatprep.mubr.f32.mxu0 0.0
    %v4141 = vand.u32 %v3749, 4294901760
    %v4142 = vsub.f32 %v3749, %v4141
    %v4143 = vand.u32 %v4142, 4294901760
    %4144 = vmatmul.mubr.f32.gmra.mxu0 %v4143
    %v4145 = vpop.f32.mrf.mxu0
    %v4146 = vadd.f32 %v4057, %v4145
    %v4147 = vpop.f32.mrf.mxu0
    %4148 = vmatprep.mubr.f32.mxu0 0.0
    %v4149 = vand.u32 %v3752, 4294901760
    %v4150 = vsub.f32 %v3752, %v4149
    %v4151 = vand.u32 %v4150, 4294901760
    %4152 = vmatmul.mubr.f32.gmra.mxu0 %v4151
    %v4153 = vpop.f32.mrf.mxu0
    %v4154 = vadd.f32 %v4064, %v4153
    %v4155 = vpop.f32.mrf.mxu0
    %4156 = vdwg.mxu0
    %4157 = vmatprep.subr.mxu0 0.0
    %4158 = vmatpush1.msra.mxu0 0.0
    %4159 = vmatprep.subr.mxu0 0.0
    %4160 = vmatpush1.msra.mxu0 0.0
    %4161 = vmatprep.subr.mxu0 0.0
    %4162 = vmatpush1.msra.mxu0 0.0
    %4163 = vmatprep.subr.mxu0 0.0
    %4164 = vmatpush1.msra.mxu0 0.0
    %4165 = vmatprep.subr.mxu0 0.0
    %4166 = vmatpush1.msra.mxu0 0.0
    %4167 = vmatprep.subr.mxu0 0.0
    %4168 = vmatpush1.msra.mxu0 0.0
    %4169 = vmatprep.subr.mxu0 0.0
    %4170 = vmatpush1.msra.mxu0 0.0
    %4171 = vmatprep.subr.mxu0 0.0
    %v4172 = vand.u32 %v3734, 4294901760
    %v4173 = vsub.f32 %v3734, %v4172
    %v4174 = vand.u32 %v4173, 4294901760
    %4175 = vmatpush1.msra.mxu0 %v4174
    %4176 = vmatprep.subr.mxu0 0.0
    %v4177 = vand.u32 %v3733, 4294901760
    %v4178 = vsub.f32 %v3733, %v4177
    %v4179 = vand.u32 %v4178, 4294901760
    %4180 = vmatpush1.msra.mxu0 %v4179
    %4181 = vmatprep.subr.mxu0 0.0
    %v4182 = vand.u32 %v3732, 4294901760
    %v4183 = vsub.f32 %v3732, %v4182
    %v4184 = vand.u32 %v4183, 4294901760
    %4185 = vmatpush1.msra.mxu0 %v4184
    %4186 = vmatprep.subr.mxu0 0.0
    %v4187 = vand.u32 %v3731, 4294901760
    %v4188 = vsub.f32 %v3731, %v4187
    %v4189 = vand.u32 %v4188, 4294901760
    %4190 = vmatpush1.msra.mxu0 %v4189
    %4191 = vmatprep.subr.mxu0 0.0
    %v4192 = vand.u32 %v3730, 4294901760
    %v4193 = vsub.f32 %v3730, %v4192
    %v4194 = vand.u32 %v4193, 4294901760
    %4195 = vmatpush1.msra.mxu0 %v4194
    %4196 = vmatprep.subr.mxu0 0.0
    %v4197 = vand.u32 %v3729, 4294901760
    %v4198 = vsub.f32 %v3729, %v4197
    %v4199 = vand.u32 %v4198, 4294901760
    %4200 = vmatpush1.msra.mxu0 %v4199
    %4201 = vmatprep.subr.mxu0 0.0
    %v4202 = vand.u32 %v3728, 4294901760
    %v4203 = vsub.f32 %v3728, %v4202
    %v4204 = vand.u32 %v4203, 4294901760
    %4205 = vmatpush1.msra.mxu0 %v4204
    %4206 = vmatprep.subr.mxu0 0.0
    %v4207 = vand.u32 %v3727, 4294901760
    %v4208 = vsub.f32 %v3727, %v4207
    %v4209 = vand.u32 %v4208, 4294901760
    %4210 = vmatpush1.msra.mxu0 %v4209
    %4211 = vmatprep.subr.mxu0 0.0
    %v4212 = vand.u32 %v3726, 4294901760
    %v4213 = vsub.f32 %v3726, %v4212
    %v4214 = vand.u32 %v4213, 4294901760
    %4215 = vmatpush1.msra.mxu0 %v4214
    %4216 = vmatprep.subr.mxu0 0.0
    %4217 = vmatpush2.msra.mxu0 0.0
    %4218 = vmatprep.subr.mxu0 0.0
    %4219 = vmatpush2.msra.mxu0 0.0
    %4220 = vmatprep.subr.mxu0 0.0
    %4221 = vmatpush2.msra.mxu0 0.0
    %4222 = vmatprep.subr.mxu0 0.0
    %4223 = vmatpush2.msra.mxu0 0.0
    %4224 = vmatprep.subr.mxu0 0.0
    %4225 = vmatpush2.msra.mxu0 0.0
    %4226 = vmatprep.subr.mxu0 0.0
    %4227 = vmatpush2.msra.mxu0 0.0
    %4228 = vmatprep.subr.mxu0 0.0
    %4229 = vmatpush2.msra.mxu0 0.0
    %4230 = vmatprep.subr.mxu0 0.0
    %4231 = vmatpush2.msra.mxu0 0.0
    %4232 = vmatprep.subr.mxu0 0.0
    %4233 = vmatpush2.msra.mxu0 0.0
    %4234 = vmatprep.subr.mxu0 0.0
    %4235 = vmatpush2.msra.mxu0 0.0
    %4236 = vmatprep.subr.mxu0 0.0
    %4237 = vmatpush2.msra.mxu0 0.0
    %4238 = vmatprep.subr.mxu0 0.0
    %4239 = vmatpush2.msra.mxu0 0.0
    %4240 = vmatprep.subr.mxu0 0.0
    %4241 = vmatpush2.msra.mxu0 0.0
    %4242 = vmatprep.subr.mxu0 0.0
    %4243 = vmatpush2.msra.mxu0 0.0
    %4244 = vmatprep.subr.mxu0 0.0
    %4245 = vmatpush2.msra.mxu0 0.0
    %4246 = vmatprep.subr.mxu0 0.0
    %4247 = vmatpush2.msra.mxu0 0.0
    %4248 = vmatprep.mubr.f32.mxu0 0.0
    %v4249 = vand.u32 %v3749, 4294901760
    %4250 = vmatmul.mubr.f32.gmra.mxu0 %v4249
    %v4251 = vpop.f32.mrf.mxu0
    %v4252 = vadd.f32 %v4146, %v4251
    %v4253 = vpop.f32.mrf.mxu0
    %4254 = vmatprep.mubr.f32.mxu0 0.0
    %v4255 = vand.u32 %v3752, 4294901760
    %4256 = vmatmul.mubr.f32.gmra.mxu0 %v4255
    %v4257 = vpop.f32.mrf.mxu0
    %v4258 = vadd.f32 %v4154, %v4257
    %v4259 = vpop.f32.mrf.mxu0
    %4260 = vdwg.mxu0
    %4261 = vmatprep.subr.mxu0 0.0
    %4262 = vmatpush1.msra.mxu0 0.0
    %4263 = vmatprep.subr.mxu0 0.0
    %4264 = vmatpush1.msra.mxu0 0.0
    %4265 = vmatprep.subr.mxu0 0.0
    %4266 = vmatpush1.msra.mxu0 0.0
    %4267 = vmatprep.subr.mxu0 0.0
    %4268 = vmatpush1.msra.mxu0 0.0
    %4269 = vmatprep.subr.mxu0 0.0
    %4270 = vmatpush1.msra.mxu0 0.0
    %4271 = vmatprep.subr.mxu0 0.0
    %4272 = vmatpush1.msra.mxu0 0.0
    %4273 = vmatprep.subr.mxu0 0.0
    %4274 = vmatpush1.msra.mxu0 0.0
    %4275 = vmatprep.subr.mxu0 0.0
    %v4276 = vand.u32 %v3734, 4294901760
    %4277 = vmatpush1.msra.mxu0 %v4276
    %4278 = vmatprep.subr.mxu0 0.0
    %v4279 = vand.u32 %v3733, 4294901760
    %4280 = vmatpush1.msra.mxu0 %v4279
    %4281 = vmatprep.subr.mxu0 0.0
    %v4282 = vand.u32 %v3732, 4294901760
    %4283 = vmatpush1.msra.mxu0 %v4282
    %4284 = vmatprep.subr.mxu0 0.0
    %v4285 = vand.u32 %v3731, 4294901760
    %4286 = vmatpush1.msra.mxu0 %v4285
    %4287 = vmatprep.subr.mxu0 0.0
    %v4288 = vand.u32 %v3730, 4294901760
    %4289 = vmatpush1.msra.mxu0 %v4288
    %4290 = vmatprep.subr.mxu0 0.0
    %v4291 = vand.u32 %v3729, 4294901760
    %4292 = vmatpush1.msra.mxu0 %v4291
    %4293 = vmatprep.subr.mxu0 0.0
    %v4294 = vand.u32 %v3728, 4294901760
    %4295 = vmatpush1.msra.mxu0 %v4294
    %4296 = vmatprep.subr.mxu0 0.0
    %v4297 = vand.u32 %v3727, 4294901760
    %4298 = vmatpush1.msra.mxu0 %v4297
    %4299 = vmatprep.subr.mxu0 0.0
    %v4300 = vand.u32 %v3726, 4294901760
    %4301 = vmatpush1.msra.mxu0 %v4300
    %4302 = vmatprep.subr.mxu0 0.0
    %4303 = vmatpush2.msra.mxu0 0.0
    %4304 = vmatprep.subr.mxu0 0.0
    %4305 = vmatpush2.msra.mxu0 0.0
    %4306 = vmatprep.subr.mxu0 0.0
    %4307 = vmatpush2.msra.mxu0 0.0
    %4308 = vmatprep.subr.mxu0 0.0
    %4309 = vmatpush2.msra.mxu0 0.0
    %4310 = vmatprep.subr.mxu0 0.0
    %4311 = vmatpush2.msra.mxu0 0.0
    %4312 = vmatprep.subr.mxu0 0.0
    %4313 = vmatpush2.msra.mxu0 0.0
    %4314 = vmatprep.subr.mxu0 0.0
    %4315 = vmatpush2.msra.mxu0 0.0
    %4316 = vmatprep.subr.mxu0 0.0
    %4317 = vmatpush2.msra.mxu0 0.0
    %4318 = vmatprep.subr.mxu0 0.0
    %4319 = vmatpush2.msra.mxu0 0.0
    %4320 = vmatprep.subr.mxu0 0.0
    %4321 = vmatpush2.msra.mxu0 0.0
    %4322 = vmatprep.subr.mxu0 0.0
    %4323 = vmatpush2.msra.mxu0 0.0
    %4324 = vmatprep.subr.mxu0 0.0
    %4325 = vmatpush2.msra.mxu0 0.0
    %4326 = vmatprep.subr.mxu0 0.0
    %4327 = vmatpush2.msra.mxu0 0.0
    %4328 = vmatprep.subr.mxu0 0.0
    %4329 = vmatpush2.msra.mxu0 0.0
    %4330 = vmatprep.subr.mxu0 0.0
    %4331 = vmatpush2.msra.mxu0 0.0
    %4332 = vmatprep.subr.mxu0 0.0
    %4333 = vmatpush2.msra.mxu0 0.0
    %4334 = vmatprep.mubr.f32.mxu0 0.0
    %v4335 = vand.u32 %v3749, 4294901760
    %4336 = vmatmul.mubr.f32.gmra.mxu0 %v4335
    %v4337 = vpop.f32.mrf.mxu0
    %v4338 = vadd.f32 %v4252, %v4337
    %v4339 = vpop.f32.mrf.mxu0
    %4340 = vmatprep.mubr.f32.mxu0 0.0
    %v4341 = vand.u32 %v3752, 4294901760
    %4342 = vmatmul.mubr.f32.gmra.mxu0 %v4341
    %v4343 = vpop.f32.mrf.mxu0
    %v4344 = vadd.f32 %v4258, %v4343
    %v4345 = vpop.f32.mrf.mxu0
    %4346 = vdwg.mxu0
    %4347 = vst [vmem:[#allocation10] sm:$0xff] %v4338
    %4348 = vst [vmem:[#allocation10 + $0x8] sm:$0xff] %v4344
    %v4349 = vmax.f32 %v4338, 0.0
    %v4350 = vmax.f32 %v4344, 0.0
    %4351 = vst [vmem:[#allocation7] sm:$0xff] %v4349
    %4352 = vst [vmem:[#allocation7 + $0x10] sm:$0xff] %v4350
    %4353 = vst.msk [vmem:[#allocation7 + $0x8] sm:$0xff] %vm3501, 0.0
    %4354 = vst.msk [vmem:[#allocation7 + $0x18] sm:$0xff] %vm3501, 0.0
    %v4355 = vld [vmem:[#allocation7] sm:$0xff]
    %v4356 = vld [vmem:[#allocation7 + $0x10] sm:$0xff]
    %v4357 = vld [vmem:[#allocation7 + $0x8] sm:$0xff]
    %v4358 = vld [vmem:[#allocation7 + $0x18] sm:$0xff]
    %4363 = vrot.lane.b32.xlu0 %v4355, 127
    %v4364 = vpop.permute.xlu0 %4363
    %4365 = vrot.lane.b32.xlu0 %v4357, 127
    %v4366 = vpop.permute.xlu0 %4365
    %4367 = vrot.lane.b32.xlu0 %v4356, 127
    %v4368 = vpop.permute.xlu0 %4367
    %4369 = vrot.lane.b32.xlu0 %v4358, 127
    %v4370 = vpop.permute.xlu0 %4369
    %v4371 = vsel %vm1670, %v4364, %v4366
    %v4372 = vsel %vm1670, %v4368, %v4370
    %v4375 = vmax.f32 %v4355, %v4371
    %v4376 = vmax.f32 %v4356, %v4372
    %v4379 = vmax.f32 %v4357, %v4366
    %v4380 = vmax.f32 %v4358, %v4370
    %4385 = vrot.lane.b32.xlu0 %v4375, 120
    %v4386 = vpop.permute.xlu0 %4385
    %4387 = vrot.lane.b32.xlu0 %v4379, 120
    %v4388 = vpop.permute.xlu0 %4387
    %4389 = vrot.lane.b32.xlu0 %v4376, 120
    %v4390 = vpop.permute.xlu0 %4389
    %4391 = vrot.lane.b32.xlu0 %v4380, 120
    %v4392 = vpop.permute.xlu0 %4391
    %vm4393 = vcmask 982016
    %v4394 = vsel %vm4393, %v4386, %v4388
    %v4395 = vsel %vm4393, %v4390, %v4392
    %v4398 = vmax.f32 %v4375, %v4394
    %v4399 = vmax.f32 %v4376, %v4395
    %v4400 = vld [vmem:[%s6] sm:$0xff]
    %v4401 = vld [vmem:[%s6 + $0x8] sm:$0xff]
    %v4402 = vld [vmem:[%s6 + $0x10] sm:$0xff]
    %v4403 = vld [vmem:[%s6 + $0x18] sm:$0xff]
    %v4404 = vld [vmem:[%s6 + $0x20] sm:$0xff]
    %v4405 = vld [vmem:[%s6 + $0x28] sm:$0xff]
    %v4406 = vld [vmem:[%s6 + $0x30] sm:$0xff]
    %v4407 = vld [vmem:[%s6 + $0x38] sm:$0xff]
    %v4408 = vld [vmem:[%s6 + $0x40] sm:$0xff]
    %v4409 = vld [vmem:[%s6 + $0x48] sm:$0xff]
    %v4410 = vld [vmem:[%s6 + $0x50] sm:$0xff]
    %v4411 = vld [vmem:[%s6 + $0x58] sm:$0xff]
    %v4412 = vld [vmem:[%s6 + $0x60] sm:$0xff]
    %v4413 = vld [vmem:[%s6 + $0x68] sm:$0xff]
    %v4414 = vld [vmem:[%s6 + $0x70] sm:$0xff]
    %v4415 = vld [vmem:[%s6 + $0x78] sm:$0xff]
    %4416 = vmatprep.subr.mxu0 0.0
    %v4417 = vand.u32 %v4415, 4294901760
    %4418 = vmatpush1.msra.mxu0 %v4417
    %4419 = vmatprep.subr.mxu0 0.0
    %v4420 = vand.u32 %v4414, 4294901760
    %4421 = vmatpush1.msra.mxu0 %v4420
    %4422 = vmatprep.subr.mxu0 0.0
    %v4423 = vand.u32 %v4413, 4294901760
    %4424 = vmatpush1.msra.mxu0 %v4423
    %4425 = vmatprep.subr.mxu0 0.0
    %v4426 = vand.u32 %v4412, 4294901760
    %4427 = vmatpush1.msra.mxu0 %v4426
    %4428 = vmatprep.subr.mxu0 0.0
    %v4429 = vand.u32 %v4411, 4294901760
    %4430 = vmatpush1.msra.mxu0 %v4429
    %4431 = vmatprep.subr.mxu0 0.0
    %v4432 = vand.u32 %v4410, 4294901760
    %4433 = vmatpush1.msra.mxu0 %v4432
    %4434 = vmatprep.subr.mxu0 0.0
    %v4435 = vand.u32 %v4409, 4294901760
    %4436 = vmatpush1.msra.mxu0 %v4435
    %4437 = vmatprep.subr.mxu0 0.0
    %v4438 = vand.u32 %v4408, 4294901760
    %4439 = vmatpush1.msra.mxu0 %v4438
    %4440 = vmatprep.subr.mxu0 0.0
    %v4441 = vand.u32 %v4407, 4294901760
    %4442 = vmatpush1.msra.mxu0 %v4441
    %4443 = vmatprep.subr.mxu0 0.0
    %v4444 = vand.u32 %v4406, 4294901760
    %4445 = vmatpush1.msra.mxu0 %v4444
    %4446 = vmatprep.subr.mxu0 0.0
    %v4447 = vand.u32 %v4405, 4294901760
    %4448 = vmatpush1.msra.mxu0 %v4447
    %4449 = vmatprep.subr.mxu0 0.0
    %v4450 = vand.u32 %v4404, 4294901760
    %4451 = vmatpush1.msra.mxu0 %v4450
    %4452 = vmatprep.subr.mxu0 0.0
    %v4453 = vand.u32 %v4403, 4294901760
    %4454 = vmatpush1.msra.mxu0 %v4453
    %4455 = vmatprep.subr.mxu0 0.0
    %v4456 = vand.u32 %v4402, 4294901760
    %4457 = vmatpush1.msra.mxu0 %v4456
    %4458 = vmatprep.subr.mxu0 0.0
    %v4459 = vand.u32 %v4401, 4294901760
    %4460 = vmatpush1.msra.mxu0 %v4459
    %4461 = vmatprep.subr.mxu0 0.0
    %v4462 = vand.u32 %v4400, 4294901760
    %4463 = vmatpush1.msra.mxu0 %v4462
    %4464 = vmatprep.subr.mxu0 0.0
    %4465 = vmatpush2.msra.mxu0 0.0
    %4466 = vmatprep.subr.mxu0 0.0
    %4467 = vmatpush2.msra.mxu0 0.0
    %4468 = vmatprep.subr.mxu0 0.0
    %4469 = vmatpush2.msra.mxu0 0.0
    %4470 = vmatprep.subr.mxu0 0.0
    %4471 = vmatpush2.msra.mxu0 0.0
    %4472 = vmatprep.subr.mxu0 0.0
    %4473 = vmatpush2.msra.mxu0 0.0
    %4474 = vmatprep.subr.mxu0 0.0
    %4475 = vmatpush2.msra.mxu0 0.0
    %4476 = vmatprep.subr.mxu0 0.0
    %4477 = vmatpush2.msra.mxu0 0.0
    %4478 = vmatprep.subr.mxu0 0.0
    %4479 = vmatpush2.msra.mxu0 0.0
    %4480 = vmatprep.subr.mxu0 0.0
    %4481 = vmatpush2.msra.mxu0 0.0
    %4482 = vmatprep.subr.mxu0 0.0
    %4483 = vmatpush2.msra.mxu0 0.0
    %4484 = vmatprep.subr.mxu0 0.0
    %4485 = vmatpush2.msra.mxu0 0.0
    %4486 = vmatprep.subr.mxu0 0.0
    %4487 = vmatpush2.msra.mxu0 0.0
    %4488 = vmatprep.subr.mxu0 0.0
    %4489 = vmatpush2.msra.mxu0 0.0
    %4490 = vmatprep.subr.mxu0 0.0
    %4491 = vmatpush2.msra.mxu0 0.0
    %4492 = vmatprep.subr.mxu0 0.0
    %4493 = vmatpush2.msra.mxu0 0.0
    %4494 = vmatprep.subr.mxu0 0.0
    %4495 = vmatpush2.msra.mxu0 0.0
    %4496 = vmatprep.mubr.f32.mxu0 0.0
    %v4497 = vand.u32 %v4398, 4294901760
    %v4498 = vsub.f32 %v4398, %v4497
    %v4499 = vand.u32 %v4498, 4294901760
    %v4500 = vsub.f32 %v4498, %v4499
    %v4501 = vand.u32 %v4500, 4294901760
    %4502 = vmatmul.mubr.f32.gmra.mxu0 %v4501
    %v4503 = vpop.f32.mrf.mxu0
    %v4504 = vadd.f32 0.0, %v4503
    %v4505 = vpop.f32.mrf.mxu0
    %4506 = vmatprep.mubr.f32.mxu0 0.0
    %v4507 = vand.u32 %v4399, 4294901760
    %v4508 = vsub.f32 %v4399, %v4507
    %v4509 = vand.u32 %v4508, 4294901760
    %v4510 = vsub.f32 %v4508, %v4509
    %v4511 = vand.u32 %v4510, 4294901760
    %4512 = vmatmul.mubr.f32.gmra.mxu0 %v4511
    %v4513 = vpop.f32.mrf.mxu0
    %v4514 = vadd.f32 0.0, %v4513
    %v4515 = vpop.f32.mrf.mxu0
    %4516 = vdwg.mxu0
    %4517 = vmatprep.subr.mxu0 0.0
    %v4518 = vand.u32 %v4415, 4294901760
    %v4519 = vsub.f32 %v4415, %v4518
    %v4520 = vand.u32 %v4519, 4294901760
    %v4521 = vsub.f32 %v4519, %v4520
    %v4522 = vand.u32 %v4521, 4294901760
    %4523 = vmatpush1.msra.mxu0 %v4522
    %4524 = vmatprep.subr.mxu0 0.0
    %v4525 = vand.u32 %v4414, 4294901760
    %v4526 = vsub.f32 %v4414, %v4525
    %v4527 = vand.u32 %v4526, 4294901760
    %v4528 = vsub.f32 %v4526, %v4527
    %v4529 = vand.u32 %v4528, 4294901760
    %4530 = vmatpush1.msra.mxu0 %v4529
    %4531 = vmatprep.subr.mxu0 0.0
    %v4532 = vand.u32 %v4413, 4294901760
    %v4533 = vsub.f32 %v4413, %v4532
    %v4534 = vand.u32 %v4533, 4294901760
    %v4535 = vsub.f32 %v4533, %v4534
    %v4536 = vand.u32 %v4535, 4294901760
    %4537 = vmatpush1.msra.mxu0 %v4536
    %4538 = vmatprep.subr.mxu0 0.0
    %v4539 = vand.u32 %v4412, 4294901760
    %v4540 = vsub.f32 %v4412, %v4539
    %v4541 = vand.u32 %v4540, 4294901760
    %v4542 = vsub.f32 %v4540, %v4541
    %v4543 = vand.u32 %v4542, 4294901760
    %4544 = vmatpush1.msra.mxu0 %v4543
    %4545 = vmatprep.subr.mxu0 0.0
    %v4546 = vand.u32 %v4411, 4294901760
    %v4547 = vsub.f32 %v4411, %v4546
    %v4548 = vand.u32 %v4547, 4294901760
    %v4549 = vsub.f32 %v4547, %v4548
    %v4550 = vand.u32 %v4549, 4294901760
    %4551 = vmatpush1.msra.mxu0 %v4550
    %4552 = vmatprep.subr.mxu0 0.0
    %v4553 = vand.u32 %v4410, 4294901760
    %v4554 = vsub.f32 %v4410, %v4553
    %v4555 = vand.u32 %v4554, 4294901760
    %v4556 = vsub.f32 %v4554, %v4555
    %v4557 = vand.u32 %v4556, 4294901760
    %4558 = vmatpush1.msra.mxu0 %v4557
    %4559 = vmatprep.subr.mxu0 0.0
    %v4560 = vand.u32 %v4409, 4294901760
    %v4561 = vsub.f32 %v4409, %v4560
    %v4562 = vand.u32 %v4561, 4294901760
    %v4563 = vsub.f32 %v4561, %v4562
    %v4564 = vand.u32 %v4563, 4294901760
    %4565 = vmatpush1.msra.mxu0 %v4564
    %4566 = vmatprep.subr.mxu0 0.0
    %v4567 = vand.u32 %v4408, 4294901760
    %v4568 = vsub.f32 %v4408, %v4567
    %v4569 = vand.u32 %v4568, 4294901760
    %v4570 = vsub.f32 %v4568, %v4569
    %v4571 = vand.u32 %v4570, 4294901760
    %4572 = vmatpush1.msra.mxu0 %v4571
    %4573 = vmatprep.subr.mxu0 0.0
    %v4574 = vand.u32 %v4407, 4294901760
    %v4575 = vsub.f32 %v4407, %v4574
    %v4576 = vand.u32 %v4575, 4294901760
    %v4577 = vsub.f32 %v4575, %v4576
    %v4578 = vand.u32 %v4577, 4294901760
    %4579 = vmatpush1.msra.mxu0 %v4578
    %4580 = vmatprep.subr.mxu0 0.0
    %v4581 = vand.u32 %v4406, 4294901760
    %v4582 = vsub.f32 %v4406, %v4581
    %v4583 = vand.u32 %v4582, 4294901760
    %v4584 = vsub.f32 %v4582, %v4583
    %v4585 = vand.u32 %v4584, 4294901760
    %4586 = vmatpush1.msra.mxu0 %v4585
    %4587 = vmatprep.subr.mxu0 0.0
    %v4588 = vand.u32 %v4405, 4294901760
    %v4589 = vsub.f32 %v4405, %v4588
    %v4590 = vand.u32 %v4589, 4294901760
    %v4591 = vsub.f32 %v4589, %v4590
    %v4592 = vand.u32 %v4591, 4294901760
    %4593 = vmatpush1.msra.mxu0 %v4592
    %4594 = vmatprep.subr.mxu0 0.0
    %v4595 = vand.u32 %v4404, 4294901760
    %v4596 = vsub.f32 %v4404, %v4595
    %v4597 = vand.u32 %v4596, 4294901760
    %v4598 = vsub.f32 %v4596, %v4597
    %v4599 = vand.u32 %v4598, 4294901760
    %4600 = vmatpush1.msra.mxu0 %v4599
    %4601 = vmatprep.subr.mxu0 0.0
    %v4602 = vand.u32 %v4403, 4294901760
    %v4603 = vsub.f32 %v4403, %v4602
    %v4604 = vand.u32 %v4603, 4294901760
    %v4605 = vsub.f32 %v4603, %v4604
    %v4606 = vand.u32 %v4605, 4294901760
    %4607 = vmatpush1.msra.mxu0 %v4606
    %4608 = vmatprep.subr.mxu0 0.0
    %v4609 = vand.u32 %v4402, 4294901760
    %v4610 = vsub.f32 %v4402, %v4609
    %v4611 = vand.u32 %v4610, 4294901760
    %v4612 = vsub.f32 %v4610, %v4611
    %v4613 = vand.u32 %v4612, 4294901760
    %4614 = vmatpush1.msra.mxu0 %v4613
    %4615 = vmatprep.subr.mxu0 0.0
    %v4616 = vand.u32 %v4401, 4294901760
    %v4617 = vsub.f32 %v4401, %v4616
    %v4618 = vand.u32 %v4617, 4294901760
    %v4619 = vsub.f32 %v4617, %v4618
    %v4620 = vand.u32 %v4619, 4294901760
    %4621 = vmatpush1.msra.mxu0 %v4620
    %4622 = vmatprep.subr.mxu0 0.0
    %v4623 = vand.u32 %v4400, 4294901760
    %v4624 = vsub.f32 %v4400, %v4623
    %v4625 = vand.u32 %v4624, 4294901760
    %v4626 = vsub.f32 %v4624, %v4625
    %v4627 = vand.u32 %v4626, 4294901760
    %4628 = vmatpush1.msra.mxu0 %v4627
    %4629 = vmatprep.subr.mxu0 0.0
    %4630 = vmatpush2.msra.mxu0 0.0
    %4631 = vmatprep.subr.mxu0 0.0
    %4632 = vmatpush2.msra.mxu0 0.0
    %4633 = vmatprep.subr.mxu0 0.0
    %4634 = vmatpush2.msra.mxu0 0.0
    %4635 = vmatprep.subr.mxu0 0.0
    %4636 = vmatpush2.msra.mxu0 0.0
    %4637 = vmatprep.subr.mxu0 0.0
    %4638 = vmatpush2.msra.mxu0 0.0
    %4639 = vmatprep.subr.mxu0 0.0
    %4640 = vmatpush2.msra.mxu0 0.0
    %4641 = vmatprep.subr.mxu0 0.0
    %4642 = vmatpush2.msra.mxu0 0.0
    %4643 = vmatprep.subr.mxu0 0.0
    %4644 = vmatpush2.msra.mxu0 0.0
    %4645 = vmatprep.subr.mxu0 0.0
    %4646 = vmatpush2.msra.mxu0 0.0
    %4647 = vmatprep.subr.mxu0 0.0
    %4648 = vmatpush2.msra.mxu0 0.0
    %4649 = vmatprep.subr.mxu0 0.0
    %4650 = vmatpush2.msra.mxu0 0.0
    %4651 = vmatprep.subr.mxu0 0.0
    %4652 = vmatpush2.msra.mxu0 0.0
    %4653 = vmatprep.subr.mxu0 0.0
    %4654 = vmatpush2.msra.mxu0 0.0
    %4655 = vmatprep.subr.mxu0 0.0
    %4656 = vmatpush2.msra.mxu0 0.0
    %4657 = vmatprep.subr.mxu0 0.0
    %4658 = vmatpush2.msra.mxu0 0.0
    %4659 = vmatprep.subr.mxu0 0.0
    %4660 = vmatpush2.msra.mxu0 0.0
    %4661 = vmatprep.mubr.f32.mxu0 0.0
    %v4662 = vand.u32 %v4398, 4294901760
    %4663 = vmatmul.mubr.f32.gmra.mxu0 %v4662
    %v4664 = vpop.f32.mrf.mxu0
    %v4665 = vadd.f32 %v4504, %v4664
    %v4666 = vpop.f32.mrf.mxu0
    %4667 = vmatprep.mubr.f32.mxu0 0.0
    %v4668 = vand.u32 %v4399, 4294901760
    %4669 = vmatmul.mubr.f32.gmra.mxu0 %v4668
    %v4670 = vpop.f32.mrf.mxu0
    %v4671 = vadd.f32 %v4514, %v4670
    %v4672 = vpop.f32.mrf.mxu0
    %4673 = vdwg.mxu0
    %4674 = vmatprep.subr.mxu0 0.0
    %v4675 = vand.u32 %v4415, 4294901760
    %v4676 = vsub.f32 %v4415, %v4675
    %4677 = vmatpush1.msra.mxu0 %v4676
    %4678 = vmatprep.subr.mxu0 0.0
    %v4679 = vand.u32 %v4414, 4294901760
    %v4680 = vsub.f32 %v4414, %v4679
    %4681 = vmatpush1.msra.mxu0 %v4680
    %4682 = vmatprep.subr.mxu0 0.0
    %v4683 = vand.u32 %v4413, 4294901760
    %v4684 = vsub.f32 %v4413, %v4683
    %4685 = vmatpush1.msra.mxu0 %v4684
    %4686 = vmatprep.subr.mxu0 0.0
    %v4687 = vand.u32 %v4412, 4294901760
    %v4688 = vsub.f32 %v4412, %v4687
    %4689 = vmatpush1.msra.mxu0 %v4688
    %4690 = vmatprep.subr.mxu0 0.0
    %v4691 = vand.u32 %v4411, 4294901760
    %v4692 = vsub.f32 %v4411, %v4691
    %4693 = vmatpush1.msra.mxu0 %v4692
    %4694 = vmatprep.subr.mxu0 0.0
    %v4695 = vand.u32 %v4410, 4294901760
    %v4696 = vsub.f32 %v4410, %v4695
    %4697 = vmatpush1.msra.mxu0 %v4696
    %4698 = vmatprep.subr.mxu0 0.0
    %v4699 = vand.u32 %v4409, 4294901760
    %v4700 = vsub.f32 %v4409, %v4699
    %4701 = vmatpush1.msra.mxu0 %v4700
    %4702 = vmatprep.subr.mxu0 0.0
    %v4703 = vand.u32 %v4408, 4294901760
    %v4704 = vsub.f32 %v4408, %v4703
    %4705 = vmatpush1.msra.mxu0 %v4704
    %4706 = vmatprep.subr.mxu0 0.0
    %v4707 = vand.u32 %v4407, 4294901760
    %v4708 = vsub.f32 %v4407, %v4707
    %4709 = vmatpush1.msra.mxu0 %v4708
    %4710 = vmatprep.subr.mxu0 0.0
    %v4711 = vand.u32 %v4406, 4294901760
    %v4712 = vsub.f32 %v4406, %v4711
    %4713 = vmatpush1.msra.mxu0 %v4712
    %4714 = vmatprep.subr.mxu0 0.0
    %v4715 = vand.u32 %v4405, 4294901760
    %v4716 = vsub.f32 %v4405, %v4715
    %4717 = vmatpush1.msra.mxu0 %v4716
    %4718 = vmatprep.subr.mxu0 0.0
    %v4719 = vand.u32 %v4404, 4294901760
    %v4720 = vsub.f32 %v4404, %v4719
    %4721 = vmatpush1.msra.mxu0 %v4720
    %4722 = vmatprep.subr.mxu0 0.0
    %v4723 = vand.u32 %v4403, 4294901760
    %v4724 = vsub.f32 %v4403, %v4723
    %4725 = vmatpush1.msra.mxu0 %v4724
    %4726 = vmatprep.subr.mxu0 0.0
    %v4727 = vand.u32 %v4402, 4294901760
    %v4728 = vsub.f32 %v4402, %v4727
    %4729 = vmatpush1.msra.mxu0 %v4728
    %4730 = vmatprep.subr.mxu0 0.0
    %v4731 = vand.u32 %v4401, 4294901760
    %v4732 = vsub.f32 %v4401, %v4731
    %4733 = vmatpush1.msra.mxu0 %v4732
    %4734 = vmatprep.subr.mxu0 0.0
    %v4735 = vand.u32 %v4400, 4294901760
    %v4736 = vsub.f32 %v4400, %v4735
    %4737 = vmatpush1.msra.mxu0 %v4736
    %4738 = vmatprep.subr.mxu0 0.0
    %4739 = vmatpush2.msra.mxu0 0.0
    %4740 = vmatprep.subr.mxu0 0.0
    %4741 = vmatpush2.msra.mxu0 0.0
    %4742 = vmatprep.subr.mxu0 0.0
    %4743 = vmatpush2.msra.mxu0 0.0
    %4744 = vmatprep.subr.mxu0 0.0
    %4745 = vmatpush2.msra.mxu0 0.0
    %4746 = vmatprep.subr.mxu0 0.0
    %4747 = vmatpush2.msra.mxu0 0.0
    %4748 = vmatprep.subr.mxu0 0.0
    %4749 = vmatpush2.msra.mxu0 0.0
    %4750 = vmatprep.subr.mxu0 0.0
    %4751 = vmatpush2.msra.mxu0 0.0
    %4752 = vmatprep.subr.mxu0 0.0
    %4753 = vmatpush2.msra.mxu0 0.0
    %4754 = vmatprep.subr.mxu0 0.0
    %4755 = vmatpush2.msra.mxu0 0.0
    %4756 = vmatprep.subr.mxu0 0.0
    %4757 = vmatpush2.msra.mxu0 0.0
    %4758 = vmatprep.subr.mxu0 0.0
    %4759 = vmatpush2.msra.mxu0 0.0
    %4760 = vmatprep.subr.mxu0 0.0
    %4761 = vmatpush2.msra.mxu0 0.0
    %4762 = vmatprep.subr.mxu0 0.0
    %4763 = vmatpush2.msra.mxu0 0.0
    %4764 = vmatprep.subr.mxu0 0.0
    %4765 = vmatpush2.msra.mxu0 0.0
    %4766 = vmatprep.subr.mxu0 0.0
    %4767 = vmatpush2.msra.mxu0 0.0
    %4768 = vmatprep.subr.mxu0 0.0
    %4769 = vmatpush2.msra.mxu0 0.0
    %4770 = vmatprep.mubr.f32.mxu0 0.0
    %v4771 = vand.u32 %v4398, 4294901760
    %v4772 = vsub.f32 %v4398, %v4771
    %4773 = vmatmul.mubr.f32.gmra.mxu0 %v4772
    %v4774 = vpop.f32.mrf.mxu0
    %v4775 = vadd.f32 %v4665, %v4774
    %v4776 = vpop.f32.mrf.mxu0
    %4777 = vmatprep.mubr.f32.mxu0 0.0
    %v4778 = vand.u32 %v4399, 4294901760
    %v4779 = vsub.f32 %v4399, %v4778
    %4780 = vmatmul.mubr.f32.gmra.mxu0 %v4779
    %v4781 = vpop.f32.mrf.mxu0
    %v4782 = vadd.f32 %v4671, %v4781
    %v4783 = vpop.f32.mrf.mxu0
    %4784 = vdwg.mxu0
    %4785 = vmatprep.subr.mxu0 0.0
    %v4786 = vand.u32 %v4415, 4294901760
    %4787 = vmatpush1.msra.mxu0 %v4786
    %4788 = vmatprep.subr.mxu0 0.0
    %v4789 = vand.u32 %v4414, 4294901760
    %4790 = vmatpush1.msra.mxu0 %v4789
    %4791 = vmatprep.subr.mxu0 0.0
    %v4792 = vand.u32 %v4413, 4294901760
    %4793 = vmatpush1.msra.mxu0 %v4792
    %4794 = vmatprep.subr.mxu0 0.0
    %v4795 = vand.u32 %v4412, 4294901760
    %4796 = vmatpush1.msra.mxu0 %v4795
    %4797 = vmatprep.subr.mxu0 0.0
    %v4798 = vand.u32 %v4411, 4294901760
    %4799 = vmatpush1.msra.mxu0 %v4798
    %4800 = vmatprep.subr.mxu0 0.0
    %v4801 = vand.u32 %v4410, 4294901760
    %4802 = vmatpush1.msra.mxu0 %v4801
    %4803 = vmatprep.subr.mxu0 0.0
    %v4804 = vand.u32 %v4409, 4294901760
    %4805 = vmatpush1.msra.mxu0 %v4804
    %4806 = vmatprep.subr.mxu0 0.0
    %v4807 = vand.u32 %v4408, 4294901760
    %4808 = vmatpush1.msra.mxu0 %v4807
    %4809 = vmatprep.subr.mxu0 0.0
    %v4810 = vand.u32 %v4407, 4294901760
    %4811 = vmatpush1.msra.mxu0 %v4810
    %4812 = vmatprep.subr.mxu0 0.0
    %v4813 = vand.u32 %v4406, 4294901760
    %4814 = vmatpush1.msra.mxu0 %v4813
    %4815 = vmatprep.subr.mxu0 0.0
    %v4816 = vand.u32 %v4405, 4294901760
    %4817 = vmatpush1.msra.mxu0 %v4816
    %4818 = vmatprep.subr.mxu0 0.0
    %v4819 = vand.u32 %v4404, 4294901760
    %4820 = vmatpush1.msra.mxu0 %v4819
    %4821 = vmatprep.subr.mxu0 0.0
    %v4822 = vand.u32 %v4403, 4294901760
    %4823 = vmatpush1.msra.mxu0 %v4822
    %4824 = vmatprep.subr.mxu0 0.0
    %v4825 = vand.u32 %v4402, 4294901760
    %4826 = vmatpush1.msra.mxu0 %v4825
    %4827 = vmatprep.subr.mxu0 0.0
    %v4828 = vand.u32 %v4401, 4294901760
    %4829 = vmatpush1.msra.mxu0 %v4828
    %4830 = vmatprep.subr.mxu0 0.0
    %v4831 = vand.u32 %v4400, 4294901760
    %4832 = vmatpush1.msra.mxu0 %v4831
    %4833 = vmatprep.subr.mxu0 0.0
    %4834 = vmatpush2.msra.mxu0 0.0
    %4835 = vmatprep.subr.mxu0 0.0
    %4836 = vmatpush2.msra.mxu0 0.0
    %4837 = vmatprep.subr.mxu0 0.0
    %4838 = vmatpush2.msra.mxu0 0.0
    %4839 = vmatprep.subr.mxu0 0.0
    %4840 = vmatpush2.msra.mxu0 0.0
    %4841 = vmatprep.subr.mxu0 0.0
    %4842 = vmatpush2.msra.mxu0 0.0
    %4843 = vmatprep.subr.mxu0 0.0
    %4844 = vmatpush2.msra.mxu0 0.0
    %4845 = vmatprep.subr.mxu0 0.0
    %4846 = vmatpush2.msra.mxu0 0.0
    %4847 = vmatprep.subr.mxu0 0.0
    %4848 = vmatpush2.msra.mxu0 0.0
    %4849 = vmatprep.subr.mxu0 0.0
    %4850 = vmatpush2.msra.mxu0 0.0
    %4851 = vmatprep.subr.mxu0 0.0
    %4852 = vmatpush2.msra.mxu0 0.0
    %4853 = vmatprep.subr.mxu0 0.0
    %4854 = vmatpush2.msra.mxu0 0.0
    %4855 = vmatprep.subr.mxu0 0.0
    %4856 = vmatpush2.msra.mxu0 0.0
    %4857 = vmatprep.subr.mxu0 0.0
    %4858 = vmatpush2.msra.mxu0 0.0
    %4859 = vmatprep.subr.mxu0 0.0
    %4860 = vmatpush2.msra.mxu0 0.0
    %4861 = vmatprep.subr.mxu0 0.0
    %4862 = vmatpush2.msra.mxu0 0.0
    %4863 = vmatprep.subr.mxu0 0.0
    %4864 = vmatpush2.msra.mxu0 0.0
    %4865 = vmatprep.mubr.f32.mxu0 0.0
    %v4866 = vand.u32 %v4398, 4294901760
    %v4867 = vsub.f32 %v4398, %v4866
    %v4868 = vand.u32 %v4867, 4294901760
    %4869 = vmatmul.mubr.f32.gmra.mxu0 %v4868
    %v4870 = vpop.f32.mrf.mxu0
    %v4871 = vadd.f32 %v4775, %v4870
    %v4872 = vpop.f32.mrf.mxu0
    %4873 = vmatprep.mubr.f32.mxu0 0.0
    %v4874 = vand.u32 %v4399, 4294901760
    %v4875 = vsub.f32 %v4399, %v4874
    %v4876 = vand.u32 %v4875, 4294901760
    %4877 = vmatmul.mubr.f32.gmra.mxu0 %v4876
    %v4878 = vpop.f32.mrf.mxu0
    %v4879 = vadd.f32 %v4782, %v4878
    %v4880 = vpop.f32.mrf.mxu0
    %4881 = vdwg.mxu0
    %4882 = vmatprep.subr.mxu0 0.0
    %v4883 = vand.u32 %v4415, 4294901760
    %v4884 = vsub.f32 %v4415, %v4883
    %v4885 = vand.u32 %v4884, 4294901760
    %4886 = vmatpush1.msra.mxu0 %v4885
    %4887 = vmatprep.subr.mxu0 0.0
    %v4888 = vand.u32 %v4414, 4294901760
    %v4889 = vsub.f32 %v4414, %v4888
    %v4890 = vand.u32 %v4889, 4294901760
    %4891 = vmatpush1.msra.mxu0 %v4890
    %4892 = vmatprep.subr.mxu0 0.0
    %v4893 = vand.u32 %v4413, 4294901760
    %v4894 = vsub.f32 %v4413, %v4893
    %v4895 = vand.u32 %v4894, 4294901760
    %4896 = vmatpush1.msra.mxu0 %v4895
    %4897 = vmatprep.subr.mxu0 0.0
    %v4898 = vand.u32 %v4412, 4294901760
    %v4899 = vsub.f32 %v4412, %v4898
    %v4900 = vand.u32 %v4899, 4294901760
    %4901 = vmatpush1.msra.mxu0 %v4900
    %4902 = vmatprep.subr.mxu0 0.0
    %v4903 = vand.u32 %v4411, 4294901760
    %v4904 = vsub.f32 %v4411, %v4903
    %v4905 = vand.u32 %v4904, 4294901760
    %4906 = vmatpush1.msra.mxu0 %v4905
    %4907 = vmatprep.subr.mxu0 0.0
    %v4908 = vand.u32 %v4410, 4294901760
    %v4909 = vsub.f32 %v4410, %v4908
    %v4910 = vand.u32 %v4909, 4294901760
    %4911 = vmatpush1.msra.mxu0 %v4910
    %4912 = vmatprep.subr.mxu0 0.0
    %v4913 = vand.u32 %v4409, 4294901760
    %v4914 = vsub.f32 %v4409, %v4913
    %v4915 = vand.u32 %v4914, 4294901760
    %4916 = vmatpush1.msra.mxu0 %v4915
    %4917 = vmatprep.subr.mxu0 0.0
    %v4918 = vand.u32 %v4408, 4294901760
    %v4919 = vsub.f32 %v4408, %v4918
    %v4920 = vand.u32 %v4919, 4294901760
    %4921 = vmatpush1.msra.mxu0 %v4920
    %4922 = vmatprep.subr.mxu0 0.0
    %v4923 = vand.u32 %v4407, 4294901760
    %v4924 = vsub.f32 %v4407, %v4923
    %v4925 = vand.u32 %v4924, 4294901760
    %4926 = vmatpush1.msra.mxu0 %v4925
    %4927 = vmatprep.subr.mxu0 0.0
    %v4928 = vand.u32 %v4406, 4294901760
    %v4929 = vsub.f32 %v4406, %v4928
    %v4930 = vand.u32 %v4929, 4294901760
    %4931 = vmatpush1.msra.mxu0 %v4930
    %4932 = vmatprep.subr.mxu0 0.0
    %v4933 = vand.u32 %v4405, 4294901760
    %v4934 = vsub.f32 %v4405, %v4933
    %v4935 = vand.u32 %v4934, 4294901760
    %4936 = vmatpush1.msra.mxu0 %v4935
    %4937 = vmatprep.subr.mxu0 0.0
    %v4938 = vand.u32 %v4404, 4294901760
    %v4939 = vsub.f32 %v4404, %v4938
    %v4940 = vand.u32 %v4939, 4294901760
    %4941 = vmatpush1.msra.mxu0 %v4940
    %4942 = vmatprep.subr.mxu0 0.0
    %v4943 = vand.u32 %v4403, 4294901760
    %v4944 = vsub.f32 %v4403, %v4943
    %v4945 = vand.u32 %v4944, 4294901760
    %4946 = vmatpush1.msra.mxu0 %v4945
    %4947 = vmatprep.subr.mxu0 0.0
    %v4948 = vand.u32 %v4402, 4294901760
    %v4949 = vsub.f32 %v4402, %v4948
    %v4950 = vand.u32 %v4949, 4294901760
    %4951 = vmatpush1.msra.mxu0 %v4950
    %4952 = vmatprep.subr.mxu0 0.0
    %v4953 = vand.u32 %v4401, 4294901760
    %v4954 = vsub.f32 %v4401, %v4953
    %v4955 = vand.u32 %v4954, 4294901760
    %4956 = vmatpush1.msra.mxu0 %v4955
    %4957 = vmatprep.subr.mxu0 0.0
    %v4958 = vand.u32 %v4400, 4294901760
    %v4959 = vsub.f32 %v4400, %v4958
    %v4960 = vand.u32 %v4959, 4294901760
    %4961 = vmatpush1.msra.mxu0 %v4960
    %4962 = vmatprep.subr.mxu0 0.0
    %4963 = vmatpush2.msra.mxu0 0.0
    %4964 = vmatprep.subr.mxu0 0.0
    %4965 = vmatpush2.msra.mxu0 0.0
    %4966 = vmatprep.subr.mxu0 0.0
    %4967 = vmatpush2.msra.mxu0 0.0
    %4968 = vmatprep.subr.mxu0 0.0
    %4969 = vmatpush2.msra.mxu0 0.0
    %4970 = vmatprep.subr.mxu0 0.0
    %4971 = vmatpush2.msra.mxu0 0.0
    %4972 = vmatprep.subr.mxu0 0.0
    %4973 = vmatpush2.msra.mxu0 0.0
    %4974 = vmatprep.subr.mxu0 0.0
    %4975 = vmatpush2.msra.mxu0 0.0
    %4976 = vmatprep.subr.mxu0 0.0
    %4977 = vmatpush2.msra.mxu0 0.0
    %4978 = vmatprep.subr.mxu0 0.0
    %4979 = vmatpush2.msra.mxu0 0.0
    %4980 = vmatprep.subr.mxu0 0.0
    %4981 = vmatpush2.msra.mxu0 0.0
    %4982 = vmatprep.subr.mxu0 0.0
    %4983 = vmatpush2.msra.mxu0 0.0
    %4984 = vmatprep.subr.mxu0 0.0
    %4985 = vmatpush2.msra.mxu0 0.0
    %4986 = vmatprep.subr.mxu0 0.0
    %4987 = vmatpush2.msra.mxu0 0.0
    %4988 = vmatprep.subr.mxu0 0.0
    %4989 = vmatpush2.msra.mxu0 0.0
    %4990 = vmatprep.subr.mxu0 0.0
    %4991 = vmatpush2.msra.mxu0 0.0
    %4992 = vmatprep.subr.mxu0 0.0
    %4993 = vmatpush2.msra.mxu0 0.0
    %4994 = vmatprep.mubr.f32.mxu0 0.0
    %v4995 = vand.u32 %v4398, 4294901760
    %4996 = vmatmul.mubr.f32.gmra.mxu0 %v4995
    %v4997 = vpop.f32.mrf.mxu0
    %v4998 = vadd.f32 %v4871, %v4997
    %v4999 = vpop.f32.mrf.mxu0
    %5000 = vmatprep.mubr.f32.mxu0 0.0
    %v5001 = vand.u32 %v4399, 4294901760
    %5002 = vmatmul.mubr.f32.gmra.mxu0 %v5001
    %v5003 = vpop.f32.mrf.mxu0
    %v5004 = vadd.f32 %v4879, %v5003
    %v5005 = vpop.f32.mrf.mxu0
    %5006 = vdwg.mxu0
    %5007 = vmatprep.subr.mxu0 0.0
    %v5008 = vand.u32 %v4415, 4294901760
    %5009 = vmatpush1.msra.mxu0 %v5008
    %5010 = vmatprep.subr.mxu0 0.0
    %v5011 = vand.u32 %v4414, 4294901760
    %5012 = vmatpush1.msra.mxu0 %v5011
    %5013 = vmatprep.subr.mxu0 0.0
    %v5014 = vand.u32 %v4413, 4294901760
    %5015 = vmatpush1.msra.mxu0 %v5014
    %5016 = vmatprep.subr.mxu0 0.0
    %v5017 = vand.u32 %v4412, 4294901760
    %5018 = vmatpush1.msra.mxu0 %v5017
    %5019 = vmatprep.subr.mxu0 0.0
    %v5020 = vand.u32 %v4411, 4294901760
    %5021 = vmatpush1.msra.mxu0 %v5020
    %5022 = vmatprep.subr.mxu0 0.0
    %v5023 = vand.u32 %v4410, 4294901760
    %5024 = vmatpush1.msra.mxu0 %v5023
    %5025 = vmatprep.subr.mxu0 0.0
    %v5026 = vand.u32 %v4409, 4294901760
    %5027 = vmatpush1.msra.mxu0 %v5026
    %5028 = vmatprep.subr.mxu0 0.0
    %v5029 = vand.u32 %v4408, 4294901760
    %5030 = vmatpush1.msra.mxu0 %v5029
    %5031 = vmatprep.subr.mxu0 0.0
    %v5032 = vand.u32 %v4407, 4294901760
    %5033 = vmatpush1.msra.mxu0 %v5032
    %5034 = vmatprep.subr.mxu0 0.0
    %v5035 = vand.u32 %v4406, 4294901760
    %5036 = vmatpush1.msra.mxu0 %v5035
    %5037 = vmatprep.subr.mxu0 0.0
    %v5038 = vand.u32 %v4405, 4294901760
    %5039 = vmatpush1.msra.mxu0 %v5038
    %5040 = vmatprep.subr.mxu0 0.0
    %v5041 = vand.u32 %v4404, 4294901760
    %5042 = vmatpush1.msra.mxu0 %v5041
    %5043 = vmatprep.subr.mxu0 0.0
    %v5044 = vand.u32 %v4403, 4294901760
    %5045 = vmatpush1.msra.mxu0 %v5044
    %5046 = vmatprep.subr.mxu0 0.0
    %v5047 = vand.u32 %v4402, 4294901760
    %5048 = vmatpush1.msra.mxu0 %v5047
    %5049 = vmatprep.subr.mxu0 0.0
    %v5050 = vand.u32 %v4401, 4294901760
    %5051 = vmatpush1.msra.mxu0 %v5050
    %5052 = vmatprep.subr.mxu0 0.0
    %v5053 = vand.u32 %v4400, 4294901760
    %5054 = vmatpush1.msra.mxu0 %v5053
    %5055 = vmatprep.subr.mxu0 0.0
    %5056 = vmatpush2.msra.mxu0 0.0
    %5057 = vmatprep.subr.mxu0 0.0
    %5058 = vmatpush2.msra.mxu0 0.0
    %5059 = vmatprep.subr.mxu0 0.0
    %5060 = vmatpush2.msra.mxu0 0.0
    %5061 = vmatprep.subr.mxu0 0.0
    %5062 = vmatpush2.msra.mxu0 0.0
    %5063 = vmatprep.subr.mxu0 0.0
    %5064 = vmatpush2.msra.mxu0 0.0
    %5065 = vmatprep.subr.mxu0 0.0
    %5066 = vmatpush2.msra.mxu0 0.0
    %5067 = vmatprep.subr.mxu0 0.0
    %5068 = vmatpush2.msra.mxu0 0.0
    %5069 = vmatprep.subr.mxu0 0.0
    %5070 = vmatpush2.msra.mxu0 0.0
    %5071 = vmatprep.subr.mxu0 0.0
    %5072 = vmatpush2.msra.mxu0 0.0
    %5073 = vmatprep.subr.mxu0 0.0
    %5074 = vmatpush2.msra.mxu0 0.0
    %5075 = vmatprep.subr.mxu0 0.0
    %5076 = vmatpush2.msra.mxu0 0.0
    %5077 = vmatprep.subr.mxu0 0.0
    %5078 = vmatpush2.msra.mxu0 0.0
    %5079 = vmatprep.subr.mxu0 0.0
    %5080 = vmatpush2.msra.mxu0 0.0
    %5081 = vmatprep.subr.mxu0 0.0
    %5082 = vmatpush2.msra.mxu0 0.0
    %5083 = vmatprep.subr.mxu0 0.0
    %5084 = vmatpush2.msra.mxu0 0.0
    %5085 = vmatprep.subr.mxu0 0.0
    %5086 = vmatpush2.msra.mxu0 0.0
    %5087 = vmatprep.mubr.f32.mxu0 0.0
    %v5088 = vand.u32 %v4398, 4294901760
    %5089 = vmatmul.mubr.f32.gmra.mxu0 %v5088
    %v5090 = vpop.f32.mrf.mxu0
    %v5091 = vadd.f32 %v4998, %v5090
    %v5092 = vpop.f32.mrf.mxu0
    %5093 = vmatprep.mubr.f32.mxu0 0.0
    %v5094 = vand.u32 %v4399, 4294901760
    %5095 = vmatmul.mubr.f32.gmra.mxu0 %v5094
    %v5096 = vpop.f32.mrf.mxu0
    %v5097 = vadd.f32 %v5004, %v5096
    %v5098 = vpop.f32.mrf.mxu0
    %5099 = vdwg.mxu0
    %5100 = vst.msk [vmem:[%s10] sm:$0xff] %vm40, %v5091
    %5101 = vst.msk [vmem:[%s10 + $0x8] sm:$0xff] %vm40, %v5097
    // Predicated region
    $region30: #{_lambda_.1} parent=1 // pred_check
      _
    $region31: #{_lambda_.1} parent=1 // pred_check_branch
      %5103 = sbr.rel (0) target = $region33
    $region32: #{_lambda_.1} parent=1 // pred_region
      _
    $region33: #{_lambda_.1} parent=1 // pred_fallthru
      _
    // Predicated region
    $region34: #{_lambda_.1} parent=1 // pred_check
      _
    $region35: #{_lambda_.1} parent=1 // pred_check_branch
      %5105 = sbr.rel (0) target = $region37
    $region36: #{_lambda_.1} parent=1 // pred_region
      %s5107 = ssub.s32 128, 128
      %5108 = vsyncadd [#allocation9], %s5107
      %s5110 = sshll.u32 [#allocation8], 4
      %s5111 = int_to_ptr.vmem [resolvable:$true] %s5110
      %5113 = dma.vmem_to_hbm [thread:$0]  %s5111, 128, %s8, [#allocation9]
    $region37: #{_lambda_.1} parent=1 // pred_fallthru
      _
    // Predicated region
    $region38: #{_lambda_.1} parent=1 // pred_check
      _
    $region39: #{_lambda_.1} parent=1 // pred_check_branch
      %5115 = sbr.rel (0) target = $region41
    $region40: #{_lambda_.1} parent=1 // pred_region
      %s5117 = ssub.s32 256, 256
      %5118 = vsyncadd [#allocation11], %s5117
      %s5119 = sshll.u32 [#allocation10], 4
      %s5120 = int_to_ptr.vmem [resolvable:$true] %s5119
      %5125 = dma.vmem_to_hbm [thread:$0]  %s5120, 256, %s9, [#allocation11], 128, 128, 8
    $region41: #{_lambda_.1} parent=1 // pred_fallthru
      _
    // Predicated region
    $region42: #{_lambda_.1} parent=1 // pred_check
      _
    $region43: #{_lambda_.1} parent=1 // pred_check_branch
      %5127 = sbr.rel (0) target = $region45
    $region44: #{_lambda_.1} parent=1 // pred_region
      _
    $region45: #{_lambda_.1} parent=1 // pred_fallthru
      _
    // Predicated region
    $region46: #{_lambda_.1} parent=1 // pred_check
      _
    $region47: #{_lambda_.1} parent=1 // pred_check_branch
      %5129 = sbr.rel (0) target = $region49
    $region48: #{_lambda_.1} parent=1 // pred_region
      _
    $region49: #{_lambda_.1} parent=1 // pred_fallthru
      _
    // Predicated region
    $region50: #{_lambda_.1} parent=1 // pred_check
      _
    $region51: #{_lambda_.1} parent=1 // pred_check_branch
      %5131 = sbr.rel (0) target = $region53
    $region52: #{_lambda_.1} parent=1 // pred_region
      %5132 = dma.done [#allocation9], 128
    $region53: #{_lambda_.1} parent=1 // pred_fallthru
      _
    // Predicated region
    $region54: #{_lambda_.1} parent=1 // pred_check
      _
    $region55: #{_lambda_.1} parent=1 // pred_check_branch
      %5134 = sbr.rel (0) target = $region57
    $region56: #{_lambda_.1} parent=1 // pred_region
      %5135 = dma.done [#allocation11], 256
    $region57: #{_lambda_.1} parent=1 // pred_fallthru
      _
    // Predicated region
    $region58: #{_lambda_.1} parent=1 // pred_check
      _
    $region59: #{_lambda_.1} parent=1 // pred_check_branch
      %5137 = sbr.rel (0) target = $region61
    $region60: #{_lambda_.1} parent=1 // pred_region
      _
    $region61: #{_lambda_.1} parent=1 // pred_fallthru
      _
    %5138 = vsyncpa [#allocation9], 1
    %5139 = vsyncpa [#allocation11], 1

</llo_original>
